<compile_context>
chip_gen: v6e
topology: v6e:2x2x1
jax: 0.10.0
libtpu: 0.0.40
codegen_flags: <defaults>
</compile_context>

<pallas_src>
import numpy as np
import jax
import jax.numpy as jnp
from jax import lax
from jax.experimental import pallas as pl
from jax.experimental.pallas import tpu as pltpu


def _output_schedule(layers, output_every):
    """Which hidden layers emit an intermediate output (matches PyTorch loop)."""
    num_hidden_layers = layers - 1
    emit_after = tuple(i for i in range(num_hidden_layers)
                       if (i + 1) % output_every == 0 and i != layers - 2)
    num_outputs = len(emit_after) + 1
    return emit_after, num_outputs


def _compute_out_pad(out_features, num_outputs):
    """Per-head lane padding: concatenated slab ~128 lanes, multiple of 8."""
    per_head = max(8, (128 // max(num_outputs, 1)) // 8 * 8)
    min_pad = -(-out_features // 8) * 8
    return max(per_head, min_pad)


def _make_kernel(num_models, num_hidden_layers, emit_after, out_pad,
                 num_outputs, block_b):
    """Kernel body: one batch tile, loop over the contiguous model range."""
    emit_set = set(emit_after)

    def kernel(first_ref, last_ref, idx_ref, x_ref, *rest):
        layer_refs = rest[:2 * num_hidden_layers]
        wf_ref, bf_ref, out_ref = rest[2 * num_hidden_layers:]

        t = pl.program_id(0)
        first_m = first_ref[t]               # first model present in this tile
        last_m = last_ref[t]                 # last model present in this tile
        idx = idx_ref[...]                   # (block_b, 1) int32
        x_bf16 = x_ref[...].astype(jnp.bfloat16)   # hoisted: once per tile

        def dense(h, w, b, relu):
            # bf16 MXU inputs, f32 accumulation; elementwise stays f32
            # (generation-agnostic; safe on v5e which has no bf16 VALU).
            y = jnp.dot(h.astype(jnp.bfloat16), w,
                        preferred_element_type=jnp.float32)
            y = y + b
            return jnp.maximum(y, 0.0) if relu else y

        def model_body(m, accs):
            row_mask = idx == m              # (block_b, 1) bool
            w_fin = wf_ref[m]                # (hidden, out_pad) bf16
            b_fin = bf_ref[m]                # (1, out_pad) f32
            new_accs = list(accs)

            h = x_bf16
            slot = 0
            for i in range(num_hidden_layers):
                h = dense(h, layer_refs[2 * i][m], layer_refs[2 * i + 1][m],
                          relu=True)
                if i in emit_set:
                    o = dense(h, w_fin, b_fin, relu=False)
                    new_accs[slot] = jnp.where(row_mask, o, new_accs[slot])
                    slot += 1
            o = dense(h, w_fin, b_fin, relu=False)
            new_accs[slot] = jnp.where(row_mask, o, new_accs[slot])
            return tuple(new_accs)

        init = tuple(jnp.zeros((block_b, out_pad), jnp.float32)
                     for _ in range(num_outputs))
        # Dynamic [first, last] bounds (rows are sorted, so present models form
        # a contiguous range); trip count is just the models in this tile.
        accs = lax.fori_loop(first_m, last_m + 1, model_body, init)

        # Single unmasked, lane-dense store of the whole tile (bf16).
        out_ref[...] = jnp.concatenate(accs, axis=-1).astype(out_ref.dtype)

    return kernel


def init_multiresnet_params(key, num_models, in_features, out_features,
                            layers, hidden_features, out_pad):
    """Init matching the PyTorch module (uniform(-sqrt(1/num_models), +))."""
    sqrt_k = float(np.sqrt(1.0 / num_models))

    def init_layer(k, fan_in, fan_out, pad_to=None):
        kw, kb = jax.random.split(k)
        # PyTorch stores (num_models, out, in); keep a transposed (in, out)
        # copy for x @ W on the MXU and bias as (num_models, 1, out).
        w = jax.random.uniform(kw, (num_models, fan_out, fan_in),
                               jnp.float32, -sqrt_k, sqrt_k)
        b = jax.random.uniform(kb, (num_models, fan_out),
                               jnp.float32, -sqrt_k, sqrt_k)
        wT = jnp.transpose(w, (0, 2, 1))
        b2 = b[:, None, :]
        if pad_to is not None and pad_to > fan_out:
            wT = jnp.pad(wT, ((0, 0), (0, 0), (0, pad_to - fan_out)))
            b2 = jnp.pad(b2, ((0, 0), (0, 0), (0, pad_to - fan_out)))
        return wT.astype(jnp.bfloat16), b2.astype(jnp.float32)

    keys = jax.random.split(key, layers)
    hidden = [init_layer(keys[0], in_features, hidden_features)]
    for li in range(layers - 2):
        hidden.append(init_layer(keys[1 + li], hidden_features, hidden_features))
    final = init_layer(keys[layers - 1], hidden_features, out_features,
                       pad_to=out_pad)
    return {"hidden": hidden, "final": final}


def multiresnet_forward(x, params, *, num_models, layers, output_every,
                        out_features, block_b=512):
    """Full MultiResnet forward (selection_mode='angle')."""
    B, in_features = x.shape
    wf, bf = params["final"]
    hidden_features = wf.shape[1]
    out_pad = wf.shape[2]

    emit_after, num_outputs = _output_schedule(layers, output_every)
    num_hidden_layers = layers - 1

    # --- selection ("angle" mode), tiny elementwise glue in plain JAX --------
    # TODO(synk): selection_mode='mlp' and 'cylinder' branches not implemented;
    # only the module's default 'angle' mode is supported.
    angles = jnp.arctan2(x[:, 2], x[:, 0])
    angles = jnp.fmod(angles + 2.0 * np.pi, 2.0 * np.pi) / (2.0 * np.pi) * num_models
    selection_indices = jnp.clip(jnp.floor(angles).astype(jnp.int32),
                                 0, num_models - 1)
    selection_logits = jnp.ones((B, num_models), dtype=x.dtype)
    selection_probabilities = jax.nn.softmax(selection_logits, axis=1)

    # --- group rows by model: sort, pad to whole tiles ------------------------
    order = jnp.argsort(selection_indices)
    inv_order = jnp.argsort(order)
    x_sorted = x[order]
    idx_sorted = selection_indices[order]

    num_tiles = -(-B // block_b)
    Bp = num_tiles * block_b
    pad = Bp - B
    if pad:
        x_sorted = jnp.pad(x_sorted, ((0, pad), (0, 0)))
        # sentinel index == num_models -> matches no model, rows dropped later
        idx_sorted = jnp.pad(idx_sorted, (0, pad), constant_values=num_models)

    # per-tile contiguous model range [first, last] (rows are sorted);
    # sentinel rows are excluded from the range.
    idx_tiles = idx_sorted.reshape(num_tiles, block_b)
    valid = idx_tiles < num_models
    first_model = jnp.min(jnp.where(valid, idx_tiles, num_models - 1),
                          axis=1).astype(jnp.int32)
    last_model = jnp.max(jnp.where(valid, idx_tiles, 0),
                         axis=1).astype(jnp.int32)

    # --- assemble pallas_call --------------------------------------------------
    flat_inputs = [idx_sorted[:, None], x_sorted]
    in_specs = [
        pl.BlockSpec((block_b, 1), lambda i, *_: (i, 0)),
        pl.BlockSpec((block_b, in_features), lambda i, *_: (i, 0)),
    ]
    for (wT, b2) in params["hidden"]:
        fi, fo = wT.shape[1], wT.shape[2]
        flat_inputs += [wT, b2]
        in_specs += [
            pl.BlockSpec((num_models, fi, fo), lambda i, *_: (0, 0, 0)),
            pl.BlockSpec((num_models, 1, fo), lambda i, *_: (0, 0, 0)),
        ]
    flat_inputs += [wf, bf]
    in_specs += [
        pl.BlockSpec((num_models, hidden_features, out_pad),
                     lambda i, *_: (0, 0, 0)),
        pl.BlockSpec((num_models, 1, out_pad), lambda i, *_: (0, 0, 0)),
    ]

    out_specs = pl.BlockSpec((block_b, num_outputs * out_pad),
                             lambda i, *_: (i, 0))
    out_shape = jax.ShapeDtypeStruct((Bp, num_outputs * out_pad), jnp.bfloat16)

    kernel = _make_kernel(num_models, num_hidden_layers, emit_after, out_pad,
                          num_outputs, block_b)

    out_sorted = pl.pallas_call(
        kernel,
        grid_spec=pltpu.PrefetchScalarGridSpec(
            num_scalar_prefetch=2,
            grid=(num_tiles,),
            in_specs=in_specs,
            out_specs=out_specs,
        ),
        out_shape=out_shape,
        compiler_params=pltpu.CompilerParams(
            dimension_semantics=("parallel",),
            vmem_limit_bytes=32 * 1024 * 1024),
    )(first_model, last_model, *flat_inputs)

    # un-sort rows, split heads along the lane axis, drop lane padding, upcast
    out = out_sorted[inv_order].astype(jnp.float32)           # (B, H*out_pad)
    model_outputs = out.reshape(B, num_outputs, out_pad)[:, :, :out_features]

    return {
        "model_outputs": model_outputs,
        "selection_indices": selection_indices,
        "selection_logits": selection_logits,
        "selection_probabilities": selection_probabilities,
    }


def _reference_forward(x, params, selection_indices, layers, output_every,
                       out_features):
    """Pure-JAX reference (per-sample gathered weights), same bf16 matmul path."""
    wf, bf = params["final"]

    def apply(h, wT, b2, idx, relu):
        w_sel = wT[idx]                        # (B, fan_in, fan_out) bf16
        b_sel = b2[idx, 0]                     # (B, fan_out) f32
        y = jnp.einsum("bi,bio->bo", h.astype(jnp.bfloat16), w_sel,
                       preferred_element_type=jnp.float32) + b_sel
        return jnp.maximum(y, 0.0) if relu else y

    outs = []
    h = x
    num_hidden_layers = layers - 1
    for i in range(num_hidden_layers):
        wT, b2 = params["hidden"][i]
        h = apply(h, wT, b2, selection_indices, relu=True)
        if (i + 1) % output_every == 0 and i != layers - 2:
            outs.append(apply(h, wf, bf, selection_indices,
                              relu=False)[:, :out_features])
    outs.append(apply(h, wf, bf, selection_indices, relu=False)[:, :out_features])
    return jnp.stack(outs, axis=1)


if __name__ == "__main__":
    # Small shapes consistent with the module defaults (scaled down).
    B = 1000
    num_models = 8
    in_features = 6
    out_features = 3
    layers = 5
    hidden_features = 32
    output_every = 2
    block_b = 512          # 2 tiles -> balances across the 2 TCs on v7x

    _, num_outputs = _output_schedule(layers, output_every)
    out_pad = _compute_out_pad(out_features, num_outputs)   # 64 -> 128-lane slab

    key = jax.random.PRNGKey(0)
    k_param, k_x = jax.random.split(key)
    params = init_multiresnet_params(k_param, num_models, in_features,
                                     out_features, layers, hidden_features,
                                     out_pad)
    x = jax.random.normal(k_x, (B, in_features), dtype=jnp.float32)

    outputs = multiresnet_forward(x, params, num_models=num_models,
                                  layers=layers, output_every=output_every,
                                  out_features=out_features, block_b=block_b)
    jax.block_until_ready(outputs["model_outputs"])

    # Sanity check against pure-JAX reference.
    ref = _reference_forward(x, params, outputs["selection_indices"],
                             layers, output_every, out_features)
    np.testing.assert_allclose(np.asarray(outputs["model_outputs"]),
                               np.asarray(ref), rtol=2e-2, atol=2e-2)
    assert outputs["model_outputs"].shape == (B, num_outputs, out_features)
    assert outputs["selection_probabilities"].shape == (B, num_models)

    print("KERNEL_OK")
</pallas_src>

<mosaic_0001>
module attributes {stable_mosaic.version = 11 : i64} {
  func.func @kernel(%arg0: i32, %arg1: memref<2xi32, #tpu.memory_space<smem>>, %arg2: memref<2xi32, #tpu.memory_space<smem>>, %arg3: memref<512x1xi32, #tpu.memory_space<vmem>>, %arg4: memref<512x6xf32, #tpu.memory_space<vmem>>, %arg5: memref<8x6x32xbf16, #tpu.memory_space<vmem>>, %arg6: memref<8x1x32xf32, #tpu.memory_space<vmem>>, %arg7: memref<8x32x32xbf16, #tpu.memory_space<vmem>>, %arg8: memref<8x1x32xf32, #tpu.memory_space<vmem>>, %arg9: memref<8x32x32xbf16, #tpu.memory_space<vmem>>, %arg10: memref<8x1x32xf32, #tpu.memory_space<vmem>>, %arg11: memref<8x32x32xbf16, #tpu.memory_space<vmem>>, %arg12: memref<8x1x32xf32, #tpu.memory_space<vmem>>, %arg13: memref<8x32x64xbf16, #tpu.memory_space<vmem>>, %arg14: memref<8x1x64xf32, #tpu.memory_space<vmem>>, %arg15: memref<512x128xbf16, #tpu.memory_space<vmem>>) attributes {dimension_semantics = [#tpu.dimension_semantics<parallel>], iteration_bounds = array<i64: 2>, scalar_prefetch = 2 : i64, scratch_operands = 0 : i64, tpu.core_type = #tpu.core_type<tc>, window_params = [{transform_indices = @transform_0, window_bounds = array<i64: 512, 1>}, {transform_indices = @transform_1, window_bounds = array<i64: 512, 6>}, {pipeline_mode = #tpu.pipeline_mode<synchronous>, transform_indices = @transform_2, window_bounds = array<i64: 8, 6, 32>}, {pipeline_mode = #tpu.pipeline_mode<synchronous>, transform_indices = @transform_3, window_bounds = array<i64: 8, 1, 32>}, {pipeline_mode = #tpu.pipeline_mode<synchronous>, transform_indices = @transform_4, window_bounds = array<i64: 8, 32, 32>}, {pipeline_mode = #tpu.pipeline_mode<synchronous>, transform_indices = @transform_5, window_bounds = array<i64: 8, 1, 32>}, {pipeline_mode = #tpu.pipeline_mode<synchronous>, transform_indices = @transform_6, window_bounds = array<i64: 8, 32, 32>}, {pipeline_mode = #tpu.pipeline_mode<synchronous>, transform_indices = @transform_7, window_bounds = array<i64: 8, 1, 32>}, {pipeline_mode = #tpu.pipeline_mode<synchronous>, transform_indices = @transform_8, window_bounds = array<i64: 8, 32, 32>}, {pipeline_mode = #tpu.pipeline_mode<synchronous>, transform_indices = @transform_9, window_bounds = array<i64: 8, 1, 32>}, {pipeline_mode = #tpu.pipeline_mode<synchronous>, transform_indices = @transform_10, window_bounds = array<i64: 8, 32, 64>}, {pipeline_mode = #tpu.pipeline_mode<synchronous>, transform_indices = @transform_11, window_bounds = array<i64: 8, 1, 64>}, {transform_indices = @transform_12, window_bounds = array<i64: 512, 128>}]} {
    %0 = arith.index_cast %arg0 : i32 to index
    %1 = memref.load %arg1[%0] : memref<2xi32, #tpu.memory_space<smem>>
    %2 = arith.index_cast %arg0 : i32 to index
    %3 = memref.load %arg2[%2] : memref<2xi32, #tpu.memory_space<smem>>
    %c0 = arith.constant 0 : index
    %c0_0 = arith.constant 0 : index
    %4 = vector.load %arg3[%c0, %c0_0] : memref<512x1xi32, #tpu.memory_space<vmem>>, vector<512x1xi32>
    %c0_1 = arith.constant 0 : index
    %c0_2 = arith.constant 0 : index
    %5 = vector.load %arg4[%c0_1, %c0_2] : memref<512x6xf32, #tpu.memory_space<vmem>>, vector<512x6xf32>
    %6 = arith.truncf %5 : vector<512x6xf32> to vector<512x6xbf16>
    %cst = arith.constant 0.000000e+00 : f32
    %7 = vector.broadcast %cst : f32 to vector<512x64xf32>
    %cst_3 = arith.constant 0.000000e+00 : f32
    %8 = vector.broadcast %cst_3 : f32 to vector<512x64xf32>
    %c1_i32 = arith.constant 1 : i32
    %9 = arith.addi %3, %c1_i32 : i32
    %10 = arith.subi %9, %1 : i32
    %11 = arith.addi %1, %10 : i32
    %c1_i32_4 = arith.constant 1 : i32
    %12:2 = scf.for %arg16 = %1 to %11 step %c1_i32_4 iter_args(%arg17 = %7, %arg18 = %8) -> (vector<512x64xf32>, vector<512x64xf32>)  : i32 {
      %16 = vector.broadcast %arg16 : i32 to vector<512x1xi32>
      %17 = arith.cmpi eq, %4, %16 : vector<512x1xi32>
      %18 = arith.index_cast %arg16 : i32 to index
      %c0_7 = arith.constant 0 : index
      %c0_8 = arith.constant 0 : index
      %19 = vector.load %arg13[%18, %c0_7, %c0_8] : memref<8x32x64xbf16, #tpu.memory_space<vmem>>, vector<1x32x64xbf16>
      %20 = vector.shape_cast %19 : vector<1x32x64xbf16> to vector<32x64xbf16>
      %21 = arith.index_cast %arg16 : i32 to index
      %c0_9 = arith.constant 0 : index
      %c0_10 = arith.constant 0 : index
      %22 = vector.load %arg14[%21, %c0_9, %c0_10] : memref<8x1x64xf32, #tpu.memory_space<vmem>>, vector<1x1x64xf32>
      %23 = vector.shape_cast %22 : vector<1x1x64xf32> to vector<1x64xf32>
      %24 = arith.index_cast %arg16 : i32 to index
      %c0_11 = arith.constant 0 : index
      %c0_12 = arith.constant 0 : index
      %25 = vector.load %arg5[%24, %c0_11, %c0_12] : memref<8x6x32xbf16, #tpu.memory_space<vmem>>, vector<1x6x32xbf16>
      %26 = vector.shape_cast %25 : vector<1x6x32xbf16> to vector<6x32xbf16>
      %27 = arith.index_cast %arg16 : i32 to index
      %c0_13 = arith.constant 0 : index
      %c0_14 = arith.constant 0 : index
      %28 = vector.load %arg6[%27, %c0_13, %c0_14] : memref<8x1x32xf32, #tpu.memory_space<vmem>>, vector<1x1x32xf32>
      %29 = vector.shape_cast %28 : vector<1x1x32xf32> to vector<1x32xf32>
      %cst_15 = arith.constant dense<0.000000e+00> : vector<512x32xf32>
      %30 = tpu.matmul %6, %26, %cst_15 {dimension_numbers = #tpu.dot_dimension_numbers<[1], [0], [0], [1], [0, 0, 1, 1], [], []>} : vector<512x6xbf16>, vector<6x32xbf16>, vector<512x32xf32> -> vector<512x32xf32>
      %31 = vector.broadcast %29 : vector<1x32xf32> to vector<512x32xf32>
      %32 = arith.addf %30, %31 : vector<512x32xf32>
      %cst_16 = arith.constant 0.000000e+00 : f32
      %33 = vector.broadcast %cst_16 : f32 to vector<512x32xf32>
      %34 = arith.maximumf %32, %33 : vector<512x32xf32>
      %35 = arith.index_cast %arg16 : i32 to index
      %c0_17 = arith.constant 0 : index
      %c0_18 = arith.constant 0 : index
      %36 = vector.load %arg7[%35, %c0_17, %c0_18] : memref<8x32x32xbf16, #tpu.memory_space<vmem>>, vector<1x32x32xbf16>
      %37 = vector.shape_cast %36 : vector<1x32x32xbf16> to vector<32x32xbf16>
      %38 = arith.index_cast %arg16 : i32 to index
      %c0_19 = arith.constant 0 : index
      %c0_20 = arith.constant 0 : index
      %39 = vector.load %arg8[%38, %c0_19, %c0_20] : memref<8x1x32xf32, #tpu.memory_space<vmem>>, vector<1x1x32xf32>
      %40 = vector.shape_cast %39 : vector<1x1x32xf32> to vector<1x32xf32>
      %41 = arith.truncf %34 : vector<512x32xf32> to vector<512x32xbf16>
      %cst_21 = arith.constant dense<0.000000e+00> : vector<512x32xf32>
      %42 = tpu.matmul %41, %37, %cst_21 {dimension_numbers = #tpu.dot_dimension_numbers<[1], [0], [0], [1], [0, 0, 1, 1], [], []>} : vector<512x32xbf16>, vector<32x32xbf16>, vector<512x32xf32> -> vector<512x32xf32>
      %43 = vector.broadcast %40 : vector<1x32xf32> to vector<512x32xf32>
      %44 = arith.addf %42, %43 : vector<512x32xf32>
      %cst_22 = arith.constant 0.000000e+00 : f32
      %45 = vector.broadcast %cst_22 : f32 to vector<512x32xf32>
      %46 = arith.maximumf %44, %45 : vector<512x32xf32>
      %47 = arith.truncf %46 : vector<512x32xf32> to vector<512x32xbf16>
      %cst_23 = arith.constant dense<0.000000e+00> : vector<512x64xf32>
      %48 = tpu.matmul %47, %20, %cst_23 {dimension_numbers = #tpu.dot_dimension_numbers<[1], [0], [0], [1], [0, 0, 1, 1], [], []>} : vector<512x32xbf16>, vector<32x64xbf16>, vector<512x64xf32> -> vector<512x64xf32>
      %49 = vector.broadcast %23 : vector<1x64xf32> to vector<512x64xf32>
      %50 = arith.addf %48, %49 : vector<512x64xf32>
      %51 = vector.shape_cast %17 : vector<512x1xi1> to vector<512x1xi1>
      %52 = vector.broadcast %51 : vector<512x1xi1> to vector<512x64xi1>
      %53 = arith.select %52, %50, %arg17 : vector<512x64xi1>, vector<512x64xf32>
      %54 = arith.index_cast %arg16 : i32 to index
      %c0_24 = arith.constant 0 : index
      %c0_25 = arith.constant 0 : index
      %55 = vector.load %arg9[%54, %c0_24, %c0_25] : memref<8x32x32xbf16, #tpu.memory_space<vmem>>, vector<1x32x32xbf16>
      %56 = vector.shape_cast %55 : vector<1x32x32xbf16> to vector<32x32xbf16>
      %57 = arith.index_cast %arg16 : i32 to index
      %c0_26 = arith.constant 0 : index
      %c0_27 = arith.constant 0 : index
      %58 = vector.load %arg10[%57, %c0_26, %c0_27] : memref<8x1x32xf32, #tpu.memory_space<vmem>>, vector<1x1x32xf32>
      %59 = vector.shape_cast %58 : vector<1x1x32xf32> to vector<1x32xf32>
      %60 = arith.truncf %46 : vector<512x32xf32> to vector<512x32xbf16>
      %cst_28 = arith.constant dense<0.000000e+00> : vector<512x32xf32>
      %61 = tpu.matmul %60, %56, %cst_28 {dimension_numbers = #tpu.dot_dimension_numbers<[1], [0], [0], [1], [0, 0, 1, 1], [], []>} : vector<512x32xbf16>, vector<32x32xbf16>, vector<512x32xf32> -> vector<512x32xf32>
      %62 = vector.broadcast %59 : vector<1x32xf32> to vector<512x32xf32>
      %63 = arith.addf %61, %62 : vector<512x32xf32>
      %cst_29 = arith.constant 0.000000e+00 : f32
      %64 = vector.broadcast %cst_29 : f32 to vector<512x32xf32>
      %65 = arith.maximumf %63, %64 : vector<512x32xf32>
      %66 = arith.index_cast %arg16 : i32 to index
      %c0_30 = arith.constant 0 : index
      %c0_31 = arith.constant 0 : index
      %67 = vector.load %arg11[%66, %c0_30, %c0_31] : memref<8x32x32xbf16, #tpu.memory_space<vmem>>, vector<1x32x32xbf16>
      %68 = vector.shape_cast %67 : vector<1x32x32xbf16> to vector<32x32xbf16>
      %69 = arith.index_cast %arg16 : i32 to index
      %c0_32 = arith.constant 0 : index
      %c0_33 = arith.constant 0 : index
      %70 = vector.load %arg12[%69, %c0_32, %c0_33] : memref<8x1x32xf32, #tpu.memory_space<vmem>>, vector<1x1x32xf32>
      %71 = vector.shape_cast %70 : vector<1x1x32xf32> to vector<1x32xf32>
      %72 = arith.truncf %65 : vector<512x32xf32> to vector<512x32xbf16>
      %cst_34 = arith.constant dense<0.000000e+00> : vector<512x32xf32>
      %73 = tpu.matmul %72, %68, %cst_34 {dimension_numbers = #tpu.dot_dimension_numbers<[1], [0], [0], [1], [0, 0, 1, 1], [], []>} : vector<512x32xbf16>, vector<32x32xbf16>, vector<512x32xf32> -> vector<512x32xf32>
      %74 = vector.broadcast %71 : vector<1x32xf32> to vector<512x32xf32>
      %75 = arith.addf %73, %74 : vector<512x32xf32>
      %cst_35 = arith.constant 0.000000e+00 : f32
      %76 = vector.broadcast %cst_35 : f32 to vector<512x32xf32>
      %77 = arith.maximumf %75, %76 : vector<512x32xf32>
      %78 = arith.truncf %77 : vector<512x32xf32> to vector<512x32xbf16>
      %cst_36 = arith.constant dense<0.000000e+00> : vector<512x64xf32>
      %79 = tpu.matmul %78, %20, %cst_36 {dimension_numbers = #tpu.dot_dimension_numbers<[1], [0], [0], [1], [0, 0, 1, 1], [], []>} : vector<512x32xbf16>, vector<32x64xbf16>, vector<512x64xf32> -> vector<512x64xf32>
      %80 = vector.broadcast %23 : vector<1x64xf32> to vector<512x64xf32>
      %81 = arith.addf %79, %80 : vector<512x64xf32>
      %82 = vector.shape_cast %17 : vector<512x1xi1> to vector<512x1xi1>
      %83 = vector.broadcast %82 : vector<512x1xi1> to vector<512x64xi1>
      %84 = arith.select %83, %81, %arg18 : vector<512x64xi1>, vector<512x64xf32>
      scf.yield %53, %84 : vector<512x64xf32>, vector<512x64xf32>
    }
    %13 = tpu.concatenate %12#0, %12#1 in 1 : vector<512x64xf32>, vector<512x64xf32> -> vector<512x128xf32>
    %14 = arith.truncf %13 : vector<512x128xf32> to vector<512x128xbf16>
    %c0_5 = arith.constant 0 : index
    %c0_6 = arith.constant 0 : index
    %15 = vector.load %arg15[%c0_5, %c0_6] : memref<512x128xbf16, #tpu.memory_space<vmem>>, vector<512x128xbf16>
    tpu.vector_store %arg15[%c0_5, %c0_6], %14 {strides = array<i32>} : memref<512x128xbf16, #tpu.memory_space<vmem>>, vector<512x128xbf16>,
    return
  }
  func.func @transform_0(%arg0: i32, %arg1: memref<2xi32, #tpu.memory_space<smem>>, %arg2: memref<2xi32, #tpu.memory_space<smem>>) -> (i32, i32) {
    %c0_i32 = arith.constant 0 : i32
    %c0_i32_0 = arith.constant 0 : i32
    return %arg0, %c0_i32 : i32, i32
  }
  func.func @transform_1(%arg0: i32, %arg1: memref<2xi32, #tpu.memory_space<smem>>, %arg2: memref<2xi32, #tpu.memory_space<smem>>) -> (i32, i32) {
    %c0_i32 = arith.constant 0 : i32
    %c0_i32_0 = arith.constant 0 : i32
    return %arg0, %c0_i32 : i32, i32
  }
  func.func @transform_2(%arg0: i32, %arg1: memref<2xi32, #tpu.memory_space<smem>>, %arg2: memref<2xi32, #tpu.memory_space<smem>>) -> (i32, i32, i32) {
    %c0_i32 = arith.constant 0 : i32
    %c0_i32_0 = arith.constant 0 : i32
    %c0_i32_1 = arith.constant 0 : i32
    %c0_i32_2 = arith.constant 0 : i32
    return %c0_i32, %c0_i32_0, %c0_i32_1 : i32, i32, i32
  }
  func.func @transform_3(%arg0: i32, %arg1: memref<2xi32, #tpu.memory_space<smem>>, %arg2: memref<2xi32, #tpu.memory_space<smem>>) -> (i32, i32, i32) {
    %c0_i32 = arith.constant 0 : i32
    %c0_i32_0 = arith.constant 0 : i32
    %c0_i32_1 = arith.constant 0 : i32
    %c0_i32_2 = arith.constant 0 : i32
    return %c0_i32, %c0_i32_0, %c0_i32_1 : i32, i32, i32
  }
  func.func @transform_4(%arg0: i32, %arg1: memref<2xi32, #tpu.memory_space<smem>>, %arg2: memref<2xi32, #tpu.memory_space<smem>>) -> (i32, i32, i32) {
    %c0_i32 = arith.constant 0 : i32
    %c0_i32_0 = arith.constant 0 : i32
    %c0_i32_1 = arith.constant 0 : i32
    %c0_i32_2 = arith.constant 0 : i32
    return %c0_i32, %c0_i32_0, %c0_i32_1 : i32, i32, i32
  }
  func.func @transform_5(%arg0: i32, %arg1: memref<2xi32, #tpu.memory_space<smem>>, %arg2: memref<2xi32, #tpu.memory_space<smem>>) -> (i32, i32, i32) {
    %c0_i32 = arith.constant 0 : i32
    %c0_i32_0 = arith.constant 0 : i32
    %c0_i32_1 = arith.constant 0 : i32
    %c0_i32_2 = arith.constant 0 : i32
    return %c0_i32, %c0_i32_0, %c0_i32_1 : i32, i32, i32
  }
  func.func @transform_6(%arg0: i32, %arg1: memref<2xi32, #tpu.memory_space<smem>>, %arg2: memref<2xi32, #tpu.memory_space<smem>>) -> (i32, i32, i32) {
    %c0_i32 = arith.constant 0 : i32
    %c0_i32_0 = arith.constant 0 : i32
    %c0_i32_1 = arith.constant 0 : i32
    %c0_i32_2 = arith.constant 0 : i32
    return %c0_i32, %c0_i32_0, %c0_i32_1 : i32, i32, i32
  }
  func.func @transform_7(%arg0: i32, %arg1: memref<2xi32, #tpu.memory_space<smem>>, %arg2: memref<2xi32, #tpu.memory_space<smem>>) -> (i32, i32, i32) {
    %c0_i32 = arith.constant 0 : i32
    %c0_i32_0 = arith.constant 0 : i32
    %c0_i32_1 = arith.constant 0 : i32
    %c0_i32_2 = arith.constant 0 : i32
    return %c0_i32, %c0_i32_0, %c0_i32_1 : i32, i32, i32
  }
  func.func @transform_8(%arg0: i32, %arg1: memref<2xi32, #tpu.memory_space<smem>>, %arg2: memref<2xi32, #tpu.memory_space<smem>>) -> (i32, i32, i32) {
    %c0_i32 = arith.constant 0 : i32
    %c0_i32_0 = arith.constant 0 : i32
    %c0_i32_1 = arith.constant 0 : i32
    %c0_i32_2 = arith.constant 0 : i32
    return %c0_i32, %c0_i32_0, %c0_i32_1 : i32, i32, i32
  }
  func.func @transform_9(%arg0: i32, %arg1: memref<2xi32, #tpu.memory_space<smem>>, %arg2: memref<2xi32, #tpu.memory_space<smem>>) -> (i32, i32, i32) {
    %c0_i32 = arith.constant 0 : i32
    %c0_i32_0 = arith.constant 0 : i32
    %c0_i32_1 = arith.constant 0 : i32
    %c0_i32_2 = arith.constant 0 : i32
    return %c0_i32, %c0_i32_0, %c0_i32_1 : i32, i32, i32
  }
  func.func @transform_10(%arg0: i32, %arg1: memref<2xi32, #tpu.memory_space<smem>>, %arg2: memref<2xi32, #tpu.memory_space<smem>>) -> (i32, i32, i32) {
    %c0_i32 = arith.constant 0 : i32
    %c0_i32_0 = arith.constant 0 : i32
    %c0_i32_1 = arith.constant 0 : i32
    %c0_i32_2 = arith.constant 0 : i32
    return %c0_i32, %c0_i32_0, %c0_i32_1 : i32, i32, i32
  }
  func.func @transform_11(%arg0: i32, %arg1: memref<2xi32, #tpu.memory_space<smem>>, %arg2: memref<2xi32, #tpu.memory_space<smem>>) -> (i32, i32, i32) {
    %c0_i32 = arith.constant 0 : i32
    %c0_i32_0 = arith.constant 0 : i32
    %c0_i32_1 = arith.constant 0 : i32
    %c0_i32_2 = arith.constant 0 : i32
    return %c0_i32, %c0_i32_0, %c0_i32_1 : i32, i32, i32
  }
  func.func @transform_12(%arg0: i32, %arg1: memref<2xi32, #tpu.memory_space<smem>>, %arg2: memref<2xi32, #tpu.memory_space<smem>>) -> (i32, i32) {
    %c0_i32 = arith.constant 0 : i32
    %c0_i32_0 = arith.constant 0 : i32
    return %arg0, %c0_i32 : i32, i32
  }
}

</mosaic_0001>

<llo_original>
// kernel: tpu_custom_call.1
$region0: #{tpu_custom_call.1}
  #allocation0 [shape = 'u32[]', space=smem, size = 0x4, offset = 0x4, fixed_abs, tag = 'smem constant byte address 0x4 - core index']
  #allocation1 [shape = 'u32[144,128]{1,0:T(1,128)}', space=vmem, size = 0x12000, scoped, tag = 'internal scratch']
  #allocation2 [shape = 's32[1]{0}', space=sflag, size = 0x4, scoped, tag = 'scoped memory for tpu_custom_call.1']
  #allocation3 [shape = 'u8[512]{0}', space=smem, size = 0x200, scoped, tag = 'prefetched SMEM operand 0']
  #allocation4 [shape = 'u8[512]{0}', space=smem, size = 0x200, scoped, tag = 'prefetched SMEM operand 1']
  %s0 = inlined_call_operand.vmem [shape: s32[2], index: 0, kind: input, shape index: {}]
  %s1 = inlined_call_operand.vmem [shape: s32[2], index: 1, kind: input, shape index: {}]
  %s2 = inlined_call_operand.vmem [shape: s32[1024,1], index: 2, kind: input, shape index: {}]
  %s3 = inlined_call_operand.vmem [shape: f32[1024,6], index: 3, kind: input, shape index: {}]
  %s4 = inlined_call_operand.vmem [shape: bf16[8,6,32], index: 4, kind: input, shape index: {}]
  %s5 = inlined_call_operand.vmem [shape: f32[8,1,32], index: 5, kind: input, shape index: {}]
  %s6 = inlined_call_operand.vmem [shape: bf16[8,32,32], index: 6, kind: input, shape index: {}]
  %s7 = inlined_call_operand.vmem [shape: f32[8,1,32], index: 7, kind: input, shape index: {}]
  %s8 = inlined_call_operand.vmem [shape: bf16[8,32,32], index: 8, kind: input, shape index: {}]
  %s9 = inlined_call_operand.vmem [shape: f32[8,1,32], index: 9, kind: input, shape index: {}]
  %s10 = inlined_call_operand.vmem [shape: bf16[8,32,32], index: 10, kind: input, shape index: {}]
  %s11 = inlined_call_operand.vmem [shape: f32[8,1,32], index: 11, kind: input, shape index: {}]
  %s12 = inlined_call_operand.vmem [shape: bf16[8,32,64], index: 12, kind: input, shape index: {}]
  %s13 = inlined_call_operand.vmem [shape: f32[8,1,64], index: 13, kind: input, shape index: {}]
  %s14 = inlined_call_operand.hbm [shape: bf16[1024,128], index: 14, kind: output, shape index: {}]
  %s15 = sld [smem:[#allocation0]]
  $region88: #{tpu_custom_call.1} parent=0
    _
  %s17 = ssub.s32 1, %s15
  %s18 = scalar_select 0, %s17, %s15
  %s19 = sshll.u32 %s0, 4
  %s20 = int_to_ptr.vmem [resolvable:$true] %s19
  %22 = dma.vmem_to_smem %s20, 16, [#allocation3], [#allocation2]
  %s23 = sshll.u32 %s1, 4
  %s24 = int_to_ptr.vmem [resolvable:$true] %s23
  %26 = dma.vmem_to_smem %s24, 16, [#allocation4], [#allocation2]
  %27 = dma.done [#allocation2], 32
  %28 = sfence
  $region1: #{tpu_custom_call.1} parent=0
    #allocation5 [shape = 'u8[262144]{0}', space=vmem, size = 0x40000, scoped, tag = 'output window, operand 0']
    #allocation6 [shape = 's32[2]{0}', space=sflag, size = 0x8, scoped, tag = 'scoped memory for tpu_custom_call.1']
    %29 = vsyncpa [#allocation6], 0
    %s30 = scalar_lea.sflag [#allocation6], 1
    %31 = vsyncpa %s30, 0
    loop: start=0, step=1, limit=4
    $region2: #{tpu_custom_call.1} parent=1 // loop_pre_header
      _
    $region3: #{tpu_custom_call.1} parent=1 // loop_header
      %s33 = sphi 0, %s37
      %p34 = scmp.ge.s32.totalorder %s33, 4
      %s43 = sphi 0, %s45
      %s46 = sphi 0, %s43
      %s47 = sphi 0, %s46
      %s63 = sphi 0, %s47
      %s69 = sphi 0, %s71
      %s72 = sphi 0, %s69
      %s73 = sphi 0, %s72
      %s89 = sphi 0, %s73
      %s93 = sphi 0, %s93
      %s95 = sphi 0, %s93
      %s96 = sphi 0, %s95
      %s110 = sphi 0, %s96
      %s114 = sphi 0, %s114
      %s116 = sphi 0, %s114
      %s117 = sphi 0, %s116
      %s131 = sphi 0, %s117
      %s135 = sphi 0, %s135
      %s137 = sphi 0, %s135
      %s138 = sphi 0, %s137
      %s152 = sphi 0, %s138
      %s156 = sphi 0, %s156
      %s158 = sphi 0, %s156
      %s159 = sphi 0, %s158
      %s173 = sphi 0, %s159
      %s177 = sphi 0, %s177
      %s179 = sphi 0, %s177
      %s180 = sphi 0, %s179
      %s194 = sphi 0, %s180
      %s198 = sphi 0, %s198
      %s200 = sphi 0, %s198
      %s201 = sphi 0, %s200
      %s215 = sphi 0, %s201
      %s219 = sphi 0, %s219
      %s221 = sphi 0, %s219
      %s222 = sphi 0, %s221
      %s236 = sphi 0, %s222
      %s240 = sphi 0, %s240
      %s242 = sphi 0, %s240
      %s243 = sphi 0, %s242
      %s257 = sphi 0, %s243
      %s261 = sphi 0, %s261
      %s263 = sphi 0, %s261
      %s264 = sphi 0, %s263
      %s278 = sphi 0, %s264
      %s282 = sphi 0, %s282
      %s284 = sphi 0, %s282
      %s285 = sphi 0, %s284
      %s299 = sphi 0, %s285
      %s305 = sphi 0, %s307
      %s308 = sphi 0, %s305
      %s309 = sphi 0, %s308
      %s325 = sphi 0, %s309
    $region4: #{tpu_custom_call.1} parent=1 // loop_header_branch
      %36 = sbr.rel (%p34) target = $region8
    $region5: #{tpu_custom_call.1} parent=1 // loop_body
      %s38 = ssub.s32 %s33, 1
      %s39 = ssub.s32 %s33, 2
      %s40 = sadd.s32 %s33, 1
      %s41 = ssub.s32 %s33, %s40
      %p42 = scmp.eq.s32.totalorder %s41, 0
      %s44 = sadd.s32 %s43, 1
      %s45 = scalar_select %p42, %s43, %s44
      %p48 = pneg %p42
      %p49 = scmp.eq.s32.totalorder %s33, 1
      %p50 = por %p48, %p49
      %p51 = scmp.ne.s32.totalorder %s43, %s46
      %p52 = scmp.eq.s32.totalorder %s33, 0
      %p53 = por %p51, %p52
      %p54 = scmp.ne.s32.totalorder %s43, %s46
      %p55 = scmp.eq.s32.totalorder %s38, 1
      %p56 = por %p54, %p55
      %p57 = scmp.ne.s32.totalorder %s46, %s47
      %p58 = scmp.eq.s32.totalorder %s38, 0
      %p59 = por %p57, %p58
      %p60 = scmp.ne.s32.totalorder %s46, %s47
      %p61 = scmp.eq.s32.totalorder %s39, 1
      %p62 = por %p60, %p61
      %p64 = scmp.ne.s32.totalorder %s47, %s63
      %p65 = scmp.eq.s32.totalorder %s39, 0
      %p66 = por %p64, %p65
      %s67 = ssub.s32 %s33, %s40
      %p68 = scmp.eq.s32.totalorder %s67, 0
      %s70 = sadd.s32 %s69, 1
      %s71 = scalar_select %p68, %s69, %s70
      %p74 = pneg %p68
      %p75 = scmp.eq.s32.totalorder %s33, 1
      %p76 = por %p74, %p75
      %p77 = scmp.ne.s32.totalorder %s69, %s72
      %p78 = scmp.eq.s32.totalorder %s33, 0
      %p79 = por %p77, %p78
      %p80 = scmp.ne.s32.totalorder %s69, %s72
      %p81 = scmp.eq.s32.totalorder %s38, 1
      %p82 = por %p80, %p81
      %p83 = scmp.ne.s32.totalorder %s72, %s73
      %p84 = scmp.eq.s32.totalorder %s38, 0
      %p85 = por %p83, %p84
      %p86 = scmp.ne.s32.totalorder %s72, %s73
      %p87 = scmp.eq.s32.totalorder %s39, 1
      %p88 = por %p86, %p87
      %p90 = scmp.ne.s32.totalorder %s73, %s89
      %p91 = scmp.eq.s32.totalorder %s39, 0
      %p92 = por %p90, %p91
      %s94 = sadd.s32 %s93, 1
      %p97 = scmp.eq.s32.totalorder %s33, 1
      %p98 = scmp.ne.s32.totalorder %s93, %s95
      %p99 = scmp.eq.s32.totalorder %s33, 0
      %p100 = por %p98, %p99
      %p101 = scmp.ne.s32.totalorder %s93, %s95
      %p102 = scmp.eq.s32.totalorder %s38, 1
      %p103 = por %p101, %p102
      %p104 = scmp.ne.s32.totalorder %s95, %s96
      %p105 = scmp.eq.s32.totalorder %s38, 0
      %p106 = por %p104, %p105
      %p107 = scmp.ne.s32.totalorder %s95, %s96
      %p108 = scmp.eq.s32.totalorder %s39, 1
      %p109 = por %p107, %p108
      %p111 = scmp.ne.s32.totalorder %s96, %s110
      %p112 = scmp.eq.s32.totalorder %s39, 0
      %p113 = por %p111, %p112
      %s115 = sadd.s32 %s114, 1
      %p118 = scmp.eq.s32.totalorder %s33, 1
      %p119 = scmp.ne.s32.totalorder %s114, %s116
      %p120 = scmp.eq.s32.totalorder %s33, 0
      %p121 = por %p119, %p120
      %p122 = scmp.ne.s32.totalorder %s114, %s116
      %p123 = scmp.eq.s32.totalorder %s38, 1
      %p124 = por %p122, %p123
      %p125 = scmp.ne.s32.totalorder %s116, %s117
      %p126 = scmp.eq.s32.totalorder %s38, 0
      %p127 = por %p125, %p126
      %p128 = scmp.ne.s32.totalorder %s116, %s117
      %p129 = scmp.eq.s32.totalorder %s39, 1
      %p130 = por %p128, %p129
      %p132 = scmp.ne.s32.totalorder %s117, %s131
      %p133 = scmp.eq.s32.totalorder %s39, 0
      %p134 = por %p132, %p133
      %s136 = sadd.s32 %s135, 1
      %p139 = scmp.eq.s32.totalorder %s33, 1
      %p140 = scmp.ne.s32.totalorder %s135, %s137
      %p141 = scmp.eq.s32.totalorder %s33, 0
      %p142 = por %p140, %p141
      %p143 = scmp.ne.s32.totalorder %s135, %s137
      %p144 = scmp.eq.s32.totalorder %s38, 1
      %p145 = por %p143, %p144
      %p146 = scmp.ne.s32.totalorder %s137, %s138
      %p147 = scmp.eq.s32.totalorder %s38, 0
      %p148 = por %p146, %p147
      %p149 = scmp.ne.s32.totalorder %s137, %s138
      %p150 = scmp.eq.s32.totalorder %s39, 1
      %p151 = por %p149, %p150
      %p153 = scmp.ne.s32.totalorder %s138, %s152
      %p154 = scmp.eq.s32.totalorder %s39, 0
      %p155 = por %p153, %p154
      %s157 = sadd.s32 %s156, 1
      %p160 = scmp.eq.s32.totalorder %s33, 1
      %p161 = scmp.ne.s32.totalorder %s156, %s158
      %p162 = scmp.eq.s32.totalorder %s33, 0
      %p163 = por %p161, %p162
      %p164 = scmp.ne.s32.totalorder %s156, %s158
      %p165 = scmp.eq.s32.totalorder %s38, 1
      %p166 = por %p164, %p165
      %p167 = scmp.ne.s32.totalorder %s158, %s159
      %p168 = scmp.eq.s32.totalorder %s38, 0
      %p169 = por %p167, %p168
      %p170 = scmp.ne.s32.totalorder %s158, %s159
      %p171 = scmp.eq.s32.totalorder %s39, 1
      %p172 = por %p170, %p171
      %p174 = scmp.ne.s32.totalorder %s159, %s173
      %p175 = scmp.eq.s32.totalorder %s39, 0
      %p176 = por %p174, %p175
      %s178 = sadd.s32 %s177, 1
      %p181 = scmp.eq.s32.totalorder %s33, 1
      %p182 = scmp.ne.s32.totalorder %s177, %s179
      %p183 = scmp.eq.s32.totalorder %s33, 0
      %p184 = por %p182, %p183
      %p185 = scmp.ne.s32.totalorder %s177, %s179
      %p186 = scmp.eq.s32.totalorder %s38, 1
      %p187 = por %p185, %p186
      %p188 = scmp.ne.s32.totalorder %s179, %s180
      %p189 = scmp.eq.s32.totalorder %s38, 0
      %p190 = por %p188, %p189
      %p191 = scmp.ne.s32.totalorder %s179, %s180
      %p192 = scmp.eq.s32.totalorder %s39, 1
      %p193 = por %p191, %p192
      %p195 = scmp.ne.s32.totalorder %s180, %s194
      %p196 = scmp.eq.s32.totalorder %s39, 0
      %p197 = por %p195, %p196
      %s199 = sadd.s32 %s198, 1
      %p202 = scmp.eq.s32.totalorder %s33, 1
      %p203 = scmp.ne.s32.totalorder %s198, %s200
      %p204 = scmp.eq.s32.totalorder %s33, 0
      %p205 = por %p203, %p204
      %p206 = scmp.ne.s32.totalorder %s198, %s200
      %p207 = scmp.eq.s32.totalorder %s38, 1
      %p208 = por %p206, %p207
      %p209 = scmp.ne.s32.totalorder %s200, %s201
      %p210 = scmp.eq.s32.totalorder %s38, 0
      %p211 = por %p209, %p210
      %p212 = scmp.ne.s32.totalorder %s200, %s201
      %p213 = scmp.eq.s32.totalorder %s39, 1
      %p214 = por %p212, %p213
      %p216 = scmp.ne.s32.totalorder %s201, %s215
      %p217 = scmp.eq.s32.totalorder %s39, 0
      %p218 = por %p216, %p217
      %s220 = sadd.s32 %s219, 1
      %p223 = scmp.eq.s32.totalorder %s33, 1
      %p224 = scmp.ne.s32.totalorder %s219, %s221
      %p225 = scmp.eq.s32.totalorder %s33, 0
      %p226 = por %p224, %p225
      %p227 = scmp.ne.s32.totalorder %s219, %s221
      %p228 = scmp.eq.s32.totalorder %s38, 1
      %p229 = por %p227, %p228
      %p230 = scmp.ne.s32.totalorder %s221, %s222
      %p231 = scmp.eq.s32.totalorder %s38, 0
      %p232 = por %p230, %p231
      %p233 = scmp.ne.s32.totalorder %s221, %s222
      %p234 = scmp.eq.s32.totalorder %s39, 1
      %p235 = por %p233, %p234
      %p237 = scmp.ne.s32.totalorder %s222, %s236
      %p238 = scmp.eq.s32.totalorder %s39, 0
      %p239 = por %p237, %p238
      %s241 = sadd.s32 %s240, 1
      %p244 = scmp.eq.s32.totalorder %s33, 1
      %p245 = scmp.ne.s32.totalorder %s240, %s242
      %p246 = scmp.eq.s32.totalorder %s33, 0
      %p247 = por %p245, %p246
      %p248 = scmp.ne.s32.totalorder %s240, %s242
      %p249 = scmp.eq.s32.totalorder %s38, 1
      %p250 = por %p248, %p249
      %p251 = scmp.ne.s32.totalorder %s242, %s243
      %p252 = scmp.eq.s32.totalorder %s38, 0
      %p253 = por %p251, %p252
      %p254 = scmp.ne.s32.totalorder %s242, %s243
      %p255 = scmp.eq.s32.totalorder %s39, 1
      %p256 = por %p254, %p255
      %p258 = scmp.ne.s32.totalorder %s243, %s257
      %p259 = scmp.eq.s32.totalorder %s39, 0
      %p260 = por %p258, %p259
      %s262 = sadd.s32 %s261, 1
      %p265 = scmp.eq.s32.totalorder %s33, 1
      %p266 = scmp.ne.s32.totalorder %s261, %s263
      %p267 = scmp.eq.s32.totalorder %s33, 0
      %p268 = por %p266, %p267
      %p269 = scmp.ne.s32.totalorder %s261, %s263
      %p270 = scmp.eq.s32.totalorder %s38, 1
      %p271 = por %p269, %p270
      %p272 = scmp.ne.s32.totalorder %s263, %s264
      %p273 = scmp.eq.s32.totalorder %s38, 0
      %p274 = por %p272, %p273
      %p275 = scmp.ne.s32.totalorder %s263, %s264
      %p276 = scmp.eq.s32.totalorder %s39, 1
      %p277 = por %p275, %p276
      %p279 = scmp.ne.s32.totalorder %s264, %s278
      %p280 = scmp.eq.s32.totalorder %s39, 0
      %p281 = por %p279, %p280
      %s283 = sadd.s32 %s282, 1
      %p286 = scmp.eq.s32.totalorder %s33, 1
      %p287 = scmp.ne.s32.totalorder %s282, %s284
      %p288 = scmp.eq.s32.totalorder %s33, 0
      %p289 = por %p287, %p288
      %p290 = scmp.ne.s32.totalorder %s282, %s284
      %p291 = scmp.eq.s32.totalorder %s38, 1
      %p292 = por %p290, %p291
      %p293 = scmp.ne.s32.totalorder %s284, %s285
      %p294 = scmp.eq.s32.totalorder %s38, 0
      %p295 = por %p293, %p294
      %p296 = scmp.ne.s32.totalorder %s284, %s285
      %p297 = scmp.eq.s32.totalorder %s39, 1
      %p298 = por %p296, %p297
      %p300 = scmp.ne.s32.totalorder %s285, %s299
      %p301 = scmp.eq.s32.totalorder %s39, 0
      %p302 = por %p300, %p301
      %s303 = ssub.s32 %s33, %s40
      %p304 = scmp.eq.s32.totalorder %s303, 0
      %s306 = sadd.s32 %s305, 1
      %s307 = scalar_select %p304, %s305, %s306
      %p310 = pneg %p304
      %p311 = scmp.eq.s32.totalorder %s33, 1
      %p312 = por %p310, %p311
      %p313 = scmp.ne.s32.totalorder %s305, %s308
      %p314 = scmp.eq.s32.totalorder %s33, 0
      %p315 = por %p313, %p314
      %p316 = scmp.ne.s32.totalorder %s305, %s308
      %p317 = scmp.eq.s32.totalorder %s38, 1
      %p318 = por %p316, %p317
      %p319 = scmp.ne.s32.totalorder %s308, %s309
      %p320 = scmp.eq.s32.totalorder %s38, 0
      %p321 = por %p319, %p320
      %p322 = scmp.ne.s32.totalorder %s308, %s309
      %p323 = scmp.eq.s32.totalorder %s39, 1
      %p324 = por %p322, %p323
      %p326 = scmp.ne.s32.totalorder %s309, %s325
      %p327 = scmp.eq.s32.totalorder %s39, 0
      %p328 = por %p326, %p327
      %p329 = scmp.le.s32.totalorder 1, %s33
      %p330 = scmp.lt.s32.totalorder %s33, 3
      %p331 = pnand %p329, %p330
      %p332 = pneg %p331
      // Predicated region
      $region9: #{tpu_custom_call.1} parent=5 // pred_check
        _
      $region10: #{tpu_custom_call.1} parent=5 // pred_check_branch
        %334 = sbr.rel (%p331) target = $region12
      $region11: #{tpu_custom_call.1} parent=5 // pred_region
        %s335 = ssub.s32 %s33, 1
        // Predicated region
        $region13: #{tpu_custom_call.1} parent=11 // pred_check
          %p336 = pneg %p106
        $region14: #{tpu_custom_call.1} parent=11 // pred_check_branch
          %338 = sbr.rel (%p336) target = $region16
        $region15: #{tpu_custom_call.1} parent=11 // pred_region
          _
        $region16: #{tpu_custom_call.1} parent=11 // pred_fallthru
          _
        // Predicated region
        $region17: #{tpu_custom_call.1} parent=11 // pred_check
          %p339 = pneg %p127
        $region18: #{tpu_custom_call.1} parent=11 // pred_check_branch
          %341 = sbr.rel (%p339) target = $region20
        $region19: #{tpu_custom_call.1} parent=11 // pred_region
          _
        $region20: #{tpu_custom_call.1} parent=11 // pred_fallthru
          _
        // Predicated region
        $region21: #{tpu_custom_call.1} parent=11 // pred_check
          %p342 = pneg %p148
        $region22: #{tpu_custom_call.1} parent=11 // pred_check_branch
          %344 = sbr.rel (%p342) target = $region24
        $region23: #{tpu_custom_call.1} parent=11 // pred_region
          _
        $region24: #{tpu_custom_call.1} parent=11 // pred_fallthru
          _
        // Predicated region
        $region25: #{tpu_custom_call.1} parent=11 // pred_check
          %p345 = pneg %p169
        $region26: #{tpu_custom_call.1} parent=11 // pred_check_branch
          %347 = sbr.rel (%p345) target = $region28
        $region27: #{tpu_custom_call.1} parent=11 // pred_region
          _
        $region28: #{tpu_custom_call.1} parent=11 // pred_fallthru
          _
        // Predicated region
        $region29: #{tpu_custom_call.1} parent=11 // pred_check
          %p348 = pneg %p190
        $region30: #{tpu_custom_call.1} parent=11 // pred_check_branch
          %350 = sbr.rel (%p348) target = $region32
        $region31: #{tpu_custom_call.1} parent=11 // pred_region
          _
        $region32: #{tpu_custom_call.1} parent=11 // pred_fallthru
          _
        // Predicated region
        $region33: #{tpu_custom_call.1} parent=11 // pred_check
          %p351 = pneg %p211
        $region34: #{tpu_custom_call.1} parent=11 // pred_check_branch
          %353 = sbr.rel (%p351) target = $region36
        $region35: #{tpu_custom_call.1} parent=11 // pred_region
          _
        $region36: #{tpu_custom_call.1} parent=11 // pred_fallthru
          _
        // Predicated region
        $region37: #{tpu_custom_call.1} parent=11 // pred_check
          %p354 = pneg %p232
        $region38: #{tpu_custom_call.1} parent=11 // pred_check_branch
          %356 = sbr.rel (%p354) target = $region40
        $region39: #{tpu_custom_call.1} parent=11 // pred_region
          _
        $region40: #{tpu_custom_call.1} parent=11 // pred_fallthru
          _
        // Predicated region
        $region41: #{tpu_custom_call.1} parent=11 // pred_check
          %p357 = pneg %p253
        $region42: #{tpu_custom_call.1} parent=11 // pred_check_branch
          %359 = sbr.rel (%p357) target = $region44
        $region43: #{tpu_custom_call.1} parent=11 // pred_region
          _
        $region44: #{tpu_custom_call.1} parent=11 // pred_fallthru
          _
        // Predicated region
        $region45: #{tpu_custom_call.1} parent=11 // pred_check
          %p360 = pneg %p274
        $region46: #{tpu_custom_call.1} parent=11 // pred_check_branch
          %362 = sbr.rel (%p360) target = $region48
        $region47: #{tpu_custom_call.1} parent=11 // pred_region
          _
        $region48: #{tpu_custom_call.1} parent=11 // pred_fallthru
          _
        // Predicated region
        $region49: #{tpu_custom_call.1} parent=11 // pred_check
          %p363 = pneg %p295
        $region50: #{tpu_custom_call.1} parent=11 // pred_check_branch
          %365 = sbr.rel (%p363) target = $region52
        $region51: #{tpu_custom_call.1} parent=11 // pred_region
          _
        $region52: #{tpu_custom_call.1} parent=11 // pred_fallthru
          _
      $region12: #{tpu_custom_call.1} parent=5 // pred_fallthru
        _
      %p366 = scmp.lt.s32.totalorder %s33, 2
      // Predicated region
      $region53: #{tpu_custom_call.1} parent=5 // pred_check
        %p367 = pneg %p366
      $region54: #{tpu_custom_call.1} parent=5 // pred_check_branch
        %369 = sbr.rel (%p367) target = $region56
      $region55: #{tpu_custom_call.1} parent=5 // pred_region
        // Predicated region
        $region57: #{tpu_custom_call.1} parent=55 // pred_check
          %p370 = pneg %p53
        $region58: #{tpu_custom_call.1} parent=55 // pred_check_branch
          %372 = sbr.rel (%p370) target = $region60
        $region59: #{tpu_custom_call.1} parent=55 // pred_region
          %s373 = smul.u32 64, %s33
          %p374 = scmp.lt.s32.totalorder %s373, 127
          %s375 = scalar_select %p374, %s373, 127
          %s376 = smul.addr %s375, 8
          %s377 = scalar_lea.vmem %s2, %s376
          %s378 = smul.u32 64, %s33
        $region60: #{tpu_custom_call.1} parent=55 // pred_fallthru
          _
        // Predicated region
        $region61: #{tpu_custom_call.1} parent=55 // pred_check
          %p379 = pneg %p79
        $region62: #{tpu_custom_call.1} parent=55 // pred_check_branch
          %381 = sbr.rel (%p379) target = $region64
        $region63: #{tpu_custom_call.1} parent=55 // pred_region
          %s382 = smul.u32 64, %s33
          %p383 = scmp.lt.s32.totalorder %s382, 127
          %s384 = scalar_select %p383, %s382, 127
          %s385 = smul.addr %s384, 8
          %s386 = scalar_lea.vmem %s3, %s385
          %s387 = smul.u32 64, %s33
        $region64: #{tpu_custom_call.1} parent=55 // pred_fallthru
          _
      $region56: #{tpu_custom_call.1} parent=5 // pred_fallthru
        _
      %p388 = scmp.le.s32.totalorder 1, %s33
      %p389 = scmp.lt.s32.totalorder %s33, 3
      %p390 = pnand %p388, %p389
      %p391 = pneg %p390
      // Predicated region
      $region65: #{tpu_custom_call.1} parent=5 // pred_check
        _
      $region66: #{tpu_custom_call.1} parent=5 // pred_check_branch
        %393 = sbr.rel (%p390) target = $region68
      $region67: #{tpu_custom_call.1} parent=5 // pred_region
        %s394 = ssub.s32 %s33, 1
        %s395 = smul.u32 64, %s38
        %p396 = scmp.lt.s32.totalorder %s395, 127
        %s397 = scalar_select %p396, %s395, 127
        %s398 = smul.addr %s397, 8
        %s399 = scalar_lea.vmem %s2, %s398
        %p400 = pneg %p59
        %p401 = pneg %p56
        %s402 = smul.u32 64, %s38
        %p403 = scmp.lt.s32.totalorder %s402, 127
        %s404 = scalar_select %p403, %s402, 127
        %s405 = smul.addr %s404, 8
        %s406 = scalar_lea.vmem %s3, %s405
        %p407 = pneg %p85
        %p408 = pneg %p82
        %p409 = pneg %p106
        %p410 = pneg %p103
        %p411 = pneg %p127
        %p412 = pneg %p124
        %p413 = pneg %p148
        %p414 = pneg %p145
        %p415 = pneg %p169
        %p416 = pneg %p166
        %p417 = pneg %p190
        %p418 = pneg %p187
        %p419 = pneg %p211
        %p420 = pneg %p208
        %p421 = pneg %p232
        %p422 = pneg %p229
        %p423 = pneg %p253
        %p424 = pneg %p250
        %p425 = pneg %p274
        %p426 = pneg %p271
        %p427 = pneg %p295
        %p428 = pneg %p292
        %p429 = pneg %p321
        %p430 = pneg %p318
        %s431 = sand.u32 %s308, 1
        %s432 = scalar_lea.sflag [#allocation6], %s431
        %s433 = sand.u32 %s308, 1
        %s434 = smul.addr %s433, 256
        %s435 = scalar_lea.vmem [#allocation5], %s434
        %s436 = smul.u32 64, %s38
        %p437 = scmp.lt.s32.totalorder %s436, 127
        %s438 = scalar_select %p437, %s436, 127
        %s439 = smul.addr %s438, 8
        %s440 = scalar_lea.vmem %s2, %s439
        %s441 = smul.u32 64, %s38
        %s442 = smul.u32 64, %s38
        %p443 = scmp.lt.s32.totalorder %s442, 127
        %s444 = scalar_select %p443, %s442, 127
        %s445 = smul.addr %s444, 8
        %s446 = scalar_lea.vmem %s3, %s445
        %s447 = smul.u32 64, %s38
        %s448 = smul.u32 64, %s38
        %s450 = sld [smem:[#allocation3 + %s38]]
        %s451 = sld [smem:[#allocation4 + %s38]]
        %v452 = vld [vmem:[%s440] sm:$0xff]
        %v453 = vld [vmem:[%s440 + $0x8] sm:$0xff]
        %v454 = vld [vmem:[%s440 + $0x10] sm:$0xff]
        %v455 = vld [vmem:[%s440 + $0x18] sm:$0xff]
        %v456 = vld [vmem:[%s440 + $0x20] sm:$0xff]
        %v457 = vld [vmem:[%s440 + $0x28] sm:$0xff]
        %v458 = vld [vmem:[%s440 + $0x30] sm:$0xff]
        %v459 = vld [vmem:[%s440 + $0x38] sm:$0xff]
        %v460 = vld [vmem:[%s440 + $0x40] sm:$0xff]
        %v461 = vld [vmem:[%s440 + $0x48] sm:$0xff]
        %v462 = vld [vmem:[%s440 + $0x50] sm:$0xff]
        %v463 = vld [vmem:[%s440 + $0x58] sm:$0xff]
        %v464 = vld [vmem:[%s440 + $0x60] sm:$0xff]
        %v465 = vld [vmem:[%s440 + $0x68] sm:$0xff]
        %v466 = vld [vmem:[%s440 + $0x70] sm:$0xff]
        %v467 = vld [vmem:[%s440 + $0x78] sm:$0xff]
        %v468 = vld [vmem:[%s440 + $0x80] sm:$0xff]
        %v469 = vld [vmem:[%s440 + $0x88] sm:$0xff]
        %v470 = vld [vmem:[%s440 + $0x90] sm:$0xff]
        %v471 = vld [vmem:[%s440 + $0x98] sm:$0xff]
        %v472 = vld [vmem:[%s440 + $0xa0] sm:$0xff]
        %v473 = vld [vmem:[%s440 + $0xa8] sm:$0xff]
        %v474 = vld [vmem:[%s440 + $0xb0] sm:$0xff]
        %v475 = vld [vmem:[%s440 + $0xb8] sm:$0xff]
        %v476 = vld [vmem:[%s440 + $0xc0] sm:$0xff]
        %v477 = vld [vmem:[%s440 + $0xc8] sm:$0xff]
        %v478 = vld [vmem:[%s440 + $0xd0] sm:$0xff]
        %v479 = vld [vmem:[%s440 + $0xd8] sm:$0xff]
        %v480 = vld [vmem:[%s440 + $0xe0] sm:$0xff]
        %v481 = vld [vmem:[%s440 + $0xe8] sm:$0xff]
        %v482 = vld [vmem:[%s440 + $0xf0] sm:$0xff]
        %v483 = vld [vmem:[%s440 + $0xf8] sm:$0xff]
        %v484 = vld [vmem:[%s440 + $0x100] sm:$0xff]
        %v485 = vld [vmem:[%s440 + $0x108] sm:$0xff]
        %v486 = vld [vmem:[%s440 + $0x110] sm:$0xff]
        %v487 = vld [vmem:[%s440 + $0x118] sm:$0xff]
        %v488 = vld [vmem:[%s440 + $0x120] sm:$0xff]
        %v489 = vld [vmem:[%s440 + $0x128] sm:$0xff]
        %v490 = vld [vmem:[%s440 + $0x130] sm:$0xff]
        %v491 = vld [vmem:[%s440 + $0x138] sm:$0xff]
        %v492 = vld [vmem:[%s440 + $0x140] sm:$0xff]
        %v493 = vld [vmem:[%s440 + $0x148] sm:$0xff]
        %v494 = vld [vmem:[%s440 + $0x150] sm:$0xff]
        %v495 = vld [vmem:[%s440 + $0x158] sm:$0xff]
        %v496 = vld [vmem:[%s440 + $0x160] sm:$0xff]
        %v497 = vld [vmem:[%s440 + $0x168] sm:$0xff]
        %v498 = vld [vmem:[%s440 + $0x170] sm:$0xff]
        %v499 = vld [vmem:[%s440 + $0x178] sm:$0xff]
        %v500 = vld [vmem:[%s440 + $0x180] sm:$0xff]
        %v501 = vld [vmem:[%s440 + $0x188] sm:$0xff]
        %v502 = vld [vmem:[%s440 + $0x190] sm:$0xff]
        %v503 = vld [vmem:[%s440 + $0x198] sm:$0xff]
        %v504 = vld [vmem:[%s440 + $0x1a0] sm:$0xff]
        %v505 = vld [vmem:[%s440 + $0x1a8] sm:$0xff]
        %v506 = vld [vmem:[%s440 + $0x1b0] sm:$0xff]
        %v507 = vld [vmem:[%s440 + $0x1b8] sm:$0xff]
        %v508 = vld [vmem:[%s440 + $0x1c0] sm:$0xff]
        %v509 = vld [vmem:[%s440 + $0x1c8] sm:$0xff]
        %v510 = vld [vmem:[%s440 + $0x1d0] sm:$0xff]
        %v511 = vld [vmem:[%s440 + $0x1d8] sm:$0xff]
        %v512 = vld [vmem:[%s440 + $0x1e0] sm:$0xff]
        %v513 = vld [vmem:[%s440 + $0x1e8] sm:$0xff]
        %v514 = vld [vmem:[%s440 + $0x1f0] sm:$0xff]
        %v515 = vld [vmem:[%s440 + $0x1f8] sm:$0xff]
        %v516 = vld [vmem:[%s446] sm:$0xff]
        %v517 = vld [vmem:[%s446 + $0x8] sm:$0xff]
        %v518 = vld [vmem:[%s446 + $0x10] sm:$0xff]
        %v519 = vld [vmem:[%s446 + $0x18] sm:$0xff]
        %v520 = vld [vmem:[%s446 + $0x20] sm:$0xff]
        %v521 = vld [vmem:[%s446 + $0x28] sm:$0xff]
        %v522 = vld [vmem:[%s446 + $0x30] sm:$0xff]
        %v523 = vld [vmem:[%s446 + $0x38] sm:$0xff]
        %v524 = vld [vmem:[%s446 + $0x40] sm:$0xff]
        %v525 = vld [vmem:[%s446 + $0x48] sm:$0xff]
        %v526 = vld [vmem:[%s446 + $0x50] sm:$0xff]
        %v527 = vld [vmem:[%s446 + $0x58] sm:$0xff]
        %v528 = vld [vmem:[%s446 + $0x60] sm:$0xff]
        %v529 = vld [vmem:[%s446 + $0x68] sm:$0xff]
        %v530 = vld [vmem:[%s446 + $0x70] sm:$0xff]
        %v531 = vld [vmem:[%s446 + $0x78] sm:$0xff]
        %v532 = vld [vmem:[%s446 + $0x80] sm:$0xff]
        %v533 = vld [vmem:[%s446 + $0x88] sm:$0xff]
        %v534 = vld [vmem:[%s446 + $0x90] sm:$0xff]
        %v535 = vld [vmem:[%s446 + $0x98] sm:$0xff]
        %v536 = vld [vmem:[%s446 + $0xa0] sm:$0xff]
        %v537 = vld [vmem:[%s446 + $0xa8] sm:$0xff]
        %v538 = vld [vmem:[%s446 + $0xb0] sm:$0xff]
        %v539 = vld [vmem:[%s446 + $0xb8] sm:$0xff]
        %v540 = vld [vmem:[%s446 + $0xc0] sm:$0xff]
        %v541 = vld [vmem:[%s446 + $0xc8] sm:$0xff]
        %v542 = vld [vmem:[%s446 + $0xd0] sm:$0xff]
        %v543 = vld [vmem:[%s446 + $0xd8] sm:$0xff]
        %v544 = vld [vmem:[%s446 + $0xe0] sm:$0xff]
        %v545 = vld [vmem:[%s446 + $0xe8] sm:$0xff]
        %v546 = vld [vmem:[%s446 + $0xf0] sm:$0xff]
        %v547 = vld [vmem:[%s446 + $0xf8] sm:$0xff]
        %v548 = vld [vmem:[%s446 + $0x100] sm:$0xff]
        %v549 = vld [vmem:[%s446 + $0x108] sm:$0xff]
        %v550 = vld [vmem:[%s446 + $0x110] sm:$0xff]
        %v551 = vld [vmem:[%s446 + $0x118] sm:$0xff]
        %v552 = vld [vmem:[%s446 + $0x120] sm:$0xff]
        %v553 = vld [vmem:[%s446 + $0x128] sm:$0xff]
        %v554 = vld [vmem:[%s446 + $0x130] sm:$0xff]
        %v555 = vld [vmem:[%s446 + $0x138] sm:$0xff]
        %v556 = vld [vmem:[%s446 + $0x140] sm:$0xff]
        %v557 = vld [vmem:[%s446 + $0x148] sm:$0xff]
        %v558 = vld [vmem:[%s446 + $0x150] sm:$0xff]
        %v559 = vld [vmem:[%s446 + $0x158] sm:$0xff]
        %v560 = vld [vmem:[%s446 + $0x160] sm:$0xff]
        %v561 = vld [vmem:[%s446 + $0x168] sm:$0xff]
        %v562 = vld [vmem:[%s446 + $0x170] sm:$0xff]
        %v563 = vld [vmem:[%s446 + $0x178] sm:$0xff]
        %v564 = vld [vmem:[%s446 + $0x180] sm:$0xff]
        %v565 = vld [vmem:[%s446 + $0x188] sm:$0xff]
        %v566 = vld [vmem:[%s446 + $0x190] sm:$0xff]
        %v567 = vld [vmem:[%s446 + $0x198] sm:$0xff]
        %v568 = vld [vmem:[%s446 + $0x1a0] sm:$0xff]
        %v569 = vld [vmem:[%s446 + $0x1a8] sm:$0xff]
        %v570 = vld [vmem:[%s446 + $0x1b0] sm:$0xff]
        %v571 = vld [vmem:[%s446 + $0x1b8] sm:$0xff]
        %v572 = vld [vmem:[%s446 + $0x1c0] sm:$0xff]
        %v573 = vld [vmem:[%s446 + $0x1c8] sm:$0xff]
        %v574 = vld [vmem:[%s446 + $0x1d0] sm:$0xff]
        %v575 = vld [vmem:[%s446 + $0x1d8] sm:$0xff]
        %v576 = vld [vmem:[%s446 + $0x1e0] sm:$0xff]
        %v577 = vld [vmem:[%s446 + $0x1e8] sm:$0xff]
        %v578 = vld [vmem:[%s446 + $0x1f0] sm:$0xff]
        %v579 = vld [vmem:[%s446 + $0x1f8] sm:$0xff]
        %v580 = vpack.c.bf16 %v517, %v516
        %v581 = vpack.c.bf16 %v519, %v518
        %v582 = vpack.c.bf16 %v521, %v520
        %v583 = vpack.c.bf16 %v523, %v522
        %v584 = vpack.c.bf16 %v525, %v524
        %v585 = vpack.c.bf16 %v527, %v526
        %v586 = vpack.c.bf16 %v529, %v528
        %v587 = vpack.c.bf16 %v531, %v530
        %v588 = vpack.c.bf16 %v533, %v532
        %v589 = vpack.c.bf16 %v535, %v534
        %v590 = vpack.c.bf16 %v537, %v536
        %v591 = vpack.c.bf16 %v539, %v538
        %v592 = vpack.c.bf16 %v541, %v540
        %v593 = vpack.c.bf16 %v543, %v542
        %v594 = vpack.c.bf16 %v545, %v544
        %v595 = vpack.c.bf16 %v547, %v546
        %v596 = vpack.c.bf16 %v549, %v548
        %v597 = vpack.c.bf16 %v551, %v550
        %v598 = vpack.c.bf16 %v553, %v552
        %v599 = vpack.c.bf16 %v555, %v554
        %v600 = vpack.c.bf16 %v557, %v556
        %v601 = vpack.c.bf16 %v559, %v558
        %v602 = vpack.c.bf16 %v561, %v560
        %v603 = vpack.c.bf16 %v563, %v562
        %v604 = vpack.c.bf16 %v565, %v564
        %v605 = vpack.c.bf16 %v567, %v566
        %v606 = vpack.c.bf16 %v569, %v568
        %v607 = vpack.c.bf16 %v571, %v570
        %v608 = vpack.c.bf16 %v573, %v572
        %v609 = vpack.c.bf16 %v575, %v574
        %v610 = vpack.c.bf16 %v577, %v576
        %v611 = vpack.c.bf16 %v579, %v578
        %s612 = sadd.s32 %s451, 1
        // While loop
        $region69: #{tpu_custom_call.1} parent=67 // loop_pre_header
          _
        $region70: #{tpu_custom_call.1} parent=67 // loop_header
          %s614 = sphi %s450, %s616
          %p615 = scmp.ge.s32.totalorder %s614, %s612
          %v619 = vphi 0.0, %v2549
          %v620 = vphi 0.0, %v2550
          %v621 = vphi 0.0, %v2551
          %v622 = vphi 0.0, %v2552
          %v623 = vphi 0.0, %v2553
          %v624 = vphi 0.0, %v2554
          %v625 = vphi 0.0, %v2555
          %v626 = vphi 0.0, %v2556
          %v627 = vphi 0.0, %v2557
          %v628 = vphi 0.0, %v2558
          %v629 = vphi 0.0, %v2559
          %v630 = vphi 0.0, %v2560
          %v631 = vphi 0.0, %v2561
          %v632 = vphi 0.0, %v2562
          %v633 = vphi 0.0, %v2563
          %v634 = vphi 0.0, %v2564
          %v635 = vphi 0.0, %v2565
          %v636 = vphi 0.0, %v2566
          %v637 = vphi 0.0, %v2567
          %v638 = vphi 0.0, %v2568
          %v639 = vphi 0.0, %v2569
          %v640 = vphi 0.0, %v2570
          %v641 = vphi 0.0, %v2571
          %v642 = vphi 0.0, %v2572
          %v643 = vphi 0.0, %v2573
          %v644 = vphi 0.0, %v2574
          %v645 = vphi 0.0, %v2575
          %v646 = vphi 0.0, %v2576
          %v647 = vphi 0.0, %v2577
          %v648 = vphi 0.0, %v2578
          %v649 = vphi 0.0, %v2579
          %v650 = vphi 0.0, %v2580
          %v651 = vphi 0.0, %v2581
          %v652 = vphi 0.0, %v2582
          %v653 = vphi 0.0, %v2583
          %v654 = vphi 0.0, %v2584
          %v655 = vphi 0.0, %v2585
          %v656 = vphi 0.0, %v2586
          %v657 = vphi 0.0, %v2587
          %v658 = vphi 0.0, %v2588
          %v659 = vphi 0.0, %v2589
          %v660 = vphi 0.0, %v2590
          %v661 = vphi 0.0, %v2591
          %v662 = vphi 0.0, %v2592
          %v663 = vphi 0.0, %v2593
          %v664 = vphi 0.0, %v2594
          %v665 = vphi 0.0, %v2595
          %v666 = vphi 0.0, %v2596
          %v667 = vphi 0.0, %v2597
          %v668 = vphi 0.0, %v2598
          %v669 = vphi 0.0, %v2599
          %v670 = vphi 0.0, %v2600
          %v671 = vphi 0.0, %v2601
          %v672 = vphi 0.0, %v2602
          %v673 = vphi 0.0, %v2603
          %v674 = vphi 0.0, %v2604
          %v675 = vphi 0.0, %v2605
          %v676 = vphi 0.0, %v2606
          %v677 = vphi 0.0, %v2607
          %v678 = vphi 0.0, %v2608
          %v679 = vphi 0.0, %v2609
          %v680 = vphi 0.0, %v2610
          %v681 = vphi 0.0, %v2611
          %v682 = vphi 0.0, %v2612
          %v683 = vphi 0.0, %v3916
          %v684 = vphi 0.0, %v3917
          %v685 = vphi 0.0, %v3918
          %v686 = vphi 0.0, %v3919
          %v687 = vphi 0.0, %v3920
          %v688 = vphi 0.0, %v3921
          %v689 = vphi 0.0, %v3922
          %v690 = vphi 0.0, %v3923
          %v691 = vphi 0.0, %v3924
          %v692 = vphi 0.0, %v3925
          %v693 = vphi 0.0, %v3926
          %v694 = vphi 0.0, %v3927
          %v695 = vphi 0.0, %v3928
          %v696 = vphi 0.0, %v3929
          %v697 = vphi 0.0, %v3930
          %v698 = vphi 0.0, %v3931
          %v699 = vphi 0.0, %v3932
          %v700 = vphi 0.0, %v3933
          %v701 = vphi 0.0, %v3934
          %v702 = vphi 0.0, %v3935
          %v703 = vphi 0.0, %v3936
          %v704 = vphi 0.0, %v3937
          %v705 = vphi 0.0, %v3938
          %v706 = vphi 0.0, %v3939
          %v707 = vphi 0.0, %v3940
          %v708 = vphi 0.0, %v3941
          %v709 = vphi 0.0, %v3942
          %v710 = vphi 0.0, %v3943
          %v711 = vphi 0.0, %v3944
          %v712 = vphi 0.0, %v3945
          %v713 = vphi 0.0, %v3946
          %v714 = vphi 0.0, %v3947
          %v715 = vphi 0.0, %v3948
          %v716 = vphi 0.0, %v3949
          %v717 = vphi 0.0, %v3950
          %v718 = vphi 0.0, %v3951
          %v719 = vphi 0.0, %v3952
          %v720 = vphi 0.0, %v3953
          %v721 = vphi 0.0, %v3954
          %v722 = vphi 0.0, %v3955
          %v723 = vphi 0.0, %v3956
          %v724 = vphi 0.0, %v3957
          %v725 = vphi 0.0, %v3958
          %v726 = vphi 0.0, %v3959
          %v727 = vphi 0.0, %v3960
          %v728 = vphi 0.0, %v3961
          %v729 = vphi 0.0, %v3962
          %v730 = vphi 0.0, %v3963
          %v731 = vphi 0.0, %v3964
          %v732 = vphi 0.0, %v3965
          %v733 = vphi 0.0, %v3966
          %v734 = vphi 0.0, %v3967
          %v735 = vphi 0.0, %v3968
          %v736 = vphi 0.0, %v3969
          %v737 = vphi 0.0, %v3970
          %v738 = vphi 0.0, %v3971
          %v739 = vphi 0.0, %v3972
          %v740 = vphi 0.0, %v3973
          %v741 = vphi 0.0, %v3974
          %v742 = vphi 0.0, %v3975
          %v743 = vphi 0.0, %v3976
          %v744 = vphi 0.0, %v3977
          %v745 = vphi 0.0, %v3978
          %v746 = vphi 0.0, %v3979
        $region71: #{tpu_custom_call.1} parent=67 // loop_header_branch
          %618 = sbr.rel (%p615) target = $region75
        $region72: #{tpu_custom_call.1} parent=67 // loop_body
          %v747 = vstv %s614
          %vm748 = vcmp.eq.s32.totalorder %v452, %v747
          %vm749 = vcmp.eq.s32.totalorder %v453, %v747
          %vm750 = vcmp.eq.s32.totalorder %v454, %v747
          %vm751 = vcmp.eq.s32.totalorder %v455, %v747
          %vm752 = vcmp.eq.s32.totalorder %v456, %v747
          %vm753 = vcmp.eq.s32.totalorder %v457, %v747
          %vm754 = vcmp.eq.s32.totalorder %v458, %v747
          %vm755 = vcmp.eq.s32.totalorder %v459, %v747
          %vm756 = vcmp.eq.s32.totalorder %v460, %v747
          %vm757 = vcmp.eq.s32.totalorder %v461, %v747
          %vm758 = vcmp.eq.s32.totalorder %v462, %v747
          %vm759 = vcmp.eq.s32.totalorder %v463, %v747
          %vm760 = vcmp.eq.s32.totalorder %v464, %v747
          %vm761 = vcmp.eq.s32.totalorder %v465, %v747
          %vm762 = vcmp.eq.s32.totalorder %v466, %v747
          %vm763 = vcmp.eq.s32.totalorder %v467, %v747
          %vm764 = vcmp.eq.s32.totalorder %v468, %v747
          %vm765 = vcmp.eq.s32.totalorder %v469, %v747
          %vm766 = vcmp.eq.s32.totalorder %v470, %v747
          %vm767 = vcmp.eq.s32.totalorder %v471, %v747
          %vm768 = vcmp.eq.s32.totalorder %v472, %v747
          %vm769 = vcmp.eq.s32.totalorder %v473, %v747
          %vm770 = vcmp.eq.s32.totalorder %v474, %v747
          %vm771 = vcmp.eq.s32.totalorder %v475, %v747
          %vm772 = vcmp.eq.s32.totalorder %v476, %v747
          %vm773 = vcmp.eq.s32.totalorder %v477, %v747
          %vm774 = vcmp.eq.s32.totalorder %v478, %v747
          %vm775 = vcmp.eq.s32.totalorder %v479, %v747
          %vm776 = vcmp.eq.s32.totalorder %v480, %v747
          %vm777 = vcmp.eq.s32.totalorder %v481, %v747
          %vm778 = vcmp.eq.s32.totalorder %v482, %v747
          %vm779 = vcmp.eq.s32.totalorder %v483, %v747
          %vm780 = vcmp.eq.s32.totalorder %v484, %v747
          %vm781 = vcmp.eq.s32.totalorder %v485, %v747
          %vm782 = vcmp.eq.s32.totalorder %v486, %v747
          %vm783 = vcmp.eq.s32.totalorder %v487, %v747
          %vm784 = vcmp.eq.s32.totalorder %v488, %v747
          %vm785 = vcmp.eq.s32.totalorder %v489, %v747
          %vm786 = vcmp.eq.s32.totalorder %v490, %v747
          %vm787 = vcmp.eq.s32.totalorder %v491, %v747
          %vm788 = vcmp.eq.s32.totalorder %v492, %v747
          %vm789 = vcmp.eq.s32.totalorder %v493, %v747
          %vm790 = vcmp.eq.s32.totalorder %v494, %v747
          %vm791 = vcmp.eq.s32.totalorder %v495, %v747
          %vm792 = vcmp.eq.s32.totalorder %v496, %v747
          %vm793 = vcmp.eq.s32.totalorder %v497, %v747
          %vm794 = vcmp.eq.s32.totalorder %v498, %v747
          %vm795 = vcmp.eq.s32.totalorder %v499, %v747
          %vm796 = vcmp.eq.s32.totalorder %v500, %v747
          %vm797 = vcmp.eq.s32.totalorder %v501, %v747
          %vm798 = vcmp.eq.s32.totalorder %v502, %v747
          %vm799 = vcmp.eq.s32.totalorder %v503, %v747
          %vm800 = vcmp.eq.s32.totalorder %v504, %v747
          %vm801 = vcmp.eq.s32.totalorder %v505, %v747
          %vm802 = vcmp.eq.s32.totalorder %v506, %v747
          %vm803 = vcmp.eq.s32.totalorder %v507, %v747
          %vm804 = vcmp.eq.s32.totalorder %v508, %v747
          %vm805 = vcmp.eq.s32.totalorder %v509, %v747
          %vm806 = vcmp.eq.s32.totalorder %v510, %v747
          %vm807 = vcmp.eq.s32.totalorder %v511, %v747
          %vm808 = vcmp.eq.s32.totalorder %v512, %v747
          %vm809 = vcmp.eq.s32.totalorder %v513, %v747
          %vm810 = vcmp.eq.s32.totalorder %v514, %v747
          %vm811 = vcmp.eq.s32.totalorder %v515, %v747
          %s812 = smul.u32 %s614, 4
          %s813 = smul.addr %s812, 4
          %s814 = scalar_lea.vmem %s12, %s813
          %v815 = vld [vmem:[%s814] sm:$0xf]
          %v816 = vld [vmem:[%s814 + $0x4] sm:$0xf]
          %v817 = vld [vmem:[%s814 + $0x8] sm:$0xf]
          %v818 = vld [vmem:[%s814 + $0xc] sm:$0xf]
          %s819 = scalar_lea.vmem %s13, %s614
          %v820 = vld [vmem:[%s819] sm:$0x1]
          %s821 = smul.addr %s614, 4
          %s822 = scalar_lea.vmem %s4, %s821
          %v823 = vld [vmem:[%s822] sm:$0x7]
          %s824 = scalar_lea.vmem %s5, %s614
          %v825 = vld [vmem:[%s824] sm:$0x1]
          %v827 = vlaneseq
          %v828 = vshrl.u32 %v827, 7
          %v829 = vsub.s32 0, %v828
          %v830 = vrot.slane %v825, %v829
          %vm832 = vcmask 48128
          %v834 = vsel %vm832, %v580, 0
          %v837 = vsel %vm832, %v581, 0
          %v840 = vsel %vm832, %v582, 0
          %v843 = vsel %vm832, %v583, 0
          %v846 = vsel %vm832, %v584, 0
          %v849 = vsel %vm832, %v585, 0
          %v852 = vsel %vm832, %v586, 0
          %v855 = vsel %vm832, %v587, 0
          %v858 = vsel %vm832, %v588, 0
          %v861 = vsel %vm832, %v589, 0
          %v864 = vsel %vm832, %v590, 0
          %v867 = vsel %vm832, %v591, 0
          %v870 = vsel %vm832, %v592, 0
          %v873 = vsel %vm832, %v593, 0
          %v876 = vsel %vm832, %v594, 0
          %v879 = vsel %vm832, %v595, 0
          %v882 = vsel %vm832, %v596, 0
          %v885 = vsel %vm832, %v597, 0
          %v888 = vsel %vm832, %v598, 0
          %v891 = vsel %vm832, %v599, 0
          %v894 = vsel %vm832, %v600, 0
          %v897 = vsel %vm832, %v601, 0
          %v900 = vsel %vm832, %v602, 0
          %v903 = vsel %vm832, %v603, 0
          %v906 = vsel %vm832, %v604, 0
          %v909 = vsel %vm832, %v605, 0
          %v912 = vsel %vm832, %v606, 0
          %v915 = vsel %vm832, %v607, 0
          %v918 = vsel %vm832, %v608, 0
          %v921 = vsel %vm832, %v609, 0
          %v924 = vsel %vm832, %v610, 0
          %v927 = vsel %vm832, %v611, 0
          %vm929 = vcmask 1042432
          %v931 = vsel %vm929, %v823, 0
          %933 = vmatprep.subr.bf16.mxu0 0
          %934 = vmatpush1.bf16.msra.mxu0 0
          %935 = vmatprep.subr.bf16.mxu0 0
          %936 = vmatpush1.bf16.msra.mxu0 0
          %937 = vmatprep.subr.bf16.mxu0 0
          %938 = vmatpush1.bf16.msra.mxu0 0
          %939 = vmatprep.subr.bf16.mxu0 0
          %940 = vmatpush1.bf16.msra.mxu0 0
          %941 = vmatprep.subr.bf16.mxu0 0
          %942 = vmatpush1.bf16.msra.mxu0 0
          %943 = vmatprep.subr.bf16.mxu0 0
          %944 = vmatpush1.bf16.msra.mxu0 0
          %945 = vmatprep.subr.bf16.mxu0 0
          %946 = vmatpush1.bf16.msra.mxu0 0
          %947 = vmatprep.subr.bf16.mxu0 0
          %948 = vmatpush1.bf16.msra.mxu0 %v931
          %949 = vmatprep.subr.bf16.mxu0 0
          %950 = vmatpush2.bf16.msra.mxu0 0
          %951 = vmatprep.subr.bf16.mxu0 0
          %952 = vmatpush2.bf16.msra.mxu0 0
          %953 = vmatprep.subr.bf16.mxu0 0
          %954 = vmatpush2.bf16.msra.mxu0 0
          %955 = vmatprep.subr.bf16.mxu0 0
          %956 = vmatpush2.bf16.msra.mxu0 0
          %957 = vmatprep.subr.bf16.mxu0 0
          %958 = vmatpush2.bf16.msra.mxu0 0
          %959 = vmatprep.subr.bf16.mxu0 0
          %960 = vmatpush2.bf16.msra.mxu0 0
          %961 = vmatprep.subr.bf16.mxu0 0
          %962 = vmatpush2.bf16.msra.mxu0 0
          %963 = vmatprep.subr.bf16.mxu0 0
          %964 = vmatpush2.bf16.msra.mxu0 0
          %965 = vmatprep.mubr.bf16.mxu0 0
          %966 = vmatmul.mubr.bf16.gmra.mxu0 %v834
          %v967 = vpop.f32.mrf.mxu0
          %v968 = vadd.f32 %v830, %v967
          %v969 = vpop.f32.mrf.mxu0
          %v970 = vpop.f32.mrf.mxu0
          %v971 = vadd.f32 %v830, %v970
          %v972 = vpop.f32.mrf.mxu0
          %973 = vmatprep.mubr.bf16.mxu0 0
          %974 = vmatmul.mubr.bf16.gmra.mxu0 %v837
          %v975 = vpop.f32.mrf.mxu0
          %v976 = vadd.f32 %v830, %v975
          %v977 = vpop.f32.mrf.mxu0
          %v978 = vpop.f32.mrf.mxu0
          %v979 = vadd.f32 %v830, %v978
          %v980 = vpop.f32.mrf.mxu0
          %981 = vmatprep.mubr.bf16.mxu0 0
          %982 = vmatmul.mubr.bf16.gmra.mxu0 %v840
          %v983 = vpop.f32.mrf.mxu0
          %v984 = vadd.f32 %v830, %v983
          %v985 = vpop.f32.mrf.mxu0
          %v986 = vpop.f32.mrf.mxu0
          %v987 = vadd.f32 %v830, %v986
          %v988 = vpop.f32.mrf.mxu0
          %989 = vmatprep.mubr.bf16.mxu0 0
          %990 = vmatmul.mubr.bf16.gmra.mxu0 %v843
          %v991 = vpop.f32.mrf.mxu0
          %v992 = vadd.f32 %v830, %v991
          %v993 = vpop.f32.mrf.mxu0
          %v994 = vpop.f32.mrf.mxu0
          %v995 = vadd.f32 %v830, %v994
          %v996 = vpop.f32.mrf.mxu0
          %997 = vmatprep.mubr.bf16.mxu0 0
          %998 = vmatmul.mubr.bf16.gmra.mxu0 %v846
          %v999 = vpop.f32.mrf.mxu0
          %v1000 = vadd.f32 %v830, %v999
          %v1001 = vpop.f32.mrf.mxu0
          %v1002 = vpop.f32.mrf.mxu0
          %v1003 = vadd.f32 %v830, %v1002
          %v1004 = vpop.f32.mrf.mxu0
          %1005 = vmatprep.mubr.bf16.mxu0 0
          %1006 = vmatmul.mubr.bf16.gmra.mxu0 %v849
          %v1007 = vpop.f32.mrf.mxu0
          %v1008 = vadd.f32 %v830, %v1007
          %v1009 = vpop.f32.mrf.mxu0
          %v1010 = vpop.f32.mrf.mxu0
          %v1011 = vadd.f32 %v830, %v1010
          %v1012 = vpop.f32.mrf.mxu0
          %1013 = vmatprep.mubr.bf16.mxu0 0
          %1014 = vmatmul.mubr.bf16.gmra.mxu0 %v852
          %v1015 = vpop.f32.mrf.mxu0
          %v1016 = vadd.f32 %v830, %v1015
          %v1017 = vpop.f32.mrf.mxu0
          %v1018 = vpop.f32.mrf.mxu0
          %v1019 = vadd.f32 %v830, %v1018
          %v1020 = vpop.f32.mrf.mxu0
          %1021 = vmatprep.mubr.bf16.mxu0 0
          %1022 = vmatmul.mubr.bf16.gmra.mxu0 %v855
          %v1023 = vpop.f32.mrf.mxu0
          %v1024 = vadd.f32 %v830, %v1023
          %v1025 = vpop.f32.mrf.mxu0
          %v1026 = vpop.f32.mrf.mxu0
          %v1027 = vadd.f32 %v830, %v1026
          %v1028 = vpop.f32.mrf.mxu0
          %1029 = vmatprep.mubr.bf16.mxu0 0
          %1030 = vmatmul.mubr.bf16.gmra.mxu0 %v858
          %v1031 = vpop.f32.mrf.mxu0
          %v1032 = vadd.f32 %v830, %v1031
          %v1033 = vpop.f32.mrf.mxu0
          %v1034 = vpop.f32.mrf.mxu0
          %v1035 = vadd.f32 %v830, %v1034
          %v1036 = vpop.f32.mrf.mxu0
          %1037 = vmatprep.mubr.bf16.mxu0 0
          %1038 = vmatmul.mubr.bf16.gmra.mxu0 %v861
          %v1039 = vpop.f32.mrf.mxu0
          %v1040 = vadd.f32 %v830, %v1039
          %v1041 = vpop.f32.mrf.mxu0
          %v1042 = vpop.f32.mrf.mxu0
          %v1043 = vadd.f32 %v830, %v1042
          %v1044 = vpop.f32.mrf.mxu0
          %1045 = vmatprep.mubr.bf16.mxu0 0
          %1046 = vmatmul.mubr.bf16.gmra.mxu0 %v864
          %v1047 = vpop.f32.mrf.mxu0
          %v1048 = vadd.f32 %v830, %v1047
          %v1049 = vpop.f32.mrf.mxu0
          %v1050 = vpop.f32.mrf.mxu0
          %v1051 = vadd.f32 %v830, %v1050
          %v1052 = vpop.f32.mrf.mxu0
          %1053 = vmatprep.mubr.bf16.mxu0 0
          %1054 = vmatmul.mubr.bf16.gmra.mxu0 %v867
          %v1055 = vpop.f32.mrf.mxu0
          %v1056 = vadd.f32 %v830, %v1055
          %v1057 = vpop.f32.mrf.mxu0
          %v1058 = vpop.f32.mrf.mxu0
          %v1059 = vadd.f32 %v830, %v1058
          %v1060 = vpop.f32.mrf.mxu0
          %1061 = vmatprep.mubr.bf16.mxu0 0
          %1062 = vmatmul.mubr.bf16.gmra.mxu0 %v870
          %v1063 = vpop.f32.mrf.mxu0
          %v1064 = vadd.f32 %v830, %v1063
          %v1065 = vpop.f32.mrf.mxu0
          %v1066 = vpop.f32.mrf.mxu0
          %v1067 = vadd.f32 %v830, %v1066
          %v1068 = vpop.f32.mrf.mxu0
          %1069 = vmatprep.mubr.bf16.mxu0 0
          %1070 = vmatmul.mubr.bf16.gmra.mxu0 %v873
          %v1071 = vpop.f32.mrf.mxu0
          %v1072 = vadd.f32 %v830, %v1071
          %v1073 = vpop.f32.mrf.mxu0
          %v1074 = vpop.f32.mrf.mxu0
          %v1075 = vadd.f32 %v830, %v1074
          %v1076 = vpop.f32.mrf.mxu0
          %1077 = vmatprep.mubr.bf16.mxu0 0
          %1078 = vmatmul.mubr.bf16.gmra.mxu0 %v876
          %v1079 = vpop.f32.mrf.mxu0
          %v1080 = vadd.f32 %v830, %v1079
          %v1081 = vpop.f32.mrf.mxu0
          %v1082 = vpop.f32.mrf.mxu0
          %v1083 = vadd.f32 %v830, %v1082
          %v1084 = vpop.f32.mrf.mxu0
          %1085 = vmatprep.mubr.bf16.mxu0 0
          %1086 = vmatmul.mubr.bf16.gmra.mxu0 %v879
          %v1087 = vpop.f32.mrf.mxu0
          %v1088 = vadd.f32 %v830, %v1087
          %v1089 = vpop.f32.mrf.mxu0
          %v1090 = vpop.f32.mrf.mxu0
          %v1091 = vadd.f32 %v830, %v1090
          %v1092 = vpop.f32.mrf.mxu0
          %1093 = vmatprep.mubr.bf16.mxu0 0
          %1094 = vmatmul.mubr.bf16.gmra.mxu0 %v882
          %v1095 = vpop.f32.mrf.mxu0
          %v1096 = vadd.f32 %v830, %v1095
          %v1097 = vpop.f32.mrf.mxu0
          %v1098 = vpop.f32.mrf.mxu0
          %v1099 = vadd.f32 %v830, %v1098
          %v1100 = vpop.f32.mrf.mxu0
          %1101 = vmatprep.mubr.bf16.mxu0 0
          %1102 = vmatmul.mubr.bf16.gmra.mxu0 %v885
          %v1103 = vpop.f32.mrf.mxu0
          %v1104 = vadd.f32 %v830, %v1103
          %v1105 = vpop.f32.mrf.mxu0
          %v1106 = vpop.f32.mrf.mxu0
          %v1107 = vadd.f32 %v830, %v1106
          %v1108 = vpop.f32.mrf.mxu0
          %1109 = vmatprep.mubr.bf16.mxu0 0
          %1110 = vmatmul.mubr.bf16.gmra.mxu0 %v888
          %v1111 = vpop.f32.mrf.mxu0
          %v1112 = vadd.f32 %v830, %v1111
          %v1113 = vpop.f32.mrf.mxu0
          %v1114 = vpop.f32.mrf.mxu0
          %v1115 = vadd.f32 %v830, %v1114
          %v1116 = vpop.f32.mrf.mxu0
          %1117 = vmatprep.mubr.bf16.mxu0 0
          %1118 = vmatmul.mubr.bf16.gmra.mxu0 %v891
          %v1119 = vpop.f32.mrf.mxu0
          %v1120 = vadd.f32 %v830, %v1119
          %v1121 = vpop.f32.mrf.mxu0
          %v1122 = vpop.f32.mrf.mxu0
          %v1123 = vadd.f32 %v830, %v1122
          %v1124 = vpop.f32.mrf.mxu0
          %1125 = vmatprep.mubr.bf16.mxu0 0
          %1126 = vmatmul.mubr.bf16.gmra.mxu0 %v894
          %v1127 = vpop.f32.mrf.mxu0
          %v1128 = vadd.f32 %v830, %v1127
          %v1129 = vpop.f32.mrf.mxu0
          %v1130 = vpop.f32.mrf.mxu0
          %v1131 = vadd.f32 %v830, %v1130
          %v1132 = vpop.f32.mrf.mxu0
          %1133 = vmatprep.mubr.bf16.mxu0 0
          %1134 = vmatmul.mubr.bf16.gmra.mxu0 %v897
          %v1135 = vpop.f32.mrf.mxu0
          %v1136 = vadd.f32 %v830, %v1135
          %v1137 = vpop.f32.mrf.mxu0
          %v1138 = vpop.f32.mrf.mxu0
          %v1139 = vadd.f32 %v830, %v1138
          %v1140 = vpop.f32.mrf.mxu0
          %1141 = vmatprep.mubr.bf16.mxu0 0
          %1142 = vmatmul.mubr.bf16.gmra.mxu0 %v900
          %v1143 = vpop.f32.mrf.mxu0
          %v1144 = vadd.f32 %v830, %v1143
          %v1145 = vpop.f32.mrf.mxu0
          %v1146 = vpop.f32.mrf.mxu0
          %v1147 = vadd.f32 %v830, %v1146
          %v1148 = vpop.f32.mrf.mxu0
          %1149 = vmatprep.mubr.bf16.mxu0 0
          %1150 = vmatmul.mubr.bf16.gmra.mxu0 %v903
          %v1151 = vpop.f32.mrf.mxu0
          %v1152 = vadd.f32 %v830, %v1151
          %v1153 = vpop.f32.mrf.mxu0
          %v1154 = vpop.f32.mrf.mxu0
          %v1155 = vadd.f32 %v830, %v1154
          %v1156 = vpop.f32.mrf.mxu0
          %1157 = vmatprep.mubr.bf16.mxu0 0
          %1158 = vmatmul.mubr.bf16.gmra.mxu0 %v906
          %v1159 = vpop.f32.mrf.mxu0
          %v1160 = vadd.f32 %v830, %v1159
          %v1161 = vpop.f32.mrf.mxu0
          %v1162 = vpop.f32.mrf.mxu0
          %v1163 = vadd.f32 %v830, %v1162
          %v1164 = vpop.f32.mrf.mxu0
          %1165 = vmatprep.mubr.bf16.mxu0 0
          %1166 = vmatmul.mubr.bf16.gmra.mxu0 %v909
          %v1167 = vpop.f32.mrf.mxu0
          %v1168 = vadd.f32 %v830, %v1167
          %v1169 = vpop.f32.mrf.mxu0
          %v1170 = vpop.f32.mrf.mxu0
          %v1171 = vadd.f32 %v830, %v1170
          %v1172 = vpop.f32.mrf.mxu0
          %1173 = vmatprep.mubr.bf16.mxu0 0
          %1174 = vmatmul.mubr.bf16.gmra.mxu0 %v912
          %v1175 = vpop.f32.mrf.mxu0
          %v1176 = vadd.f32 %v830, %v1175
          %v1177 = vpop.f32.mrf.mxu0
          %v1178 = vpop.f32.mrf.mxu0
          %v1179 = vadd.f32 %v830, %v1178
          %v1180 = vpop.f32.mrf.mxu0
          %1181 = vmatprep.mubr.bf16.mxu0 0
          %1182 = vmatmul.mubr.bf16.gmra.mxu0 %v915
          %v1183 = vpop.f32.mrf.mxu0
          %v1184 = vadd.f32 %v830, %v1183
          %v1185 = vpop.f32.mrf.mxu0
          %v1186 = vpop.f32.mrf.mxu0
          %v1187 = vadd.f32 %v830, %v1186
          %v1188 = vpop.f32.mrf.mxu0
          %1189 = vmatprep.mubr.bf16.mxu0 0
          %1190 = vmatmul.mubr.bf16.gmra.mxu0 %v918
          %v1191 = vpop.f32.mrf.mxu0
          %v1192 = vadd.f32 %v830, %v1191
          %v1193 = vpop.f32.mrf.mxu0
          %v1194 = vpop.f32.mrf.mxu0
          %v1195 = vadd.f32 %v830, %v1194
          %v1196 = vpop.f32.mrf.mxu0
          %1197 = vmatprep.mubr.bf16.mxu0 0
          %1198 = vmatmul.mubr.bf16.gmra.mxu0 %v921
          %v1199 = vpop.f32.mrf.mxu0
          %v1200 = vadd.f32 %v830, %v1199
          %v1201 = vpop.f32.mrf.mxu0
          %v1202 = vpop.f32.mrf.mxu0
          %v1203 = vadd.f32 %v830, %v1202
          %v1204 = vpop.f32.mrf.mxu0
          %1205 = vmatprep.mubr.bf16.mxu0 0
          %1206 = vmatmul.mubr.bf16.gmra.mxu0 %v924
          %v1207 = vpop.f32.mrf.mxu0
          %v1208 = vadd.f32 %v830, %v1207
          %v1209 = vpop.f32.mrf.mxu0
          %v1210 = vpop.f32.mrf.mxu0
          %v1211 = vadd.f32 %v830, %v1210
          %v1212 = vpop.f32.mrf.mxu0
          %1213 = vmatprep.mubr.bf16.mxu0 0
          %1214 = vmatmul.mubr.bf16.gmra.mxu0 %v927
          %v1215 = vpop.f32.mrf.mxu0
          %v1216 = vadd.f32 %v830, %v1215
          %v1217 = vpop.f32.mrf.mxu0
          %v1218 = vpop.f32.mrf.mxu0
          %v1219 = vadd.f32 %v830, %v1218
          %v1220 = vpop.f32.mrf.mxu0
          %1221 = vdwg.mxu0
          %v1222 = vmax.f32 %v968, 0.0
          %v1223 = vmax.f32 %v971, 0.0
          %v1224 = vmax.f32 %v976, 0.0
          %v1225 = vmax.f32 %v979, 0.0
          %v1226 = vmax.f32 %v984, 0.0
          %v1227 = vmax.f32 %v987, 0.0
          %v1228 = vmax.f32 %v992, 0.0
          %v1229 = vmax.f32 %v995, 0.0
          %v1230 = vmax.f32 %v1000, 0.0
          %v1231 = vmax.f32 %v1003, 0.0
          %v1232 = vmax.f32 %v1008, 0.0
          %v1233 = vmax.f32 %v1011, 0.0
          %v1234 = vmax.f32 %v1016, 0.0
          %v1235 = vmax.f32 %v1019, 0.0
          %v1236 = vmax.f32 %v1024, 0.0
          %v1237 = vmax.f32 %v1027, 0.0
          %v1238 = vmax.f32 %v1032, 0.0
          %v1239 = vmax.f32 %v1035, 0.0
          %v1240 = vmax.f32 %v1040, 0.0
          %v1241 = vmax.f32 %v1043, 0.0
          %v1242 = vmax.f32 %v1048, 0.0
          %v1243 = vmax.f32 %v1051, 0.0
          %v1244 = vmax.f32 %v1056, 0.0
          %v1245 = vmax.f32 %v1059, 0.0
          %v1246 = vmax.f32 %v1064, 0.0
          %v1247 = vmax.f32 %v1067, 0.0
          %v1248 = vmax.f32 %v1072, 0.0
          %v1249 = vmax.f32 %v1075, 0.0
          %v1250 = vmax.f32 %v1080, 0.0
          %v1251 = vmax.f32 %v1083, 0.0
          %v1252 = vmax.f32 %v1088, 0.0
          %v1253 = vmax.f32 %v1091, 0.0
          %v1254 = vmax.f32 %v1096, 0.0
          %v1255 = vmax.f32 %v1099, 0.0
          %v1256 = vmax.f32 %v1104, 0.0
          %v1257 = vmax.f32 %v1107, 0.0
          %v1258 = vmax.f32 %v1112, 0.0
          %v1259 = vmax.f32 %v1115, 0.0
          %v1260 = vmax.f32 %v1120, 0.0
          %v1261 = vmax.f32 %v1123, 0.0
          %v1262 = vmax.f32 %v1128, 0.0
          %v1263 = vmax.f32 %v1131, 0.0
          %v1264 = vmax.f32 %v1136, 0.0
          %v1265 = vmax.f32 %v1139, 0.0
          %v1266 = vmax.f32 %v1144, 0.0
          %v1267 = vmax.f32 %v1147, 0.0
          %v1268 = vmax.f32 %v1152, 0.0
          %v1269 = vmax.f32 %v1155, 0.0
          %v1270 = vmax.f32 %v1160, 0.0
          %v1271 = vmax.f32 %v1163, 0.0
          %v1272 = vmax.f32 %v1168, 0.0
          %v1273 = vmax.f32 %v1171, 0.0
          %v1274 = vmax.f32 %v1176, 0.0
          %v1275 = vmax.f32 %v1179, 0.0
          %v1276 = vmax.f32 %v1184, 0.0
          %v1277 = vmax.f32 %v1187, 0.0
          %v1278 = vmax.f32 %v1192, 0.0
          %v1279 = vmax.f32 %v1195, 0.0
          %v1280 = vmax.f32 %v1200, 0.0
          %v1281 = vmax.f32 %v1203, 0.0
          %v1282 = vmax.f32 %v1208, 0.0
          %v1283 = vmax.f32 %v1211, 0.0
          %v1284 = vmax.f32 %v1216, 0.0
          %v1285 = vmax.f32 %v1219, 0.0
          %s1286 = smul.addr %s812, 4
          %s1287 = scalar_lea.vmem %s6, %s1286
          %v1288 = vld [vmem:[%s1287] sm:$0xf]
          %v1289 = vld [vmem:[%s1287 + $0x4] sm:$0xf]
          %v1290 = vld [vmem:[%s1287 + $0x8] sm:$0xf]
          %v1291 = vld [vmem:[%s1287 + $0xc] sm:$0xf]
          %s1292 = scalar_lea.vmem %s7, %s614
          %v1293 = vld [vmem:[%s1292] sm:$0x1]
          %v1294 = vpack.c.bf16 %v1223, %v1222
          %v1295 = vpack.c.bf16 %v1225, %v1224
          %v1296 = vpack.c.bf16 %v1227, %v1226
          %v1297 = vpack.c.bf16 %v1229, %v1228
          %v1298 = vpack.c.bf16 %v1231, %v1230
          %v1299 = vpack.c.bf16 %v1233, %v1232
          %v1300 = vpack.c.bf16 %v1235, %v1234
          %v1301 = vpack.c.bf16 %v1237, %v1236
          %v1302 = vpack.c.bf16 %v1239, %v1238
          %v1303 = vpack.c.bf16 %v1241, %v1240
          %v1304 = vpack.c.bf16 %v1243, %v1242
          %v1305 = vpack.c.bf16 %v1245, %v1244
          %v1306 = vpack.c.bf16 %v1247, %v1246
          %v1307 = vpack.c.bf16 %v1249, %v1248
          %v1308 = vpack.c.bf16 %v1251, %v1250
          %v1309 = vpack.c.bf16 %v1253, %v1252
          %v1310 = vpack.c.bf16 %v1255, %v1254
          %v1311 = vpack.c.bf16 %v1257, %v1256
          %v1312 = vpack.c.bf16 %v1259, %v1258
          %v1313 = vpack.c.bf16 %v1261, %v1260
          %v1314 = vpack.c.bf16 %v1263, %v1262
          %v1315 = vpack.c.bf16 %v1265, %v1264
          %v1316 = vpack.c.bf16 %v1267, %v1266
          %v1317 = vpack.c.bf16 %v1269, %v1268
          %v1318 = vpack.c.bf16 %v1271, %v1270
          %v1319 = vpack.c.bf16 %v1273, %v1272
          %v1320 = vpack.c.bf16 %v1275, %v1274
          %v1321 = vpack.c.bf16 %v1277, %v1276
          %v1322 = vpack.c.bf16 %v1279, %v1278
          %v1323 = vpack.c.bf16 %v1281, %v1280
          %v1324 = vpack.c.bf16 %v1283, %v1282
          %v1325 = vpack.c.bf16 %v1285, %v1284
          %v1327 = vlaneseq
          %v1328 = vshrl.u32 %v1327, 7
          %v1329 = vsub.s32 0, %v1328
          %v1330 = vrot.slane %v1293, %v1329
          %v1336 = vunpack.c.l.b16 %v1288
          %v1337 = vunpack.c.l.b16 %v1289
          %v1338 = vunpack.c.l.b16 %v1290
          %v1339 = vunpack.c.l.b16 %v1291
          %v1340 = vpack.c.b16 %v1337, %v1336
          %v1341 = vpack.c.b16 %v1339, %v1338
          %vm1344 = vcmask 261120
          %v1346 = vsel %vm1344, %v1294, 0
          %v1349 = vsel %vm1344, %v1295, 0
          %v1352 = vsel %vm1344, %v1296, 0
          %v1355 = vsel %vm1344, %v1297, 0
          %v1358 = vsel %vm1344, %v1298, 0
          %v1361 = vsel %vm1344, %v1299, 0
          %v1364 = vsel %vm1344, %v1300, 0
          %v1367 = vsel %vm1344, %v1301, 0
          %v1370 = vsel %vm1344, %v1302, 0
          %v1373 = vsel %vm1344, %v1303, 0
          %v1376 = vsel %vm1344, %v1304, 0
          %v1379 = vsel %vm1344, %v1305, 0
          %v1382 = vsel %vm1344, %v1306, 0
          %v1385 = vsel %vm1344, %v1307, 0
          %v1388 = vsel %vm1344, %v1308, 0
          %v1391 = vsel %vm1344, %v1309, 0
          %v1394 = vsel %vm1344, %v1310, 0
          %v1397 = vsel %vm1344, %v1311, 0
          %v1400 = vsel %vm1344, %v1312, 0
          %v1403 = vsel %vm1344, %v1313, 0
          %v1406 = vsel %vm1344, %v1314, 0
          %v1409 = vsel %vm1344, %v1315, 0
          %v1412 = vsel %vm1344, %v1316, 0
          %v1415 = vsel %vm1344, %v1317, 0
          %v1418 = vsel %vm1344, %v1318, 0
          %v1421 = vsel %vm1344, %v1319, 0
          %v1424 = vsel %vm1344, %v1320, 0
          %v1427 = vsel %vm1344, %v1321, 0
          %v1430 = vsel %vm1344, %v1322, 0
          %v1433 = vsel %vm1344, %v1323, 0
          %v1436 = vsel %vm1344, %v1324, 0
          %v1439 = vsel %vm1344, %v1325, 0
          %1441 = vmatprep.subr.bf16.mxu0 0
          %1442 = vmatpush1.bf16.msra.mxu0 0
          %1443 = vmatprep.subr.bf16.mxu0 0
          %1444 = vmatpush1.bf16.msra.mxu0 0
          %1445 = vmatprep.subr.bf16.mxu0 0
          %1446 = vmatpush1.bf16.msra.mxu0 0
          %1447 = vmatprep.subr.bf16.mxu0 0
          %1448 = vmatpush1.bf16.msra.mxu0 0
          %1449 = vmatprep.subr.bf16.mxu0 0
          %1450 = vmatpush1.bf16.msra.mxu0 0
          %1451 = vmatprep.subr.bf16.mxu0 0
          %1452 = vmatpush1.bf16.msra.mxu0 0
          %1453 = vmatprep.subr.bf16.mxu0 0
          %1454 = vmatpush1.bf16.msra.mxu0 %v1341
          %1455 = vmatprep.subr.bf16.mxu0 0
          %1456 = vmatpush1.bf16.msra.mxu0 %v1340
          %1457 = vmatprep.subr.bf16.mxu0 0
          %1458 = vmatpush2.bf16.msra.mxu0 0
          %1459 = vmatprep.subr.bf16.mxu0 0
          %1460 = vmatpush2.bf16.msra.mxu0 0
          %1461 = vmatprep.subr.bf16.mxu0 0
          %1462 = vmatpush2.bf16.msra.mxu0 0
          %1463 = vmatprep.subr.bf16.mxu0 0
          %1464 = vmatpush2.bf16.msra.mxu0 0
          %1465 = vmatprep.subr.bf16.mxu0 0
          %1466 = vmatpush2.bf16.msra.mxu0 0
          %1467 = vmatprep.subr.bf16.mxu0 0
          %1468 = vmatpush2.bf16.msra.mxu0 0
          %1469 = vmatprep.subr.bf16.mxu0 0
          %1470 = vmatpush2.bf16.msra.mxu0 0
          %1471 = vmatprep.subr.bf16.mxu0 0
          %1472 = vmatpush2.bf16.msra.mxu0 0
          %1473 = vmatprep.mubr.bf16.mxu0 0
          %1474 = vmatmul.mubr.bf16.gmra.mxu0 %v1346
          %v1475 = vpop.f32.mrf.mxu0
          %v1476 = vadd.f32 %v1330, %v1475
          %v1477 = vpop.f32.mrf.mxu0
          %v1478 = vpop.f32.mrf.mxu0
          %v1479 = vadd.f32 %v1330, %v1478
          %v1480 = vpop.f32.mrf.mxu0
          %1481 = vmatprep.mubr.bf16.mxu0 0
          %1482 = vmatmul.mubr.bf16.gmra.mxu0 %v1349
          %v1483 = vpop.f32.mrf.mxu0
          %v1484 = vadd.f32 %v1330, %v1483
          %v1485 = vpop.f32.mrf.mxu0
          %v1486 = vpop.f32.mrf.mxu0
          %v1487 = vadd.f32 %v1330, %v1486
          %v1488 = vpop.f32.mrf.mxu0
          %1489 = vmatprep.mubr.bf16.mxu0 0
          %1490 = vmatmul.mubr.bf16.gmra.mxu0 %v1352
          %v1491 = vpop.f32.mrf.mxu0
          %v1492 = vadd.f32 %v1330, %v1491
          %v1493 = vpop.f32.mrf.mxu0
          %v1494 = vpop.f32.mrf.mxu0
          %v1495 = vadd.f32 %v1330, %v1494
          %v1496 = vpop.f32.mrf.mxu0
          %1497 = vmatprep.mubr.bf16.mxu0 0
          %1498 = vmatmul.mubr.bf16.gmra.mxu0 %v1355
          %v1499 = vpop.f32.mrf.mxu0
          %v1500 = vadd.f32 %v1330, %v1499
          %v1501 = vpop.f32.mrf.mxu0
          %v1502 = vpop.f32.mrf.mxu0
          %v1503 = vadd.f32 %v1330, %v1502
          %v1504 = vpop.f32.mrf.mxu0
          %1505 = vmatprep.mubr.bf16.mxu0 0
          %1506 = vmatmul.mubr.bf16.gmra.mxu0 %v1358
          %v1507 = vpop.f32.mrf.mxu0
          %v1508 = vadd.f32 %v1330, %v1507
          %v1509 = vpop.f32.mrf.mxu0
          %v1510 = vpop.f32.mrf.mxu0
          %v1511 = vadd.f32 %v1330, %v1510
          %v1512 = vpop.f32.mrf.mxu0
          %1513 = vmatprep.mubr.bf16.mxu0 0
          %1514 = vmatmul.mubr.bf16.gmra.mxu0 %v1361
          %v1515 = vpop.f32.mrf.mxu0
          %v1516 = vadd.f32 %v1330, %v1515
          %v1517 = vpop.f32.mrf.mxu0
          %v1518 = vpop.f32.mrf.mxu0
          %v1519 = vadd.f32 %v1330, %v1518
          %v1520 = vpop.f32.mrf.mxu0
          %1521 = vmatprep.mubr.bf16.mxu0 0
          %1522 = vmatmul.mubr.bf16.gmra.mxu0 %v1364
          %v1523 = vpop.f32.mrf.mxu0
          %v1524 = vadd.f32 %v1330, %v1523
          %v1525 = vpop.f32.mrf.mxu0
          %v1526 = vpop.f32.mrf.mxu0
          %v1527 = vadd.f32 %v1330, %v1526
          %v1528 = vpop.f32.mrf.mxu0
          %1529 = vmatprep.mubr.bf16.mxu0 0
          %1530 = vmatmul.mubr.bf16.gmra.mxu0 %v1367
          %v1531 = vpop.f32.mrf.mxu0
          %v1532 = vadd.f32 %v1330, %v1531
          %v1533 = vpop.f32.mrf.mxu0
          %v1534 = vpop.f32.mrf.mxu0
          %v1535 = vadd.f32 %v1330, %v1534
          %v1536 = vpop.f32.mrf.mxu0
          %1537 = vmatprep.mubr.bf16.mxu0 0
          %1538 = vmatmul.mubr.bf16.gmra.mxu0 %v1370
          %v1539 = vpop.f32.mrf.mxu0
          %v1540 = vadd.f32 %v1330, %v1539
          %v1541 = vpop.f32.mrf.mxu0
          %v1542 = vpop.f32.mrf.mxu0
          %v1543 = vadd.f32 %v1330, %v1542
          %v1544 = vpop.f32.mrf.mxu0
          %1545 = vmatprep.mubr.bf16.mxu0 0
          %1546 = vmatmul.mubr.bf16.gmra.mxu0 %v1373
          %v1547 = vpop.f32.mrf.mxu0
          %v1548 = vadd.f32 %v1330, %v1547
          %v1549 = vpop.f32.mrf.mxu0
          %v1550 = vpop.f32.mrf.mxu0
          %v1551 = vadd.f32 %v1330, %v1550
          %v1552 = vpop.f32.mrf.mxu0
          %1553 = vmatprep.mubr.bf16.mxu0 0
          %1554 = vmatmul.mubr.bf16.gmra.mxu0 %v1376
          %v1555 = vpop.f32.mrf.mxu0
          %v1556 = vadd.f32 %v1330, %v1555
          %v1557 = vpop.f32.mrf.mxu0
          %v1558 = vpop.f32.mrf.mxu0
          %v1559 = vadd.f32 %v1330, %v1558
          %v1560 = vpop.f32.mrf.mxu0
          %1561 = vmatprep.mubr.bf16.mxu0 0
          %1562 = vmatmul.mubr.bf16.gmra.mxu0 %v1379
          %v1563 = vpop.f32.mrf.mxu0
          %v1564 = vadd.f32 %v1330, %v1563
          %v1565 = vpop.f32.mrf.mxu0
          %v1566 = vpop.f32.mrf.mxu0
          %v1567 = vadd.f32 %v1330, %v1566
          %v1568 = vpop.f32.mrf.mxu0
          %1569 = vmatprep.mubr.bf16.mxu0 0
          %1570 = vmatmul.mubr.bf16.gmra.mxu0 %v1382
          %v1571 = vpop.f32.mrf.mxu0
          %v1572 = vadd.f32 %v1330, %v1571
          %v1573 = vpop.f32.mrf.mxu0
          %v1574 = vpop.f32.mrf.mxu0
          %v1575 = vadd.f32 %v1330, %v1574
          %v1576 = vpop.f32.mrf.mxu0
          %1577 = vmatprep.mubr.bf16.mxu0 0
          %1578 = vmatmul.mubr.bf16.gmra.mxu0 %v1385
          %v1579 = vpop.f32.mrf.mxu0
          %v1580 = vadd.f32 %v1330, %v1579
          %v1581 = vpop.f32.mrf.mxu0
          %v1582 = vpop.f32.mrf.mxu0
          %v1583 = vadd.f32 %v1330, %v1582
          %v1584 = vpop.f32.mrf.mxu0
          %1585 = vmatprep.mubr.bf16.mxu0 0
          %1586 = vmatmul.mubr.bf16.gmra.mxu0 %v1388
          %v1587 = vpop.f32.mrf.mxu0
          %v1588 = vadd.f32 %v1330, %v1587
          %v1589 = vpop.f32.mrf.mxu0
          %v1590 = vpop.f32.mrf.mxu0
          %v1591 = vadd.f32 %v1330, %v1590
          %v1592 = vpop.f32.mrf.mxu0
          %1593 = vmatprep.mubr.bf16.mxu0 0
          %1594 = vmatmul.mubr.bf16.gmra.mxu0 %v1391
          %v1595 = vpop.f32.mrf.mxu0
          %v1596 = vadd.f32 %v1330, %v1595
          %v1597 = vpop.f32.mrf.mxu0
          %v1598 = vpop.f32.mrf.mxu0
          %v1599 = vadd.f32 %v1330, %v1598
          %v1600 = vpop.f32.mrf.mxu0
          %1601 = vmatprep.mubr.bf16.mxu0 0
          %1602 = vmatmul.mubr.bf16.gmra.mxu0 %v1394
          %v1603 = vpop.f32.mrf.mxu0
          %v1604 = vadd.f32 %v1330, %v1603
          %v1605 = vpop.f32.mrf.mxu0
          %v1606 = vpop.f32.mrf.mxu0
          %v1607 = vadd.f32 %v1330, %v1606
          %v1608 = vpop.f32.mrf.mxu0
          %1609 = vmatprep.mubr.bf16.mxu0 0
          %1610 = vmatmul.mubr.bf16.gmra.mxu0 %v1397
          %v1611 = vpop.f32.mrf.mxu0
          %v1612 = vadd.f32 %v1330, %v1611
          %v1613 = vpop.f32.mrf.mxu0
          %v1614 = vpop.f32.mrf.mxu0
          %v1615 = vadd.f32 %v1330, %v1614
          %v1616 = vpop.f32.mrf.mxu0
          %1617 = vmatprep.mubr.bf16.mxu0 0
          %1618 = vmatmul.mubr.bf16.gmra.mxu0 %v1400
          %v1619 = vpop.f32.mrf.mxu0
          %v1620 = vadd.f32 %v1330, %v1619
          %v1621 = vpop.f32.mrf.mxu0
          %v1622 = vpop.f32.mrf.mxu0
          %v1623 = vadd.f32 %v1330, %v1622
          %v1624 = vpop.f32.mrf.mxu0
          %1625 = vmatprep.mubr.bf16.mxu0 0
          %1626 = vmatmul.mubr.bf16.gmra.mxu0 %v1403
          %v1627 = vpop.f32.mrf.mxu0
          %v1628 = vadd.f32 %v1330, %v1627
          %v1629 = vpop.f32.mrf.mxu0
          %v1630 = vpop.f32.mrf.mxu0
          %v1631 = vadd.f32 %v1330, %v1630
          %v1632 = vpop.f32.mrf.mxu0
          %1633 = vmatprep.mubr.bf16.mxu0 0
          %1634 = vmatmul.mubr.bf16.gmra.mxu0 %v1406
          %v1635 = vpop.f32.mrf.mxu0
          %v1636 = vadd.f32 %v1330, %v1635
          %v1637 = vpop.f32.mrf.mxu0
          %v1638 = vpop.f32.mrf.mxu0
          %v1639 = vadd.f32 %v1330, %v1638
          %v1640 = vpop.f32.mrf.mxu0
          %1641 = vmatprep.mubr.bf16.mxu0 0
          %1642 = vmatmul.mubr.bf16.gmra.mxu0 %v1409
          %v1643 = vpop.f32.mrf.mxu0
          %v1644 = vadd.f32 %v1330, %v1643
          %v1645 = vpop.f32.mrf.mxu0
          %v1646 = vpop.f32.mrf.mxu0
          %v1647 = vadd.f32 %v1330, %v1646
          %v1648 = vpop.f32.mrf.mxu0
          %1649 = vmatprep.mubr.bf16.mxu0 0
          %1650 = vmatmul.mubr.bf16.gmra.mxu0 %v1412
          %v1651 = vpop.f32.mrf.mxu0
          %v1652 = vadd.f32 %v1330, %v1651
          %v1653 = vpop.f32.mrf.mxu0
          %v1654 = vpop.f32.mrf.mxu0
          %v1655 = vadd.f32 %v1330, %v1654
          %v1656 = vpop.f32.mrf.mxu0
          %1657 = vmatprep.mubr.bf16.mxu0 0
          %1658 = vmatmul.mubr.bf16.gmra.mxu0 %v1415
          %v1659 = vpop.f32.mrf.mxu0
          %v1660 = vadd.f32 %v1330, %v1659
          %v1661 = vpop.f32.mrf.mxu0
          %v1662 = vpop.f32.mrf.mxu0
          %v1663 = vadd.f32 %v1330, %v1662
          %v1664 = vpop.f32.mrf.mxu0
          %1665 = vmatprep.mubr.bf16.mxu0 0
          %1666 = vmatmul.mubr.bf16.gmra.mxu0 %v1418
          %v1667 = vpop.f32.mrf.mxu0
          %v1668 = vadd.f32 %v1330, %v1667
          %v1669 = vpop.f32.mrf.mxu0
          %v1670 = vpop.f32.mrf.mxu0
          %v1671 = vadd.f32 %v1330, %v1670
          %v1672 = vpop.f32.mrf.mxu0
          %1673 = vmatprep.mubr.bf16.mxu0 0
          %1674 = vmatmul.mubr.bf16.gmra.mxu0 %v1421
          %v1675 = vpop.f32.mrf.mxu0
          %v1676 = vadd.f32 %v1330, %v1675
          %v1677 = vpop.f32.mrf.mxu0
          %v1678 = vpop.f32.mrf.mxu0
          %v1679 = vadd.f32 %v1330, %v1678
          %v1680 = vpop.f32.mrf.mxu0
          %1681 = vmatprep.mubr.bf16.mxu0 0
          %1682 = vmatmul.mubr.bf16.gmra.mxu0 %v1424
          %v1683 = vpop.f32.mrf.mxu0
          %v1684 = vadd.f32 %v1330, %v1683
          %v1685 = vpop.f32.mrf.mxu0
          %v1686 = vpop.f32.mrf.mxu0
          %v1687 = vadd.f32 %v1330, %v1686
          %v1688 = vpop.f32.mrf.mxu0
          %1689 = vmatprep.mubr.bf16.mxu0 0
          %1690 = vmatmul.mubr.bf16.gmra.mxu0 %v1427
          %v1691 = vpop.f32.mrf.mxu0
          %v1692 = vadd.f32 %v1330, %v1691
          %v1693 = vpop.f32.mrf.mxu0
          %v1694 = vpop.f32.mrf.mxu0
          %v1695 = vadd.f32 %v1330, %v1694
          %v1696 = vpop.f32.mrf.mxu0
          %1697 = vmatprep.mubr.bf16.mxu0 0
          %1698 = vmatmul.mubr.bf16.gmra.mxu0 %v1430
          %v1699 = vpop.f32.mrf.mxu0
          %v1700 = vadd.f32 %v1330, %v1699
          %v1701 = vpop.f32.mrf.mxu0
          %v1702 = vpop.f32.mrf.mxu0
          %v1703 = vadd.f32 %v1330, %v1702
          %v1704 = vpop.f32.mrf.mxu0
          %1705 = vmatprep.mubr.bf16.mxu0 0
          %1706 = vmatmul.mubr.bf16.gmra.mxu0 %v1433
          %v1707 = vpop.f32.mrf.mxu0
          %v1708 = vadd.f32 %v1330, %v1707
          %v1709 = vpop.f32.mrf.mxu0
          %v1710 = vpop.f32.mrf.mxu0
          %v1711 = vadd.f32 %v1330, %v1710
          %v1712 = vpop.f32.mrf.mxu0
          %1713 = vmatprep.mubr.bf16.mxu0 0
          %1714 = vmatmul.mubr.bf16.gmra.mxu0 %v1436
          %v1715 = vpop.f32.mrf.mxu0
          %v1716 = vadd.f32 %v1330, %v1715
          %v1717 = vpop.f32.mrf.mxu0
          %v1718 = vpop.f32.mrf.mxu0
          %v1719 = vadd.f32 %v1330, %v1718
          %v1720 = vpop.f32.mrf.mxu0
          %1721 = vmatprep.mubr.bf16.mxu0 0
          %1722 = vmatmul.mubr.bf16.gmra.mxu0 %v1439
          %v1723 = vpop.f32.mrf.mxu0
          %v1724 = vadd.f32 %v1330, %v1723
          %v1725 = vpop.f32.mrf.mxu0
          %v1726 = vpop.f32.mrf.mxu0
          %v1727 = vadd.f32 %v1330, %v1726
          %v1728 = vpop.f32.mrf.mxu0
          %1729 = vdwg.mxu0
          %v1730 = vmax.f32 %v1476, 0.0
          %v1731 = vmax.f32 %v1479, 0.0
          %v1732 = vmax.f32 %v1484, 0.0
          %v1733 = vmax.f32 %v1487, 0.0
          %v1734 = vmax.f32 %v1492, 0.0
          %v1735 = vmax.f32 %v1495, 0.0
          %v1736 = vmax.f32 %v1500, 0.0
          %v1737 = vmax.f32 %v1503, 0.0
          %v1738 = vmax.f32 %v1508, 0.0
          %v1739 = vmax.f32 %v1511, 0.0
          %v1740 = vmax.f32 %v1516, 0.0
          %v1741 = vmax.f32 %v1519, 0.0
          %v1742 = vmax.f32 %v1524, 0.0
          %v1743 = vmax.f32 %v1527, 0.0
          %v1744 = vmax.f32 %v1532, 0.0
          %v1745 = vmax.f32 %v1535, 0.0
          %v1746 = vmax.f32 %v1540, 0.0
          %v1747 = vmax.f32 %v1543, 0.0
          %v1748 = vmax.f32 %v1548, 0.0
          %v1749 = vmax.f32 %v1551, 0.0
          %v1750 = vmax.f32 %v1556, 0.0
          %v1751 = vmax.f32 %v1559, 0.0
          %v1752 = vmax.f32 %v1564, 0.0
          %v1753 = vmax.f32 %v1567, 0.0
          %v1754 = vmax.f32 %v1572, 0.0
          %v1755 = vmax.f32 %v1575, 0.0
          %v1756 = vmax.f32 %v1580, 0.0
          %v1757 = vmax.f32 %v1583, 0.0
          %v1758 = vmax.f32 %v1588, 0.0
          %v1759 = vmax.f32 %v1591, 0.0
          %v1760 = vmax.f32 %v1596, 0.0
          %v1761 = vmax.f32 %v1599, 0.0
          %v1762 = vmax.f32 %v1604, 0.0
          %v1763 = vmax.f32 %v1607, 0.0
          %v1764 = vmax.f32 %v1612, 0.0
          %v1765 = vmax.f32 %v1615, 0.0
          %v1766 = vmax.f32 %v1620, 0.0
          %v1767 = vmax.f32 %v1623, 0.0
          %v1768 = vmax.f32 %v1628, 0.0
          %v1769 = vmax.f32 %v1631, 0.0
          %v1770 = vmax.f32 %v1636, 0.0
          %v1771 = vmax.f32 %v1639, 0.0
          %v1772 = vmax.f32 %v1644, 0.0
          %v1773 = vmax.f32 %v1647, 0.0
          %v1774 = vmax.f32 %v1652, 0.0
          %v1775 = vmax.f32 %v1655, 0.0
          %v1776 = vmax.f32 %v1660, 0.0
          %v1777 = vmax.f32 %v1663, 0.0
          %v1778 = vmax.f32 %v1668, 0.0
          %v1779 = vmax.f32 %v1671, 0.0
          %v1780 = vmax.f32 %v1676, 0.0
          %v1781 = vmax.f32 %v1679, 0.0
          %v1782 = vmax.f32 %v1684, 0.0
          %v1783 = vmax.f32 %v1687, 0.0
          %v1784 = vmax.f32 %v1692, 0.0
          %v1785 = vmax.f32 %v1695, 0.0
          %v1786 = vmax.f32 %v1700, 0.0
          %v1787 = vmax.f32 %v1703, 0.0
          %v1788 = vmax.f32 %v1708, 0.0
          %v1789 = vmax.f32 %v1711, 0.0
          %v1790 = vmax.f32 %v1716, 0.0
          %v1791 = vmax.f32 %v1719, 0.0
          %v1792 = vmax.f32 %v1724, 0.0
          %v1793 = vmax.f32 %v1727, 0.0
          %v1794 = vpack.c.bf16 %v1731, %v1730
          %v1795 = vpack.c.bf16 %v1733, %v1732
          %v1796 = vpack.c.bf16 %v1735, %v1734
          %v1797 = vpack.c.bf16 %v1737, %v1736
          %v1798 = vpack.c.bf16 %v1739, %v1738
          %v1799 = vpack.c.bf16 %v1741, %v1740
          %v1800 = vpack.c.bf16 %v1743, %v1742
          %v1801 = vpack.c.bf16 %v1745, %v1744
          %v1802 = vpack.c.bf16 %v1747, %v1746
          %v1803 = vpack.c.bf16 %v1749, %v1748
          %v1804 = vpack.c.bf16 %v1751, %v1750
          %v1805 = vpack.c.bf16 %v1753, %v1752
          %v1806 = vpack.c.bf16 %v1755, %v1754
          %v1807 = vpack.c.bf16 %v1757, %v1756
          %v1808 = vpack.c.bf16 %v1759, %v1758
          %v1809 = vpack.c.bf16 %v1761, %v1760
          %v1810 = vpack.c.bf16 %v1763, %v1762
          %v1811 = vpack.c.bf16 %v1765, %v1764
          %v1812 = vpack.c.bf16 %v1767, %v1766
          %v1813 = vpack.c.bf16 %v1769, %v1768
          %v1814 = vpack.c.bf16 %v1771, %v1770
          %v1815 = vpack.c.bf16 %v1773, %v1772
          %v1816 = vpack.c.bf16 %v1775, %v1774
          %v1817 = vpack.c.bf16 %v1777, %v1776
          %v1818 = vpack.c.bf16 %v1779, %v1778
          %v1819 = vpack.c.bf16 %v1781, %v1780
          %v1820 = vpack.c.bf16 %v1783, %v1782
          %v1821 = vpack.c.bf16 %v1785, %v1784
          %v1822 = vpack.c.bf16 %v1787, %v1786
          %v1823 = vpack.c.bf16 %v1789, %v1788
          %v1824 = vpack.c.bf16 %v1791, %v1790
          %v1825 = vpack.c.bf16 %v1793, %v1792
          %v1827 = vlaneseq
          %v1828 = vshrl.u32 %v1827, 7
          %v1829 = vsub.s32 0, %v1828
          %v1830 = vrot.slane %v820, %v1829
          %v1836 = vunpack.c.l.b16 %v815
          %v1837 = vunpack.c.l.b16 %v816
          %v1838 = vunpack.c.l.b16 %v817
          %v1839 = vunpack.c.l.b16 %v818
          %v1840 = vpack.c.b16 %v1837, %v1836
          %v1841 = vpack.c.b16 %v1839, %v1838
          %v1845 = vsel %vm1344, %v1794, 0
          %v1848 = vsel %vm1344, %v1795, 0
          %v1851 = vsel %vm1344, %v1796, 0
          %v1854 = vsel %vm1344, %v1797, 0
          %v1857 = vsel %vm1344, %v1798, 0
          %v1860 = vsel %vm1344, %v1799, 0
          %v1863 = vsel %vm1344, %v1800, 0
          %v1866 = vsel %vm1344, %v1801, 0
          %v1869 = vsel %vm1344, %v1802, 0
          %v1872 = vsel %vm1344, %v1803, 0
          %v1875 = vsel %vm1344, %v1804, 0
          %v1878 = vsel %vm1344, %v1805, 0
          %v1881 = vsel %vm1344, %v1806, 0
          %v1884 = vsel %vm1344, %v1807, 0
          %v1887 = vsel %vm1344, %v1808, 0
          %v1890 = vsel %vm1344, %v1809, 0
          %v1893 = vsel %vm1344, %v1810, 0
          %v1896 = vsel %vm1344, %v1811, 0
          %v1899 = vsel %vm1344, %v1812, 0
          %v1902 = vsel %vm1344, %v1813, 0
          %v1905 = vsel %vm1344, %v1814, 0
          %v1908 = vsel %vm1344, %v1815, 0
          %v1911 = vsel %vm1344, %v1816, 0
          %v1914 = vsel %vm1344, %v1817, 0
          %v1917 = vsel %vm1344, %v1818, 0
          %v1920 = vsel %vm1344, %v1819, 0
          %v1923 = vsel %vm1344, %v1820, 0
          %v1926 = vsel %vm1344, %v1821, 0
          %v1929 = vsel %vm1344, %v1822, 0
          %v1932 = vsel %vm1344, %v1823, 0
          %v1935 = vsel %vm1344, %v1824, 0
          %v1938 = vsel %vm1344, %v1825, 0
          %1940 = vmatprep.subr.bf16.mxu0 0
          %1941 = vmatpush1.bf16.msra.mxu0 0
          %1942 = vmatprep.subr.bf16.mxu0 0
          %1943 = vmatpush1.bf16.msra.mxu0 0
          %1944 = vmatprep.subr.bf16.mxu0 0
          %1945 = vmatpush1.bf16.msra.mxu0 0
          %1946 = vmatprep.subr.bf16.mxu0 0
          %1947 = vmatpush1.bf16.msra.mxu0 0
          %1948 = vmatprep.subr.bf16.mxu0 0
          %1949 = vmatpush1.bf16.msra.mxu0 0
          %1950 = vmatprep.subr.bf16.mxu0 0
          %1951 = vmatpush1.bf16.msra.mxu0 0
          %1952 = vmatprep.subr.bf16.mxu0 0
          %1953 = vmatpush1.bf16.msra.mxu0 %v1841
          %1954 = vmatprep.subr.bf16.mxu0 0
          %1955 = vmatpush1.bf16.msra.mxu0 %v1840
          %1956 = vmatprep.subr.bf16.mxu0 0
          %1957 = vmatpush2.bf16.msra.mxu0 0
          %1958 = vmatprep.subr.bf16.mxu0 0
          %1959 = vmatpush2.bf16.msra.mxu0 0
          %1960 = vmatprep.subr.bf16.mxu0 0
          %1961 = vmatpush2.bf16.msra.mxu0 0
          %1962 = vmatprep.subr.bf16.mxu0 0
          %1963 = vmatpush2.bf16.msra.mxu0 0
          %1964 = vmatprep.subr.bf16.mxu0 0
          %1965 = vmatpush2.bf16.msra.mxu0 0
          %1966 = vmatprep.subr.bf16.mxu0 0
          %1967 = vmatpush2.bf16.msra.mxu0 0
          %1968 = vmatprep.subr.bf16.mxu0 0
          %1969 = vmatpush2.bf16.msra.mxu0 0
          %1970 = vmatprep.subr.bf16.mxu0 0
          %1971 = vmatpush2.bf16.msra.mxu0 0
          %1972 = vmatprep.mubr.bf16.mxu0 0
          %1973 = vmatmul.mubr.bf16.gmra.mxu0 %v1845
          %v1974 = vpop.f32.mrf.mxu0
          %v1975 = vadd.f32 %v1830, %v1974
          %v1976 = vpop.f32.mrf.mxu0
          %v1977 = vpop.f32.mrf.mxu0
          %v1978 = vadd.f32 %v1830, %v1977
          %v1979 = vpop.f32.mrf.mxu0
          %1980 = vmatprep.mubr.bf16.mxu0 0
          %1981 = vmatmul.mubr.bf16.gmra.mxu0 %v1848
          %v1982 = vpop.f32.mrf.mxu0
          %v1983 = vadd.f32 %v1830, %v1982
          %v1984 = vpop.f32.mrf.mxu0
          %v1985 = vpop.f32.mrf.mxu0
          %v1986 = vadd.f32 %v1830, %v1985
          %v1987 = vpop.f32.mrf.mxu0
          %1988 = vmatprep.mubr.bf16.mxu0 0
          %1989 = vmatmul.mubr.bf16.gmra.mxu0 %v1851
          %v1990 = vpop.f32.mrf.mxu0
          %v1991 = vadd.f32 %v1830, %v1990
          %v1992 = vpop.f32.mrf.mxu0
          %v1993 = vpop.f32.mrf.mxu0
          %v1994 = vadd.f32 %v1830, %v1993
          %v1995 = vpop.f32.mrf.mxu0
          %1996 = vmatprep.mubr.bf16.mxu0 0
          %1997 = vmatmul.mubr.bf16.gmra.mxu0 %v1854
          %v1998 = vpop.f32.mrf.mxu0
          %v1999 = vadd.f32 %v1830, %v1998
          %v2000 = vpop.f32.mrf.mxu0
          %v2001 = vpop.f32.mrf.mxu0
          %v2002 = vadd.f32 %v1830, %v2001
          %v2003 = vpop.f32.mrf.mxu0
          %2004 = vmatprep.mubr.bf16.mxu0 0
          %2005 = vmatmul.mubr.bf16.gmra.mxu0 %v1857
          %v2006 = vpop.f32.mrf.mxu0
          %v2007 = vadd.f32 %v1830, %v2006
          %v2008 = vpop.f32.mrf.mxu0
          %v2009 = vpop.f32.mrf.mxu0
          %v2010 = vadd.f32 %v1830, %v2009
          %v2011 = vpop.f32.mrf.mxu0
          %2012 = vmatprep.mubr.bf16.mxu0 0
          %2013 = vmatmul.mubr.bf16.gmra.mxu0 %v1860
          %v2014 = vpop.f32.mrf.mxu0
          %v2015 = vadd.f32 %v1830, %v2014
          %v2016 = vpop.f32.mrf.mxu0
          %v2017 = vpop.f32.mrf.mxu0
          %v2018 = vadd.f32 %v1830, %v2017
          %v2019 = vpop.f32.mrf.mxu0
          %2020 = vmatprep.mubr.bf16.mxu0 0
          %2021 = vmatmul.mubr.bf16.gmra.mxu0 %v1863
          %v2022 = vpop.f32.mrf.mxu0
          %v2023 = vadd.f32 %v1830, %v2022
          %v2024 = vpop.f32.mrf.mxu0
          %v2025 = vpop.f32.mrf.mxu0
          %v2026 = vadd.f32 %v1830, %v2025
          %v2027 = vpop.f32.mrf.mxu0
          %2028 = vmatprep.mubr.bf16.mxu0 0
          %2029 = vmatmul.mubr.bf16.gmra.mxu0 %v1866
          %v2030 = vpop.f32.mrf.mxu0
          %v2031 = vadd.f32 %v1830, %v2030
          %v2032 = vpop.f32.mrf.mxu0
          %v2033 = vpop.f32.mrf.mxu0
          %v2034 = vadd.f32 %v1830, %v2033
          %v2035 = vpop.f32.mrf.mxu0
          %2036 = vmatprep.mubr.bf16.mxu0 0
          %2037 = vmatmul.mubr.bf16.gmra.mxu0 %v1869
          %v2038 = vpop.f32.mrf.mxu0
          %v2039 = vadd.f32 %v1830, %v2038
          %v2040 = vpop.f32.mrf.mxu0
          %v2041 = vpop.f32.mrf.mxu0
          %v2042 = vadd.f32 %v1830, %v2041
          %v2043 = vpop.f32.mrf.mxu0
          %2044 = vmatprep.mubr.bf16.mxu0 0
          %2045 = vmatmul.mubr.bf16.gmra.mxu0 %v1872
          %v2046 = vpop.f32.mrf.mxu0
          %v2047 = vadd.f32 %v1830, %v2046
          %v2048 = vpop.f32.mrf.mxu0
          %v2049 = vpop.f32.mrf.mxu0
          %v2050 = vadd.f32 %v1830, %v2049
          %v2051 = vpop.f32.mrf.mxu0
          %2052 = vmatprep.mubr.bf16.mxu0 0
          %2053 = vmatmul.mubr.bf16.gmra.mxu0 %v1875
          %v2054 = vpop.f32.mrf.mxu0
          %v2055 = vadd.f32 %v1830, %v2054
          %v2056 = vpop.f32.mrf.mxu0
          %v2057 = vpop.f32.mrf.mxu0
          %v2058 = vadd.f32 %v1830, %v2057
          %v2059 = vpop.f32.mrf.mxu0
          %2060 = vmatprep.mubr.bf16.mxu0 0
          %2061 = vmatmul.mubr.bf16.gmra.mxu0 %v1878
          %v2062 = vpop.f32.mrf.mxu0
          %v2063 = vadd.f32 %v1830, %v2062
          %v2064 = vpop.f32.mrf.mxu0
          %v2065 = vpop.f32.mrf.mxu0
          %v2066 = vadd.f32 %v1830, %v2065
          %v2067 = vpop.f32.mrf.mxu0
          %2068 = vmatprep.mubr.bf16.mxu0 0
          %2069 = vmatmul.mubr.bf16.gmra.mxu0 %v1881
          %v2070 = vpop.f32.mrf.mxu0
          %v2071 = vadd.f32 %v1830, %v2070
          %v2072 = vpop.f32.mrf.mxu0
          %v2073 = vpop.f32.mrf.mxu0
          %v2074 = vadd.f32 %v1830, %v2073
          %v2075 = vpop.f32.mrf.mxu0
          %2076 = vmatprep.mubr.bf16.mxu0 0
          %2077 = vmatmul.mubr.bf16.gmra.mxu0 %v1884
          %v2078 = vpop.f32.mrf.mxu0
          %v2079 = vadd.f32 %v1830, %v2078
          %v2080 = vpop.f32.mrf.mxu0
          %v2081 = vpop.f32.mrf.mxu0
          %v2082 = vadd.f32 %v1830, %v2081
          %v2083 = vpop.f32.mrf.mxu0
          %2084 = vmatprep.mubr.bf16.mxu0 0
          %2085 = vmatmul.mubr.bf16.gmra.mxu0 %v1887
          %v2086 = vpop.f32.mrf.mxu0
          %v2087 = vadd.f32 %v1830, %v2086
          %v2088 = vpop.f32.mrf.mxu0
          %v2089 = vpop.f32.mrf.mxu0
          %v2090 = vadd.f32 %v1830, %v2089
          %v2091 = vpop.f32.mrf.mxu0
          %2092 = vmatprep.mubr.bf16.mxu0 0
          %2093 = vmatmul.mubr.bf16.gmra.mxu0 %v1890
          %v2094 = vpop.f32.mrf.mxu0
          %v2095 = vadd.f32 %v1830, %v2094
          %v2096 = vpop.f32.mrf.mxu0
          %v2097 = vpop.f32.mrf.mxu0
          %v2098 = vadd.f32 %v1830, %v2097
          %v2099 = vpop.f32.mrf.mxu0
          %2100 = vmatprep.mubr.bf16.mxu0 0
          %2101 = vmatmul.mubr.bf16.gmra.mxu0 %v1893
          %v2102 = vpop.f32.mrf.mxu0
          %v2103 = vadd.f32 %v1830, %v2102
          %v2104 = vpop.f32.mrf.mxu0
          %v2105 = vpop.f32.mrf.mxu0
          %v2106 = vadd.f32 %v1830, %v2105
          %v2107 = vpop.f32.mrf.mxu0
          %2108 = vmatprep.mubr.bf16.mxu0 0
          %2109 = vmatmul.mubr.bf16.gmra.mxu0 %v1896
          %v2110 = vpop.f32.mrf.mxu0
          %v2111 = vadd.f32 %v1830, %v2110
          %v2112 = vpop.f32.mrf.mxu0
          %v2113 = vpop.f32.mrf.mxu0
          %v2114 = vadd.f32 %v1830, %v2113
          %v2115 = vpop.f32.mrf.mxu0
          %2116 = vmatprep.mubr.bf16.mxu0 0
          %2117 = vmatmul.mubr.bf16.gmra.mxu0 %v1899
          %v2118 = vpop.f32.mrf.mxu0
          %v2119 = vadd.f32 %v1830, %v2118
          %v2120 = vpop.f32.mrf.mxu0
          %v2121 = vpop.f32.mrf.mxu0
          %v2122 = vadd.f32 %v1830, %v2121
          %v2123 = vpop.f32.mrf.mxu0
          %2124 = vmatprep.mubr.bf16.mxu0 0
          %2125 = vmatmul.mubr.bf16.gmra.mxu0 %v1902
          %v2126 = vpop.f32.mrf.mxu0
          %v2127 = vadd.f32 %v1830, %v2126
          %v2128 = vpop.f32.mrf.mxu0
          %v2129 = vpop.f32.mrf.mxu0
          %v2130 = vadd.f32 %v1830, %v2129
          %v2131 = vpop.f32.mrf.mxu0
          %2132 = vmatprep.mubr.bf16.mxu0 0
          %2133 = vmatmul.mubr.bf16.gmra.mxu0 %v1905
          %v2134 = vpop.f32.mrf.mxu0
          %v2135 = vadd.f32 %v1830, %v2134
          %v2136 = vpop.f32.mrf.mxu0
          %v2137 = vpop.f32.mrf.mxu0
          %v2138 = vadd.f32 %v1830, %v2137
          %v2139 = vpop.f32.mrf.mxu0
          %2140 = vmatprep.mubr.bf16.mxu0 0
          %2141 = vmatmul.mubr.bf16.gmra.mxu0 %v1908
          %v2142 = vpop.f32.mrf.mxu0
          %v2143 = vadd.f32 %v1830, %v2142
          %v2144 = vpop.f32.mrf.mxu0
          %v2145 = vpop.f32.mrf.mxu0
          %v2146 = vadd.f32 %v1830, %v2145
          %v2147 = vpop.f32.mrf.mxu0
          %2148 = vmatprep.mubr.bf16.mxu0 0
          %2149 = vmatmul.mubr.bf16.gmra.mxu0 %v1911
          %v2150 = vpop.f32.mrf.mxu0
          %v2151 = vadd.f32 %v1830, %v2150
          %v2152 = vpop.f32.mrf.mxu0
          %v2153 = vpop.f32.mrf.mxu0
          %v2154 = vadd.f32 %v1830, %v2153
          %v2155 = vpop.f32.mrf.mxu0
          %2156 = vmatprep.mubr.bf16.mxu0 0
          %2157 = vmatmul.mubr.bf16.gmra.mxu0 %v1914
          %v2158 = vpop.f32.mrf.mxu0
          %v2159 = vadd.f32 %v1830, %v2158
          %v2160 = vpop.f32.mrf.mxu0
          %v2161 = vpop.f32.mrf.mxu0
          %v2162 = vadd.f32 %v1830, %v2161
          %v2163 = vpop.f32.mrf.mxu0
          %2164 = vmatprep.mubr.bf16.mxu0 0
          %2165 = vmatmul.mubr.bf16.gmra.mxu0 %v1917
          %v2166 = vpop.f32.mrf.mxu0
          %v2167 = vadd.f32 %v1830, %v2166
          %v2168 = vpop.f32.mrf.mxu0
          %v2169 = vpop.f32.mrf.mxu0
          %v2170 = vadd.f32 %v1830, %v2169
          %v2171 = vpop.f32.mrf.mxu0
          %2172 = vmatprep.mubr.bf16.mxu0 0
          %2173 = vmatmul.mubr.bf16.gmra.mxu0 %v1920
          %v2174 = vpop.f32.mrf.mxu0
          %v2175 = vadd.f32 %v1830, %v2174
          %v2176 = vpop.f32.mrf.mxu0
          %v2177 = vpop.f32.mrf.mxu0
          %v2178 = vadd.f32 %v1830, %v2177
          %v2179 = vpop.f32.mrf.mxu0
          %2180 = vmatprep.mubr.bf16.mxu0 0
          %2181 = vmatmul.mubr.bf16.gmra.mxu0 %v1923
          %v2182 = vpop.f32.mrf.mxu0
          %v2183 = vadd.f32 %v1830, %v2182
          %v2184 = vpop.f32.mrf.mxu0
          %v2185 = vpop.f32.mrf.mxu0
          %v2186 = vadd.f32 %v1830, %v2185
          %v2187 = vpop.f32.mrf.mxu0
          %2188 = vmatprep.mubr.bf16.mxu0 0
          %2189 = vmatmul.mubr.bf16.gmra.mxu0 %v1926
          %v2190 = vpop.f32.mrf.mxu0
          %v2191 = vadd.f32 %v1830, %v2190
          %v2192 = vpop.f32.mrf.mxu0
          %v2193 = vpop.f32.mrf.mxu0
          %v2194 = vadd.f32 %v1830, %v2193
          %v2195 = vpop.f32.mrf.mxu0
          %2196 = vmatprep.mubr.bf16.mxu0 0
          %2197 = vmatmul.mubr.bf16.gmra.mxu0 %v1929
          %v2198 = vpop.f32.mrf.mxu0
          %v2199 = vadd.f32 %v1830, %v2198
          %v2200 = vpop.f32.mrf.mxu0
          %v2201 = vpop.f32.mrf.mxu0
          %v2202 = vadd.f32 %v1830, %v2201
          %v2203 = vpop.f32.mrf.mxu0
          %2204 = vmatprep.mubr.bf16.mxu0 0
          %2205 = vmatmul.mubr.bf16.gmra.mxu0 %v1932
          %v2206 = vpop.f32.mrf.mxu0
          %v2207 = vadd.f32 %v1830, %v2206
          %v2208 = vpop.f32.mrf.mxu0
          %v2209 = vpop.f32.mrf.mxu0
          %v2210 = vadd.f32 %v1830, %v2209
          %v2211 = vpop.f32.mrf.mxu0
          %2212 = vmatprep.mubr.bf16.mxu0 0
          %2213 = vmatmul.mubr.bf16.gmra.mxu0 %v1935
          %v2214 = vpop.f32.mrf.mxu0
          %v2215 = vadd.f32 %v1830, %v2214
          %v2216 = vpop.f32.mrf.mxu0
          %v2217 = vpop.f32.mrf.mxu0
          %v2218 = vadd.f32 %v1830, %v2217
          %v2219 = vpop.f32.mrf.mxu0
          %2220 = vmatprep.mubr.bf16.mxu0 0
          %2221 = vmatmul.mubr.bf16.gmra.mxu0 %v1938
          %v2222 = vpop.f32.mrf.mxu0
          %v2223 = vadd.f32 %v1830, %v2222
          %v2224 = vpop.f32.mrf.mxu0
          %v2225 = vpop.f32.mrf.mxu0
          %v2226 = vadd.f32 %v1830, %v2225
          %v2227 = vpop.f32.mrf.mxu0
          %2228 = vdwg.mxu0
          %v2229 = vsel %vm748, 1, 0
          %v2230 = vsel %vm749, 1, 0
          %v2231 = vsel %vm750, 1, 0
          %v2232 = vsel %vm751, 1, 0
          %v2233 = vsel %vm752, 1, 0
          %v2234 = vsel %vm753, 1, 0
          %v2235 = vsel %vm754, 1, 0
          %v2236 = vsel %vm755, 1, 0
          %v2237 = vsel %vm756, 1, 0
          %v2238 = vsel %vm757, 1, 0
          %v2239 = vsel %vm758, 1, 0
          %v2240 = vsel %vm759, 1, 0
          %v2241 = vsel %vm760, 1, 0
          %v2242 = vsel %vm761, 1, 0
          %v2243 = vsel %vm762, 1, 0
          %v2244 = vsel %vm763, 1, 0
          %v2245 = vsel %vm764, 1, 0
          %v2246 = vsel %vm765, 1, 0
          %v2247 = vsel %vm766, 1, 0
          %v2248 = vsel %vm767, 1, 0
          %v2249 = vsel %vm768, 1, 0
          %v2250 = vsel %vm769, 1, 0
          %v2251 = vsel %vm770, 1, 0
          %v2252 = vsel %vm771, 1, 0
          %v2253 = vsel %vm772, 1, 0
          %v2254 = vsel %vm773, 1, 0
          %v2255 = vsel %vm774, 1, 0
          %v2256 = vsel %vm775, 1, 0
          %v2257 = vsel %vm776, 1, 0
          %v2258 = vsel %vm777, 1, 0
          %v2259 = vsel %vm778, 1, 0
          %v2260 = vsel %vm779, 1, 0
          %v2261 = vsel %vm780, 1, 0
          %v2262 = vsel %vm781, 1, 0
          %v2263 = vsel %vm782, 1, 0
          %v2264 = vsel %vm783, 1, 0
          %v2265 = vsel %vm784, 1, 0
          %v2266 = vsel %vm785, 1, 0
          %v2267 = vsel %vm786, 1, 0
          %v2268 = vsel %vm787, 1, 0
          %v2269 = vsel %vm788, 1, 0
          %v2270 = vsel %vm789, 1, 0
          %v2271 = vsel %vm790, 1, 0
          %v2272 = vsel %vm791, 1, 0
          %v2273 = vsel %vm792, 1, 0
          %v2274 = vsel %vm793, 1, 0
          %v2275 = vsel %vm794, 1, 0
          %v2276 = vsel %vm795, 1, 0
          %v2277 = vsel %vm796, 1, 0
          %v2278 = vsel %vm797, 1, 0
          %v2279 = vsel %vm798, 1, 0
          %v2280 = vsel %vm799, 1, 0
          %v2281 = vsel %vm800, 1, 0
          %v2282 = vsel %vm801, 1, 0
          %v2283 = vsel %vm802, 1, 0
          %v2284 = vsel %vm803, 1, 0
          %v2285 = vsel %vm804, 1, 0
          %v2286 = vsel %vm805, 1, 0
          %v2287 = vsel %vm806, 1, 0
          %v2288 = vsel %vm807, 1, 0
          %v2289 = vsel %vm808, 1, 0
          %v2290 = vsel %vm809, 1, 0
          %v2291 = vsel %vm810, 1, 0
          %v2292 = vsel %vm811, 1, 0
          %2293 = vset.pattern.permute.xlu0 0
          %2294 = vperm.xlu0 %2293, %v2229
          %v2295 = vpop.permute.xlu0 %2294
          %2296 = vset.pattern.permute.xlu0 0
          %2297 = vperm.xlu0 %2296, %v2230
          %v2298 = vpop.permute.xlu0 %2297
          %2299 = vset.pattern.permute.xlu0 0
          %2300 = vperm.xlu0 %2299, %v2231
          %v2301 = vpop.permute.xlu0 %2300
          %2302 = vset.pattern.permute.xlu0 0
          %2303 = vperm.xlu0 %2302, %v2232
          %v2304 = vpop.permute.xlu0 %2303
          %2305 = vset.pattern.permute.xlu0 0
          %2306 = vperm.xlu0 %2305, %v2233
          %v2307 = vpop.permute.xlu0 %2306
          %2308 = vset.pattern.permute.xlu0 0
          %2309 = vperm.xlu0 %2308, %v2234
          %v2310 = vpop.permute.xlu0 %2309
          %2311 = vset.pattern.permute.xlu0 0
          %2312 = vperm.xlu0 %2311, %v2235
          %v2313 = vpop.permute.xlu0 %2312
          %2314 = vset.pattern.permute.xlu0 0
          %2315 = vperm.xlu0 %2314, %v2236
          %v2316 = vpop.permute.xlu0 %2315
          %2317 = vset.pattern.permute.xlu0 0
          %2318 = vperm.xlu0 %2317, %v2237
          %v2319 = vpop.permute.xlu0 %2318
          %2320 = vset.pattern.permute.xlu0 0
          %2321 = vperm.xlu0 %2320, %v2238
          %v2322 = vpop.permute.xlu0 %2321
          %2323 = vset.pattern.permute.xlu0 0
          %2324 = vperm.xlu0 %2323, %v2239
          %v2325 = vpop.permute.xlu0 %2324
          %2326 = vset.pattern.permute.xlu0 0
          %2327 = vperm.xlu0 %2326, %v2240
          %v2328 = vpop.permute.xlu0 %2327
          %2329 = vset.pattern.permute.xlu0 0
          %2330 = vperm.xlu0 %2329, %v2241
          %v2331 = vpop.permute.xlu0 %2330
          %2332 = vset.pattern.permute.xlu0 0
          %2333 = vperm.xlu0 %2332, %v2242
          %v2334 = vpop.permute.xlu0 %2333
          %2335 = vset.pattern.permute.xlu0 0
          %2336 = vperm.xlu0 %2335, %v2243
          %v2337 = vpop.permute.xlu0 %2336
          %2338 = vset.pattern.permute.xlu0 0
          %2339 = vperm.xlu0 %2338, %v2244
          %v2340 = vpop.permute.xlu0 %2339
          %2341 = vset.pattern.permute.xlu0 0
          %2342 = vperm.xlu0 %2341, %v2245
          %v2343 = vpop.permute.xlu0 %2342
          %2344 = vset.pattern.permute.xlu0 0
          %2345 = vperm.xlu0 %2344, %v2246
          %v2346 = vpop.permute.xlu0 %2345
          %2347 = vset.pattern.permute.xlu0 0
          %2348 = vperm.xlu0 %2347, %v2247
          %v2349 = vpop.permute.xlu0 %2348
          %2350 = vset.pattern.permute.xlu0 0
          %2351 = vperm.xlu0 %2350, %v2248
          %v2352 = vpop.permute.xlu0 %2351
          %2353 = vset.pattern.permute.xlu0 0
          %2354 = vperm.xlu0 %2353, %v2249
          %v2355 = vpop.permute.xlu0 %2354
          %2356 = vset.pattern.permute.xlu0 0
          %2357 = vperm.xlu0 %2356, %v2250
          %v2358 = vpop.permute.xlu0 %2357
          %2359 = vset.pattern.permute.xlu0 0
          %2360 = vperm.xlu0 %2359, %v2251
          %v2361 = vpop.permute.xlu0 %2360
          %2362 = vset.pattern.permute.xlu0 0
          %2363 = vperm.xlu0 %2362, %v2252
          %v2364 = vpop.permute.xlu0 %2363
          %2365 = vset.pattern.permute.xlu0 0
          %2366 = vperm.xlu0 %2365, %v2253
          %v2367 = vpop.permute.xlu0 %2366
          %2368 = vset.pattern.permute.xlu0 0
          %2369 = vperm.xlu0 %2368, %v2254
          %v2370 = vpop.permute.xlu0 %2369
          %2371 = vset.pattern.permute.xlu0 0
          %2372 = vperm.xlu0 %2371, %v2255
          %v2373 = vpop.permute.xlu0 %2372
          %2374 = vset.pattern.permute.xlu0 0
          %2375 = vperm.xlu0 %2374, %v2256
          %v2376 = vpop.permute.xlu0 %2375
          %2377 = vset.pattern.permute.xlu0 0
          %2378 = vperm.xlu0 %2377, %v2257
          %v2379 = vpop.permute.xlu0 %2378
          %2380 = vset.pattern.permute.xlu0 0
          %2381 = vperm.xlu0 %2380, %v2258
          %v2382 = vpop.permute.xlu0 %2381
          %2383 = vset.pattern.permute.xlu0 0
          %2384 = vperm.xlu0 %2383, %v2259
          %v2385 = vpop.permute.xlu0 %2384
          %2386 = vset.pattern.permute.xlu0 0
          %2387 = vperm.xlu0 %2386, %v2260
          %v2388 = vpop.permute.xlu0 %2387
          %2389 = vset.pattern.permute.xlu0 0
          %2390 = vperm.xlu0 %2389, %v2261
          %v2391 = vpop.permute.xlu0 %2390
          %2392 = vset.pattern.permute.xlu0 0
          %2393 = vperm.xlu0 %2392, %v2262
          %v2394 = vpop.permute.xlu0 %2393
          %2395 = vset.pattern.permute.xlu0 0
          %2396 = vperm.xlu0 %2395, %v2263
          %v2397 = vpop.permute.xlu0 %2396
          %2398 = vset.pattern.permute.xlu0 0
          %2399 = vperm.xlu0 %2398, %v2264
          %v2400 = vpop.permute.xlu0 %2399
          %2401 = vset.pattern.permute.xlu0 0
          %2402 = vperm.xlu0 %2401, %v2265
          %v2403 = vpop.permute.xlu0 %2402
          %2404 = vset.pattern.permute.xlu0 0
          %2405 = vperm.xlu0 %2404, %v2266
          %v2406 = vpop.permute.xlu0 %2405
          %2407 = vset.pattern.permute.xlu0 0
          %2408 = vperm.xlu0 %2407, %v2267
          %v2409 = vpop.permute.xlu0 %2408
          %2410 = vset.pattern.permute.xlu0 0
          %2411 = vperm.xlu0 %2410, %v2268
          %v2412 = vpop.permute.xlu0 %2411
          %2413 = vset.pattern.permute.xlu0 0
          %2414 = vperm.xlu0 %2413, %v2269
          %v2415 = vpop.permute.xlu0 %2414
          %2416 = vset.pattern.permute.xlu0 0
          %2417 = vperm.xlu0 %2416, %v2270
          %v2418 = vpop.permute.xlu0 %2417
          %2419 = vset.pattern.permute.xlu0 0
          %2420 = vperm.xlu0 %2419, %v2271
          %v2421 = vpop.permute.xlu0 %2420
          %2422 = vset.pattern.permute.xlu0 0
          %2423 = vperm.xlu0 %2422, %v2272
          %v2424 = vpop.permute.xlu0 %2423
          %2425 = vset.pattern.permute.xlu0 0
          %2426 = vperm.xlu0 %2425, %v2273
          %v2427 = vpop.permute.xlu0 %2426
          %2428 = vset.pattern.permute.xlu0 0
          %2429 = vperm.xlu0 %2428, %v2274
          %v2430 = vpop.permute.xlu0 %2429
          %2431 = vset.pattern.permute.xlu0 0
          %2432 = vperm.xlu0 %2431, %v2275
          %v2433 = vpop.permute.xlu0 %2432
          %2434 = vset.pattern.permute.xlu0 0
          %2435 = vperm.xlu0 %2434, %v2276
          %v2436 = vpop.permute.xlu0 %2435
          %2437 = vset.pattern.permute.xlu0 0
          %2438 = vperm.xlu0 %2437, %v2277
          %v2439 = vpop.permute.xlu0 %2438
          %2440 = vset.pattern.permute.xlu0 0
          %2441 = vperm.xlu0 %2440, %v2278
          %v2442 = vpop.permute.xlu0 %2441
          %2443 = vset.pattern.permute.xlu0 0
          %2444 = vperm.xlu0 %2443, %v2279
          %v2445 = vpop.permute.xlu0 %2444
          %2446 = vset.pattern.permute.xlu0 0
          %2447 = vperm.xlu0 %2446, %v2280
          %v2448 = vpop.permute.xlu0 %2447
          %2449 = vset.pattern.permute.xlu0 0
          %2450 = vperm.xlu0 %2449, %v2281
          %v2451 = vpop.permute.xlu0 %2450
          %2452 = vset.pattern.permute.xlu0 0
          %2453 = vperm.xlu0 %2452, %v2282
          %v2454 = vpop.permute.xlu0 %2453
          %2455 = vset.pattern.permute.xlu0 0
          %2456 = vperm.xlu0 %2455, %v2283
          %v2457 = vpop.permute.xlu0 %2456
          %2458 = vset.pattern.permute.xlu0 0
          %2459 = vperm.xlu0 %2458, %v2284
          %v2460 = vpop.permute.xlu0 %2459
          %2461 = vset.pattern.permute.xlu0 0
          %2462 = vperm.xlu0 %2461, %v2285
          %v2463 = vpop.permute.xlu0 %2462
          %2464 = vset.pattern.permute.xlu0 0
          %2465 = vperm.xlu0 %2464, %v2286
          %v2466 = vpop.permute.xlu0 %2465
          %2467 = vset.pattern.permute.xlu0 0
          %2468 = vperm.xlu0 %2467, %v2287
          %v2469 = vpop.permute.xlu0 %2468
          %2470 = vset.pattern.permute.xlu0 0
          %2471 = vperm.xlu0 %2470, %v2288
          %v2472 = vpop.permute.xlu0 %2471
          %2473 = vset.pattern.permute.xlu0 0
          %2474 = vperm.xlu0 %2473, %v2289
          %v2475 = vpop.permute.xlu0 %2474
          %2476 = vset.pattern.permute.xlu0 0
          %2477 = vperm.xlu0 %2476, %v2290
          %v2478 = vpop.permute.xlu0 %2477
          %2479 = vset.pattern.permute.xlu0 0
          %2480 = vperm.xlu0 %2479, %v2291
          %v2481 = vpop.permute.xlu0 %2480
          %2482 = vset.pattern.permute.xlu0 0
          %2483 = vperm.xlu0 %2482, %v2292
          %v2484 = vpop.permute.xlu0 %2483
          %vm2485 = vcmp.eq.s32.totalorder %v2295, 1
          %vm2486 = vcmp.eq.s32.totalorder %v2298, 1
          %vm2487 = vcmp.eq.s32.totalorder %v2301, 1
          %vm2488 = vcmp.eq.s32.totalorder %v2304, 1
          %vm2489 = vcmp.eq.s32.totalorder %v2307, 1
          %vm2490 = vcmp.eq.s32.totalorder %v2310, 1
          %vm2491 = vcmp.eq.s32.totalorder %v2313, 1
          %vm2492 = vcmp.eq.s32.totalorder %v2316, 1
          %vm2493 = vcmp.eq.s32.totalorder %v2319, 1
          %vm2494 = vcmp.eq.s32.totalorder %v2322, 1
          %vm2495 = vcmp.eq.s32.totalorder %v2325, 1
          %vm2496 = vcmp.eq.s32.totalorder %v2328, 1
          %vm2497 = vcmp.eq.s32.totalorder %v2331, 1
          %vm2498 = vcmp.eq.s32.totalorder %v2334, 1
          %vm2499 = vcmp.eq.s32.totalorder %v2337, 1
          %vm2500 = vcmp.eq.s32.totalorder %v2340, 1
          %vm2501 = vcmp.eq.s32.totalorder %v2343, 1
          %vm2502 = vcmp.eq.s32.totalorder %v2346, 1
          %vm2503 = vcmp.eq.s32.totalorder %v2349, 1
          %vm2504 = vcmp.eq.s32.totalorder %v2352, 1
          %vm2505 = vcmp.eq.s32.totalorder %v2355, 1
          %vm2506 = vcmp.eq.s32.totalorder %v2358, 1
          %vm2507 = vcmp.eq.s32.totalorder %v2361, 1
          %vm2508 = vcmp.eq.s32.totalorder %v2364, 1
          %vm2509 = vcmp.eq.s32.totalorder %v2367, 1
          %vm2510 = vcmp.eq.s32.totalorder %v2370, 1
          %vm2511 = vcmp.eq.s32.totalorder %v2373, 1
          %vm2512 = vcmp.eq.s32.totalorder %v2376, 1
          %vm2513 = vcmp.eq.s32.totalorder %v2379, 1
          %vm2514 = vcmp.eq.s32.totalorder %v2382, 1
          %vm2515 = vcmp.eq.s32.totalorder %v2385, 1
          %vm2516 = vcmp.eq.s32.totalorder %v2388, 1
          %vm2517 = vcmp.eq.s32.totalorder %v2391, 1
          %vm2518 = vcmp.eq.s32.totalorder %v2394, 1
          %vm2519 = vcmp.eq.s32.totalorder %v2397, 1
          %vm2520 = vcmp.eq.s32.totalorder %v2400, 1
          %vm2521 = vcmp.eq.s32.totalorder %v2403, 1
          %vm2522 = vcmp.eq.s32.totalorder %v2406, 1
          %vm2523 = vcmp.eq.s32.totalorder %v2409, 1
          %vm2524 = vcmp.eq.s32.totalorder %v2412, 1
          %vm2525 = vcmp.eq.s32.totalorder %v2415, 1
          %vm2526 = vcmp.eq.s32.totalorder %v2418, 1
          %vm2527 = vcmp.eq.s32.totalorder %v2421, 1
          %vm2528 = vcmp.eq.s32.totalorder %v2424, 1
          %vm2529 = vcmp.eq.s32.totalorder %v2427, 1
          %vm2530 = vcmp.eq.s32.totalorder %v2430, 1
          %vm2531 = vcmp.eq.s32.totalorder %v2433, 1
          %vm2532 = vcmp.eq.s32.totalorder %v2436, 1
          %vm2533 = vcmp.eq.s32.totalorder %v2439, 1
          %vm2534 = vcmp.eq.s32.totalorder %v2442, 1
          %vm2535 = vcmp.eq.s32.totalorder %v2445, 1
          %vm2536 = vcmp.eq.s32.totalorder %v2448, 1
          %vm2537 = vcmp.eq.s32.totalorder %v2451, 1
          %vm2538 = vcmp.eq.s32.totalorder %v2454, 1
          %vm2539 = vcmp.eq.s32.totalorder %v2457, 1
          %vm2540 = vcmp.eq.s32.totalorder %v2460, 1
          %vm2541 = vcmp.eq.s32.totalorder %v2463, 1
          %vm2542 = vcmp.eq.s32.totalorder %v2466, 1
          %vm2543 = vcmp.eq.s32.totalorder %v2469, 1
          %vm2544 = vcmp.eq.s32.totalorder %v2472, 1
          %vm2545 = vcmp.eq.s32.totalorder %v2475, 1
          %vm2546 = vcmp.eq.s32.totalorder %v2478, 1
          %vm2547 = vcmp.eq.s32.totalorder %v2481, 1
          %vm2548 = vcmp.eq.s32.totalorder %v2484, 1
          %v2549 = vsel %vm2485, %v1975, %v619
          %v2550 = vsel %vm2486, %v1978, %v620
          %v2551 = vsel %vm2487, %v1983, %v621
          %v2552 = vsel %vm2488, %v1986, %v622
          %v2553 = vsel %vm2489, %v1991, %v623
          %v2554 = vsel %vm2490, %v1994, %v624
          %v2555 = vsel %vm2491, %v1999, %v625
          %v2556 = vsel %vm2492, %v2002, %v626
          %v2557 = vsel %vm2493, %v2007, %v627
          %v2558 = vsel %vm2494, %v2010, %v628
          %v2559 = vsel %vm2495, %v2015, %v629
          %v2560 = vsel %vm2496, %v2018, %v630
          %v2561 = vsel %vm2497, %v2023, %v631
          %v2562 = vsel %vm2498, %v2026, %v632
          %v2563 = vsel %vm2499, %v2031, %v633
          %v2564 = vsel %vm2500, %v2034, %v634
          %v2565 = vsel %vm2501, %v2039, %v635
          %v2566 = vsel %vm2502, %v2042, %v636
          %v2567 = vsel %vm2503, %v2047, %v637
          %v2568 = vsel %vm2504, %v2050, %v638
          %v2569 = vsel %vm2505, %v2055, %v639
          %v2570 = vsel %vm2506, %v2058, %v640
          %v2571 = vsel %vm2507, %v2063, %v641
          %v2572 = vsel %vm2508, %v2066, %v642
          %v2573 = vsel %vm2509, %v2071, %v643
          %v2574 = vsel %vm2510, %v2074, %v644
          %v2575 = vsel %vm2511, %v2079, %v645
          %v2576 = vsel %vm2512, %v2082, %v646
          %v2577 = vsel %vm2513, %v2087, %v647
          %v2578 = vsel %vm2514, %v2090, %v648
          %v2579 = vsel %vm2515, %v2095, %v649
          %v2580 = vsel %vm2516, %v2098, %v650
          %v2581 = vsel %vm2517, %v2103, %v651
          %v2582 = vsel %vm2518, %v2106, %v652
          %v2583 = vsel %vm2519, %v2111, %v653
          %v2584 = vsel %vm2520, %v2114, %v654
          %v2585 = vsel %vm2521, %v2119, %v655
          %v2586 = vsel %vm2522, %v2122, %v656
          %v2587 = vsel %vm2523, %v2127, %v657
          %v2588 = vsel %vm2524, %v2130, %v658
          %v2589 = vsel %vm2525, %v2135, %v659
          %v2590 = vsel %vm2526, %v2138, %v660
          %v2591 = vsel %vm2527, %v2143, %v661
          %v2592 = vsel %vm2528, %v2146, %v662
          %v2593 = vsel %vm2529, %v2151, %v663
          %v2594 = vsel %vm2530, %v2154, %v664
          %v2595 = vsel %vm2531, %v2159, %v665
          %v2596 = vsel %vm2532, %v2162, %v666
          %v2597 = vsel %vm2533, %v2167, %v667
          %v2598 = vsel %vm2534, %v2170, %v668
          %v2599 = vsel %vm2535, %v2175, %v669
          %v2600 = vsel %vm2536, %v2178, %v670
          %v2601 = vsel %vm2537, %v2183, %v671
          %v2602 = vsel %vm2538, %v2186, %v672
          %v2603 = vsel %vm2539, %v2191, %v673
          %v2604 = vsel %vm2540, %v2194, %v674
          %v2605 = vsel %vm2541, %v2199, %v675
          %v2606 = vsel %vm2542, %v2202, %v676
          %v2607 = vsel %vm2543, %v2207, %v677
          %v2608 = vsel %vm2544, %v2210, %v678
          %v2609 = vsel %vm2545, %v2215, %v679
          %v2610 = vsel %vm2546, %v2218, %v680
          %v2611 = vsel %vm2547, %v2223, %v681
          %v2612 = vsel %vm2548, %v2226, %v682
          %s2613 = smul.addr %s812, 4
          %s2614 = scalar_lea.vmem %s8, %s2613
          %v2615 = vld [vmem:[%s2614] sm:$0xf]
          %v2616 = vld [vmem:[%s2614 + $0x4] sm:$0xf]
          %v2617 = vld [vmem:[%s2614 + $0x8] sm:$0xf]
          %v2618 = vld [vmem:[%s2614 + $0xc] sm:$0xf]
          %s2619 = scalar_lea.vmem %s9, %s614
          %v2620 = vld [vmem:[%s2619] sm:$0x1]
          %v2622 = vlaneseq
          %v2623 = vshrl.u32 %v2622, 7
          %v2624 = vsub.s32 0, %v2623
          %v2625 = vrot.slane %v2620, %v2624
          %v2631 = vunpack.c.l.b16 %v2615
          %v2632 = vunpack.c.l.b16 %v2616
          %v2633 = vunpack.c.l.b16 %v2617
          %v2634 = vunpack.c.l.b16 %v2618
          %v2635 = vpack.c.b16 %v2632, %v2631
          %v2636 = vpack.c.b16 %v2634, %v2633
          %2639 = vmatprep.subr.bf16.mxu0 0
          %2640 = vmatpush1.bf16.msra.mxu0 0
          %2641 = vmatprep.subr.bf16.mxu0 0
          %2642 = vmatpush1.bf16.msra.mxu0 0
          %2643 = vmatprep.subr.bf16.mxu0 0
          %2644 = vmatpush1.bf16.msra.mxu0 0
          %2645 = vmatprep.subr.bf16.mxu0 0
          %2646 = vmatpush1.bf16.msra.mxu0 0
          %2647 = vmatprep.subr.bf16.mxu0 0
          %2648 = vmatpush1.bf16.msra.mxu0 0
          %2649 = vmatprep.subr.bf16.mxu0 0
          %2650 = vmatpush1.bf16.msra.mxu0 0
          %2651 = vmatprep.subr.bf16.mxu0 0
          %2652 = vmatpush1.bf16.msra.mxu0 %v2636
          %2653 = vmatprep.subr.bf16.mxu0 0
          %2654 = vmatpush1.bf16.msra.mxu0 %v2635
          %2655 = vmatprep.subr.bf16.mxu0 0
          %2656 = vmatpush2.bf16.msra.mxu0 0
          %2657 = vmatprep.subr.bf16.mxu0 0
          %2658 = vmatpush2.bf16.msra.mxu0 0
          %2659 = vmatprep.subr.bf16.mxu0 0
          %2660 = vmatpush2.bf16.msra.mxu0 0
          %2661 = vmatprep.subr.bf16.mxu0 0
          %2662 = vmatpush2.bf16.msra.mxu0 0
          %2663 = vmatprep.subr.bf16.mxu0 0
          %2664 = vmatpush2.bf16.msra.mxu0 0
          %2665 = vmatprep.subr.bf16.mxu0 0
          %2666 = vmatpush2.bf16.msra.mxu0 0
          %2667 = vmatprep.subr.bf16.mxu0 0
          %2668 = vmatpush2.bf16.msra.mxu0 0
          %2669 = vmatprep.subr.bf16.mxu0 0
          %2670 = vmatpush2.bf16.msra.mxu0 0
          %2671 = vmatprep.mubr.bf16.mxu0 0
          %2672 = vmatmul.mubr.bf16.gmra.mxu0 %v1845
          %v2673 = vpop.f32.mrf.mxu0
          %v2674 = vadd.f32 %v2625, %v2673
          %v2675 = vpop.f32.mrf.mxu0
          %v2676 = vpop.f32.mrf.mxu0
          %v2677 = vadd.f32 %v2625, %v2676
          %v2678 = vpop.f32.mrf.mxu0
          %2679 = vmatprep.mubr.bf16.mxu0 0
          %2680 = vmatmul.mubr.bf16.gmra.mxu0 %v1848
          %v2681 = vpop.f32.mrf.mxu0
          %v2682 = vadd.f32 %v2625, %v2681
          %v2683 = vpop.f32.mrf.mxu0
          %v2684 = vpop.f32.mrf.mxu0
          %v2685 = vadd.f32 %v2625, %v2684
          %v2686 = vpop.f32.mrf.mxu0
          %2687 = vmatprep.mubr.bf16.mxu0 0
          %2688 = vmatmul.mubr.bf16.gmra.mxu0 %v1851
          %v2689 = vpop.f32.mrf.mxu0
          %v2690 = vadd.f32 %v2625, %v2689
          %v2691 = vpop.f32.mrf.mxu0
          %v2692 = vpop.f32.mrf.mxu0
          %v2693 = vadd.f32 %v2625, %v2692
          %v2694 = vpop.f32.mrf.mxu0
          %2695 = vmatprep.mubr.bf16.mxu0 0
          %2696 = vmatmul.mubr.bf16.gmra.mxu0 %v1854
          %v2697 = vpop.f32.mrf.mxu0
          %v2698 = vadd.f32 %v2625, %v2697
          %v2699 = vpop.f32.mrf.mxu0
          %v2700 = vpop.f32.mrf.mxu0
          %v2701 = vadd.f32 %v2625, %v2700
          %v2702 = vpop.f32.mrf.mxu0
          %2703 = vmatprep.mubr.bf16.mxu0 0
          %2704 = vmatmul.mubr.bf16.gmra.mxu0 %v1857
          %v2705 = vpop.f32.mrf.mxu0
          %v2706 = vadd.f32 %v2625, %v2705
          %v2707 = vpop.f32.mrf.mxu0
          %v2708 = vpop.f32.mrf.mxu0
          %v2709 = vadd.f32 %v2625, %v2708
          %v2710 = vpop.f32.mrf.mxu0
          %2711 = vmatprep.mubr.bf16.mxu0 0
          %2712 = vmatmul.mubr.bf16.gmra.mxu0 %v1860
          %v2713 = vpop.f32.mrf.mxu0
          %v2714 = vadd.f32 %v2625, %v2713
          %v2715 = vpop.f32.mrf.mxu0
          %v2716 = vpop.f32.mrf.mxu0
          %v2717 = vadd.f32 %v2625, %v2716
          %v2718 = vpop.f32.mrf.mxu0
          %2719 = vmatprep.mubr.bf16.mxu0 0
          %2720 = vmatmul.mubr.bf16.gmra.mxu0 %v1863
          %v2721 = vpop.f32.mrf.mxu0
          %v2722 = vadd.f32 %v2625, %v2721
          %v2723 = vpop.f32.mrf.mxu0
          %v2724 = vpop.f32.mrf.mxu0
          %v2725 = vadd.f32 %v2625, %v2724
          %v2726 = vpop.f32.mrf.mxu0
          %2727 = vmatprep.mubr.bf16.mxu0 0
          %2728 = vmatmul.mubr.bf16.gmra.mxu0 %v1866
          %v2729 = vpop.f32.mrf.mxu0
          %v2730 = vadd.f32 %v2625, %v2729
          %v2731 = vpop.f32.mrf.mxu0
          %v2732 = vpop.f32.mrf.mxu0
          %v2733 = vadd.f32 %v2625, %v2732
          %v2734 = vpop.f32.mrf.mxu0
          %2735 = vmatprep.mubr.bf16.mxu0 0
          %2736 = vmatmul.mubr.bf16.gmra.mxu0 %v1869
          %v2737 = vpop.f32.mrf.mxu0
          %v2738 = vadd.f32 %v2625, %v2737
          %v2739 = vpop.f32.mrf.mxu0
          %v2740 = vpop.f32.mrf.mxu0
          %v2741 = vadd.f32 %v2625, %v2740
          %v2742 = vpop.f32.mrf.mxu0
          %2743 = vmatprep.mubr.bf16.mxu0 0
          %2744 = vmatmul.mubr.bf16.gmra.mxu0 %v1872
          %v2745 = vpop.f32.mrf.mxu0
          %v2746 = vadd.f32 %v2625, %v2745
          %v2747 = vpop.f32.mrf.mxu0
          %v2748 = vpop.f32.mrf.mxu0
          %v2749 = vadd.f32 %v2625, %v2748
          %v2750 = vpop.f32.mrf.mxu0
          %2751 = vmatprep.mubr.bf16.mxu0 0
          %2752 = vmatmul.mubr.bf16.gmra.mxu0 %v1875
          %v2753 = vpop.f32.mrf.mxu0
          %v2754 = vadd.f32 %v2625, %v2753
          %v2755 = vpop.f32.mrf.mxu0
          %v2756 = vpop.f32.mrf.mxu0
          %v2757 = vadd.f32 %v2625, %v2756
          %v2758 = vpop.f32.mrf.mxu0
          %2759 = vmatprep.mubr.bf16.mxu0 0
          %2760 = vmatmul.mubr.bf16.gmra.mxu0 %v1878
          %v2761 = vpop.f32.mrf.mxu0
          %v2762 = vadd.f32 %v2625, %v2761
          %v2763 = vpop.f32.mrf.mxu0
          %v2764 = vpop.f32.mrf.mxu0
          %v2765 = vadd.f32 %v2625, %v2764
          %v2766 = vpop.f32.mrf.mxu0
          %2767 = vmatprep.mubr.bf16.mxu0 0
          %2768 = vmatmul.mubr.bf16.gmra.mxu0 %v1881
          %v2769 = vpop.f32.mrf.mxu0
          %v2770 = vadd.f32 %v2625, %v2769
          %v2771 = vpop.f32.mrf.mxu0
          %v2772 = vpop.f32.mrf.mxu0
          %v2773 = vadd.f32 %v2625, %v2772
          %v2774 = vpop.f32.mrf.mxu0
          %2775 = vmatprep.mubr.bf16.mxu0 0
          %2776 = vmatmul.mubr.bf16.gmra.mxu0 %v1884
          %v2777 = vpop.f32.mrf.mxu0
          %v2778 = vadd.f32 %v2625, %v2777
          %v2779 = vpop.f32.mrf.mxu0
          %v2780 = vpop.f32.mrf.mxu0
          %v2781 = vadd.f32 %v2625, %v2780
          %v2782 = vpop.f32.mrf.mxu0
          %2783 = vmatprep.mubr.bf16.mxu0 0
          %2784 = vmatmul.mubr.bf16.gmra.mxu0 %v1887
          %v2785 = vpop.f32.mrf.mxu0
          %v2786 = vadd.f32 %v2625, %v2785
          %v2787 = vpop.f32.mrf.mxu0
          %v2788 = vpop.f32.mrf.mxu0
          %v2789 = vadd.f32 %v2625, %v2788
          %v2790 = vpop.f32.mrf.mxu0
          %2791 = vmatprep.mubr.bf16.mxu0 0
          %2792 = vmatmul.mubr.bf16.gmra.mxu0 %v1890
          %v2793 = vpop.f32.mrf.mxu0
          %v2794 = vadd.f32 %v2625, %v2793
          %v2795 = vpop.f32.mrf.mxu0
          %v2796 = vpop.f32.mrf.mxu0
          %v2797 = vadd.f32 %v2625, %v2796
          %v2798 = vpop.f32.mrf.mxu0
          %2799 = vmatprep.mubr.bf16.mxu0 0
          %2800 = vmatmul.mubr.bf16.gmra.mxu0 %v1893
          %v2801 = vpop.f32.mrf.mxu0
          %v2802 = vadd.f32 %v2625, %v2801
          %v2803 = vpop.f32.mrf.mxu0
          %v2804 = vpop.f32.mrf.mxu0
          %v2805 = vadd.f32 %v2625, %v2804
          %v2806 = vpop.f32.mrf.mxu0
          %2807 = vmatprep.mubr.bf16.mxu0 0
          %2808 = vmatmul.mubr.bf16.gmra.mxu0 %v1896
          %v2809 = vpop.f32.mrf.mxu0
          %v2810 = vadd.f32 %v2625, %v2809
          %v2811 = vpop.f32.mrf.mxu0
          %v2812 = vpop.f32.mrf.mxu0
          %v2813 = vadd.f32 %v2625, %v2812
          %v2814 = vpop.f32.mrf.mxu0
          %2815 = vmatprep.mubr.bf16.mxu0 0
          %2816 = vmatmul.mubr.bf16.gmra.mxu0 %v1899
          %v2817 = vpop.f32.mrf.mxu0
          %v2818 = vadd.f32 %v2625, %v2817
          %v2819 = vpop.f32.mrf.mxu0
          %v2820 = vpop.f32.mrf.mxu0
          %v2821 = vadd.f32 %v2625, %v2820
          %v2822 = vpop.f32.mrf.mxu0
          %2823 = vmatprep.mubr.bf16.mxu0 0
          %2824 = vmatmul.mubr.bf16.gmra.mxu0 %v1902
          %v2825 = vpop.f32.mrf.mxu0
          %v2826 = vadd.f32 %v2625, %v2825
          %v2827 = vpop.f32.mrf.mxu0
          %v2828 = vpop.f32.mrf.mxu0
          %v2829 = vadd.f32 %v2625, %v2828
          %v2830 = vpop.f32.mrf.mxu0
          %2831 = vmatprep.mubr.bf16.mxu0 0
          %2832 = vmatmul.mubr.bf16.gmra.mxu0 %v1905
          %v2833 = vpop.f32.mrf.mxu0
          %v2834 = vadd.f32 %v2625, %v2833
          %v2835 = vpop.f32.mrf.mxu0
          %v2836 = vpop.f32.mrf.mxu0
          %v2837 = vadd.f32 %v2625, %v2836
          %v2838 = vpop.f32.mrf.mxu0
          %2839 = vmatprep.mubr.bf16.mxu0 0
          %2840 = vmatmul.mubr.bf16.gmra.mxu0 %v1908
          %v2841 = vpop.f32.mrf.mxu0
          %v2842 = vadd.f32 %v2625, %v2841
          %v2843 = vpop.f32.mrf.mxu0
          %v2844 = vpop.f32.mrf.mxu0
          %v2845 = vadd.f32 %v2625, %v2844
          %v2846 = vpop.f32.mrf.mxu0
          %2847 = vmatprep.mubr.bf16.mxu0 0
          %2848 = vmatmul.mubr.bf16.gmra.mxu0 %v1911
          %v2849 = vpop.f32.mrf.mxu0
          %v2850 = vadd.f32 %v2625, %v2849
          %v2851 = vpop.f32.mrf.mxu0
          %v2852 = vpop.f32.mrf.mxu0
          %v2853 = vadd.f32 %v2625, %v2852
          %v2854 = vpop.f32.mrf.mxu0
          %2855 = vmatprep.mubr.bf16.mxu0 0
          %2856 = vmatmul.mubr.bf16.gmra.mxu0 %v1914
          %v2857 = vpop.f32.mrf.mxu0
          %v2858 = vadd.f32 %v2625, %v2857
          %v2859 = vpop.f32.mrf.mxu0
          %v2860 = vpop.f32.mrf.mxu0
          %v2861 = vadd.f32 %v2625, %v2860
          %v2862 = vpop.f32.mrf.mxu0
          %2863 = vmatprep.mubr.bf16.mxu0 0
          %2864 = vmatmul.mubr.bf16.gmra.mxu0 %v1917
          %v2865 = vpop.f32.mrf.mxu0
          %v2866 = vadd.f32 %v2625, %v2865
          %v2867 = vpop.f32.mrf.mxu0
          %v2868 = vpop.f32.mrf.mxu0
          %v2869 = vadd.f32 %v2625, %v2868
          %v2870 = vpop.f32.mrf.mxu0
          %2871 = vmatprep.mubr.bf16.mxu0 0
          %2872 = vmatmul.mubr.bf16.gmra.mxu0 %v1920
          %v2873 = vpop.f32.mrf.mxu0
          %v2874 = vadd.f32 %v2625, %v2873
          %v2875 = vpop.f32.mrf.mxu0
          %v2876 = vpop.f32.mrf.mxu0
          %v2877 = vadd.f32 %v2625, %v2876
          %v2878 = vpop.f32.mrf.mxu0
          %2879 = vmatprep.mubr.bf16.mxu0 0
          %2880 = vmatmul.mubr.bf16.gmra.mxu0 %v1923
          %v2881 = vpop.f32.mrf.mxu0
          %v2882 = vadd.f32 %v2625, %v2881
          %v2883 = vpop.f32.mrf.mxu0
          %v2884 = vpop.f32.mrf.mxu0
          %v2885 = vadd.f32 %v2625, %v2884
          %v2886 = vpop.f32.mrf.mxu0
          %2887 = vmatprep.mubr.bf16.mxu0 0
          %2888 = vmatmul.mubr.bf16.gmra.mxu0 %v1926
          %v2889 = vpop.f32.mrf.mxu0
          %v2890 = vadd.f32 %v2625, %v2889
          %v2891 = vpop.f32.mrf.mxu0
          %v2892 = vpop.f32.mrf.mxu0
          %v2893 = vadd.f32 %v2625, %v2892
          %v2894 = vpop.f32.mrf.mxu0
          %2895 = vmatprep.mubr.bf16.mxu0 0
          %2896 = vmatmul.mubr.bf16.gmra.mxu0 %v1929
          %v2897 = vpop.f32.mrf.mxu0
          %v2898 = vadd.f32 %v2625, %v2897
          %v2899 = vpop.f32.mrf.mxu0
          %v2900 = vpop.f32.mrf.mxu0
          %v2901 = vadd.f32 %v2625, %v2900
          %v2902 = vpop.f32.mrf.mxu0
          %2903 = vmatprep.mubr.bf16.mxu0 0
          %2904 = vmatmul.mubr.bf16.gmra.mxu0 %v1932
          %v2905 = vpop.f32.mrf.mxu0
          %v2906 = vadd.f32 %v2625, %v2905
          %v2907 = vpop.f32.mrf.mxu0
          %v2908 = vpop.f32.mrf.mxu0
          %v2909 = vadd.f32 %v2625, %v2908
          %v2910 = vpop.f32.mrf.mxu0
          %2911 = vmatprep.mubr.bf16.mxu0 0
          %2912 = vmatmul.mubr.bf16.gmra.mxu0 %v1935
          %v2913 = vpop.f32.mrf.mxu0
          %v2914 = vadd.f32 %v2625, %v2913
          %v2915 = vpop.f32.mrf.mxu0
          %v2916 = vpop.f32.mrf.mxu0
          %v2917 = vadd.f32 %v2625, %v2916
          %v2918 = vpop.f32.mrf.mxu0
          %2919 = vmatprep.mubr.bf16.mxu0 0
          %2920 = vmatmul.mubr.bf16.gmra.mxu0 %v1938
          %v2921 = vpop.f32.mrf.mxu0
          %v2922 = vadd.f32 %v2625, %v2921
          %v2923 = vpop.f32.mrf.mxu0
          %v2924 = vpop.f32.mrf.mxu0
          %v2925 = vadd.f32 %v2625, %v2924
          %v2926 = vpop.f32.mrf.mxu0
          %2927 = vdwg.mxu0
          %v2928 = vmax.f32 %v2674, 0.0
          %v2929 = vmax.f32 %v2677, 0.0
          %v2930 = vmax.f32 %v2682, 0.0
          %v2931 = vmax.f32 %v2685, 0.0
          %v2932 = vmax.f32 %v2690, 0.0
          %v2933 = vmax.f32 %v2693, 0.0
          %v2934 = vmax.f32 %v2698, 0.0
          %v2935 = vmax.f32 %v2701, 0.0
          %v2936 = vmax.f32 %v2706, 0.0
          %v2937 = vmax.f32 %v2709, 0.0
          %v2938 = vmax.f32 %v2714, 0.0
          %v2939 = vmax.f32 %v2717, 0.0
          %v2940 = vmax.f32 %v2722, 0.0
          %v2941 = vmax.f32 %v2725, 0.0
          %v2942 = vmax.f32 %v2730, 0.0
          %v2943 = vmax.f32 %v2733, 0.0
          %v2944 = vmax.f32 %v2738, 0.0
          %v2945 = vmax.f32 %v2741, 0.0
          %v2946 = vmax.f32 %v2746, 0.0
          %v2947 = vmax.f32 %v2749, 0.0
          %v2948 = vmax.f32 %v2754, 0.0
          %v2949 = vmax.f32 %v2757, 0.0
          %v2950 = vmax.f32 %v2762, 0.0
          %v2951 = vmax.f32 %v2765, 0.0
          %v2952 = vmax.f32 %v2770, 0.0
          %v2953 = vmax.f32 %v2773, 0.0
          %v2954 = vmax.f32 %v2778, 0.0
          %v2955 = vmax.f32 %v2781, 0.0
          %v2956 = vmax.f32 %v2786, 0.0
          %v2957 = vmax.f32 %v2789, 0.0
          %v2958 = vmax.f32 %v2794, 0.0
          %v2959 = vmax.f32 %v2797, 0.0
          %v2960 = vmax.f32 %v2802, 0.0
          %v2961 = vmax.f32 %v2805, 0.0
          %v2962 = vmax.f32 %v2810, 0.0
          %v2963 = vmax.f32 %v2813, 0.0
          %v2964 = vmax.f32 %v2818, 0.0
          %v2965 = vmax.f32 %v2821, 0.0
          %v2966 = vmax.f32 %v2826, 0.0
          %v2967 = vmax.f32 %v2829, 0.0
          %v2968 = vmax.f32 %v2834, 0.0
          %v2969 = vmax.f32 %v2837, 0.0
          %v2970 = vmax.f32 %v2842, 0.0
          %v2971 = vmax.f32 %v2845, 0.0
          %v2972 = vmax.f32 %v2850, 0.0
          %v2973 = vmax.f32 %v2853, 0.0
          %v2974 = vmax.f32 %v2858, 0.0
          %v2975 = vmax.f32 %v2861, 0.0
          %v2976 = vmax.f32 %v2866, 0.0
          %v2977 = vmax.f32 %v2869, 0.0
          %v2978 = vmax.f32 %v2874, 0.0
          %v2979 = vmax.f32 %v2877, 0.0
          %v2980 = vmax.f32 %v2882, 0.0
          %v2981 = vmax.f32 %v2885, 0.0
          %v2982 = vmax.f32 %v2890, 0.0
          %v2983 = vmax.f32 %v2893, 0.0
          %v2984 = vmax.f32 %v2898, 0.0
          %v2985 = vmax.f32 %v2901, 0.0
          %v2986 = vmax.f32 %v2906, 0.0
          %v2987 = vmax.f32 %v2909, 0.0
          %v2988 = vmax.f32 %v2914, 0.0
          %v2989 = vmax.f32 %v2917, 0.0
          %v2990 = vmax.f32 %v2922, 0.0
          %v2991 = vmax.f32 %v2925, 0.0
          %s2992 = smul.addr %s812, 4
          %s2993 = scalar_lea.vmem %s10, %s2992
          %v2994 = vld [vmem:[%s2993] sm:$0xf]
          %v2995 = vld [vmem:[%s2993 + $0x4] sm:$0xf]
          %v2996 = vld [vmem:[%s2993 + $0x8] sm:$0xf]
          %v2997 = vld [vmem:[%s2993 + $0xc] sm:$0xf]
          %s2998 = scalar_lea.vmem %s11, %s614
          %v2999 = vld [vmem:[%s2998] sm:$0x1]
          %v3000 = vpack.c.bf16 %v2929, %v2928
          %v3001 = vpack.c.bf16 %v2931, %v2930
          %v3002 = vpack.c.bf16 %v2933, %v2932
          %v3003 = vpack.c.bf16 %v2935, %v2934
          %v3004 = vpack.c.bf16 %v2937, %v2936
          %v3005 = vpack.c.bf16 %v2939, %v2938
          %v3006 = vpack.c.bf16 %v2941, %v2940
          %v3007 = vpack.c.bf16 %v2943, %v2942
          %v3008 = vpack.c.bf16 %v2945, %v2944
          %v3009 = vpack.c.bf16 %v2947, %v2946
          %v3010 = vpack.c.bf16 %v2949, %v2948
          %v3011 = vpack.c.bf16 %v2951, %v2950
          %v3012 = vpack.c.bf16 %v2953, %v2952
          %v3013 = vpack.c.bf16 %v2955, %v2954
          %v3014 = vpack.c.bf16 %v2957, %v2956
          %v3015 = vpack.c.bf16 %v2959, %v2958
          %v3016 = vpack.c.bf16 %v2961, %v2960
          %v3017 = vpack.c.bf16 %v2963, %v2962
          %v3018 = vpack.c.bf16 %v2965, %v2964
          %v3019 = vpack.c.bf16 %v2967, %v2966
          %v3020 = vpack.c.bf16 %v2969, %v2968
          %v3021 = vpack.c.bf16 %v2971, %v2970
          %v3022 = vpack.c.bf16 %v2973, %v2972
          %v3023 = vpack.c.bf16 %v2975, %v2974
          %v3024 = vpack.c.bf16 %v2977, %v2976
          %v3025 = vpack.c.bf16 %v2979, %v2978
          %v3026 = vpack.c.bf16 %v2981, %v2980
          %v3027 = vpack.c.bf16 %v2983, %v2982
          %v3028 = vpack.c.bf16 %v2985, %v2984
          %v3029 = vpack.c.bf16 %v2987, %v2986
          %v3030 = vpack.c.bf16 %v2989, %v2988
          %v3031 = vpack.c.bf16 %v2991, %v2990
          %v3033 = vlaneseq
          %v3034 = vshrl.u32 %v3033, 7
          %v3035 = vsub.s32 0, %v3034
          %v3036 = vrot.slane %v2999, %v3035
          %v3042 = vunpack.c.l.b16 %v2994
          %v3043 = vunpack.c.l.b16 %v2995
          %v3044 = vunpack.c.l.b16 %v2996
          %v3045 = vunpack.c.l.b16 %v2997
          %v3046 = vpack.c.b16 %v3043, %v3042
          %v3047 = vpack.c.b16 %v3045, %v3044
          %v3051 = vsel %vm1344, %v3000, 0
          %v3054 = vsel %vm1344, %v3001, 0
          %v3057 = vsel %vm1344, %v3002, 0
          %v3060 = vsel %vm1344, %v3003, 0
          %v3063 = vsel %vm1344, %v3004, 0
          %v3066 = vsel %vm1344, %v3005, 0
          %v3069 = vsel %vm1344, %v3006, 0
          %v3072 = vsel %vm1344, %v3007, 0
          %v3075 = vsel %vm1344, %v3008, 0
          %v3078 = vsel %vm1344, %v3009, 0
          %v3081 = vsel %vm1344, %v3010, 0
          %v3084 = vsel %vm1344, %v3011, 0
          %v3087 = vsel %vm1344, %v3012, 0
          %v3090 = vsel %vm1344, %v3013, 0
          %v3093 = vsel %vm1344, %v3014, 0
          %v3096 = vsel %vm1344, %v3015, 0
          %v3099 = vsel %vm1344, %v3016, 0
          %v3102 = vsel %vm1344, %v3017, 0
          %v3105 = vsel %vm1344, %v3018, 0
          %v3108 = vsel %vm1344, %v3019, 0
          %v3111 = vsel %vm1344, %v3020, 0
          %v3114 = vsel %vm1344, %v3021, 0
          %v3117 = vsel %vm1344, %v3022, 0
          %v3120 = vsel %vm1344, %v3023, 0
          %v3123 = vsel %vm1344, %v3024, 0
          %v3126 = vsel %vm1344, %v3025, 0
          %v3129 = vsel %vm1344, %v3026, 0
          %v3132 = vsel %vm1344, %v3027, 0
          %v3135 = vsel %vm1344, %v3028, 0
          %v3138 = vsel %vm1344, %v3029, 0
          %v3141 = vsel %vm1344, %v3030, 0
          %v3144 = vsel %vm1344, %v3031, 0
          %3146 = vmatprep.subr.bf16.mxu0 0
          %3147 = vmatpush1.bf16.msra.mxu0 0
          %3148 = vmatprep.subr.bf16.mxu0 0
          %3149 = vmatpush1.bf16.msra.mxu0 0
          %3150 = vmatprep.subr.bf16.mxu0 0
          %3151 = vmatpush1.bf16.msra.mxu0 0
          %3152 = vmatprep.subr.bf16.mxu0 0
          %3153 = vmatpush1.bf16.msra.mxu0 0
          %3154 = vmatprep.subr.bf16.mxu0 0
          %3155 = vmatpush1.bf16.msra.mxu0 0
          %3156 = vmatprep.subr.bf16.mxu0 0
          %3157 = vmatpush1.bf16.msra.mxu0 0
          %3158 = vmatprep.subr.bf16.mxu0 0
          %3159 = vmatpush1.bf16.msra.mxu0 %v3047
          %3160 = vmatprep.subr.bf16.mxu0 0
          %3161 = vmatpush1.bf16.msra.mxu0 %v3046
          %3162 = vmatprep.subr.bf16.mxu0 0
          %3163 = vmatpush2.bf16.msra.mxu0 0
          %3164 = vmatprep.subr.bf16.mxu0 0
          %3165 = vmatpush2.bf16.msra.mxu0 0
          %3166 = vmatprep.subr.bf16.mxu0 0
          %3167 = vmatpush2.bf16.msra.mxu0 0
          %3168 = vmatprep.subr.bf16.mxu0 0
          %3169 = vmatpush2.bf16.msra.mxu0 0
          %3170 = vmatprep.subr.bf16.mxu0 0
          %3171 = vmatpush2.bf16.msra.mxu0 0
          %3172 = vmatprep.subr.bf16.mxu0 0
          %3173 = vmatpush2.bf16.msra.mxu0 0
          %3174 = vmatprep.subr.bf16.mxu0 0
          %3175 = vmatpush2.bf16.msra.mxu0 0
          %3176 = vmatprep.subr.bf16.mxu0 0
          %3177 = vmatpush2.bf16.msra.mxu0 0
          %3178 = vmatprep.mubr.bf16.mxu0 0
          %3179 = vmatmul.mubr.bf16.gmra.mxu0 %v3051
          %v3180 = vpop.f32.mrf.mxu0
          %v3181 = vadd.f32 %v3036, %v3180
          %v3182 = vpop.f32.mrf.mxu0
          %v3183 = vpop.f32.mrf.mxu0
          %v3184 = vadd.f32 %v3036, %v3183
          %v3185 = vpop.f32.mrf.mxu0
          %3186 = vmatprep.mubr.bf16.mxu0 0
          %3187 = vmatmul.mubr.bf16.gmra.mxu0 %v3054
          %v3188 = vpop.f32.mrf.mxu0
          %v3189 = vadd.f32 %v3036, %v3188
          %v3190 = vpop.f32.mrf.mxu0
          %v3191 = vpop.f32.mrf.mxu0
          %v3192 = vadd.f32 %v3036, %v3191
          %v3193 = vpop.f32.mrf.mxu0
          %3194 = vmatprep.mubr.bf16.mxu0 0
          %3195 = vmatmul.mubr.bf16.gmra.mxu0 %v3057
          %v3196 = vpop.f32.mrf.mxu0
          %v3197 = vadd.f32 %v3036, %v3196
          %v3198 = vpop.f32.mrf.mxu0
          %v3199 = vpop.f32.mrf.mxu0
          %v3200 = vadd.f32 %v3036, %v3199
          %v3201 = vpop.f32.mrf.mxu0
          %3202 = vmatprep.mubr.bf16.mxu0 0
          %3203 = vmatmul.mubr.bf16.gmra.mxu0 %v3060
          %v3204 = vpop.f32.mrf.mxu0
          %v3205 = vadd.f32 %v3036, %v3204
          %v3206 = vpop.f32.mrf.mxu0
          %v3207 = vpop.f32.mrf.mxu0
          %v3208 = vadd.f32 %v3036, %v3207
          %v3209 = vpop.f32.mrf.mxu0
          %3210 = vmatprep.mubr.bf16.mxu0 0
          %3211 = vmatmul.mubr.bf16.gmra.mxu0 %v3063
          %v3212 = vpop.f32.mrf.mxu0
          %v3213 = vadd.f32 %v3036, %v3212
          %v3214 = vpop.f32.mrf.mxu0
          %v3215 = vpop.f32.mrf.mxu0
          %v3216 = vadd.f32 %v3036, %v3215
          %v3217 = vpop.f32.mrf.mxu0
          %3218 = vmatprep.mubr.bf16.mxu0 0
          %3219 = vmatmul.mubr.bf16.gmra.mxu0 %v3066
          %v3220 = vpop.f32.mrf.mxu0
          %v3221 = vadd.f32 %v3036, %v3220
          %v3222 = vpop.f32.mrf.mxu0
          %v3223 = vpop.f32.mrf.mxu0
          %v3224 = vadd.f32 %v3036, %v3223
          %v3225 = vpop.f32.mrf.mxu0
          %3226 = vmatprep.mubr.bf16.mxu0 0
          %3227 = vmatmul.mubr.bf16.gmra.mxu0 %v3069
          %v3228 = vpop.f32.mrf.mxu0
          %v3229 = vadd.f32 %v3036, %v3228
          %v3230 = vpop.f32.mrf.mxu0
          %v3231 = vpop.f32.mrf.mxu0
          %v3232 = vadd.f32 %v3036, %v3231
          %v3233 = vpop.f32.mrf.mxu0
          %3234 = vmatprep.mubr.bf16.mxu0 0
          %3235 = vmatmul.mubr.bf16.gmra.mxu0 %v3072
          %v3236 = vpop.f32.mrf.mxu0
          %v3237 = vadd.f32 %v3036, %v3236
          %v3238 = vpop.f32.mrf.mxu0
          %v3239 = vpop.f32.mrf.mxu0
          %v3240 = vadd.f32 %v3036, %v3239
          %v3241 = vpop.f32.mrf.mxu0
          %3242 = vmatprep.mubr.bf16.mxu0 0
          %3243 = vmatmul.mubr.bf16.gmra.mxu0 %v3075
          %v3244 = vpop.f32.mrf.mxu0
          %v3245 = vadd.f32 %v3036, %v3244
          %v3246 = vpop.f32.mrf.mxu0
          %v3247 = vpop.f32.mrf.mxu0
          %v3248 = vadd.f32 %v3036, %v3247
          %v3249 = vpop.f32.mrf.mxu0
          %3250 = vmatprep.mubr.bf16.mxu0 0
          %3251 = vmatmul.mubr.bf16.gmra.mxu0 %v3078
          %v3252 = vpop.f32.mrf.mxu0
          %v3253 = vadd.f32 %v3036, %v3252
          %v3254 = vpop.f32.mrf.mxu0
          %v3255 = vpop.f32.mrf.mxu0
          %v3256 = vadd.f32 %v3036, %v3255
          %v3257 = vpop.f32.mrf.mxu0
          %3258 = vmatprep.mubr.bf16.mxu0 0
          %3259 = vmatmul.mubr.bf16.gmra.mxu0 %v3081
          %v3260 = vpop.f32.mrf.mxu0
          %v3261 = vadd.f32 %v3036, %v3260
          %v3262 = vpop.f32.mrf.mxu0
          %v3263 = vpop.f32.mrf.mxu0
          %v3264 = vadd.f32 %v3036, %v3263
          %v3265 = vpop.f32.mrf.mxu0
          %3266 = vmatprep.mubr.bf16.mxu0 0
          %3267 = vmatmul.mubr.bf16.gmra.mxu0 %v3084
          %v3268 = vpop.f32.mrf.mxu0
          %v3269 = vadd.f32 %v3036, %v3268
          %v3270 = vpop.f32.mrf.mxu0
          %v3271 = vpop.f32.mrf.mxu0
          %v3272 = vadd.f32 %v3036, %v3271
          %v3273 = vpop.f32.mrf.mxu0
          %3274 = vmatprep.mubr.bf16.mxu0 0
          %3275 = vmatmul.mubr.bf16.gmra.mxu0 %v3087
          %v3276 = vpop.f32.mrf.mxu0
          %v3277 = vadd.f32 %v3036, %v3276
          %v3278 = vpop.f32.mrf.mxu0
          %v3279 = vpop.f32.mrf.mxu0
          %v3280 = vadd.f32 %v3036, %v3279
          %v3281 = vpop.f32.mrf.mxu0
          %3282 = vmatprep.mubr.bf16.mxu0 0
          %3283 = vmatmul.mubr.bf16.gmra.mxu0 %v3090
          %v3284 = vpop.f32.mrf.mxu0
          %v3285 = vadd.f32 %v3036, %v3284
          %v3286 = vpop.f32.mrf.mxu0
          %v3287 = vpop.f32.mrf.mxu0
          %v3288 = vadd.f32 %v3036, %v3287
          %v3289 = vpop.f32.mrf.mxu0
          %3290 = vmatprep.mubr.bf16.mxu0 0
          %3291 = vmatmul.mubr.bf16.gmra.mxu0 %v3093
          %v3292 = vpop.f32.mrf.mxu0
          %v3293 = vadd.f32 %v3036, %v3292
          %v3294 = vpop.f32.mrf.mxu0
          %v3295 = vpop.f32.mrf.mxu0
          %v3296 = vadd.f32 %v3036, %v3295
          %v3297 = vpop.f32.mrf.mxu0
          %3298 = vmatprep.mubr.bf16.mxu0 0
          %3299 = vmatmul.mubr.bf16.gmra.mxu0 %v3096
          %v3300 = vpop.f32.mrf.mxu0
          %v3301 = vadd.f32 %v3036, %v3300
          %v3302 = vpop.f32.mrf.mxu0
          %v3303 = vpop.f32.mrf.mxu0
          %v3304 = vadd.f32 %v3036, %v3303
          %v3305 = vpop.f32.mrf.mxu0
          %3306 = vmatprep.mubr.bf16.mxu0 0
          %3307 = vmatmul.mubr.bf16.gmra.mxu0 %v3099
          %v3308 = vpop.f32.mrf.mxu0
          %v3309 = vadd.f32 %v3036, %v3308
          %v3310 = vpop.f32.mrf.mxu0
          %v3311 = vpop.f32.mrf.mxu0
          %v3312 = vadd.f32 %v3036, %v3311
          %v3313 = vpop.f32.mrf.mxu0
          %3314 = vmatprep.mubr.bf16.mxu0 0
          %3315 = vmatmul.mubr.bf16.gmra.mxu0 %v3102
          %v3316 = vpop.f32.mrf.mxu0
          %v3317 = vadd.f32 %v3036, %v3316
          %v3318 = vpop.f32.mrf.mxu0
          %v3319 = vpop.f32.mrf.mxu0
          %v3320 = vadd.f32 %v3036, %v3319
          %v3321 = vpop.f32.mrf.mxu0
          %3322 = vmatprep.mubr.bf16.mxu0 0
          %3323 = vmatmul.mubr.bf16.gmra.mxu0 %v3105
          %v3324 = vpop.f32.mrf.mxu0
          %v3325 = vadd.f32 %v3036, %v3324
          %v3326 = vpop.f32.mrf.mxu0
          %v3327 = vpop.f32.mrf.mxu0
          %v3328 = vadd.f32 %v3036, %v3327
          %v3329 = vpop.f32.mrf.mxu0
          %3330 = vmatprep.mubr.bf16.mxu0 0
          %3331 = vmatmul.mubr.bf16.gmra.mxu0 %v3108
          %v3332 = vpop.f32.mrf.mxu0
          %v3333 = vadd.f32 %v3036, %v3332
          %v3334 = vpop.f32.mrf.mxu0
          %v3335 = vpop.f32.mrf.mxu0
          %v3336 = vadd.f32 %v3036, %v3335
          %v3337 = vpop.f32.mrf.mxu0
          %3338 = vmatprep.mubr.bf16.mxu0 0
          %3339 = vmatmul.mubr.bf16.gmra.mxu0 %v3111
          %v3340 = vpop.f32.mrf.mxu0
          %v3341 = vadd.f32 %v3036, %v3340
          %v3342 = vpop.f32.mrf.mxu0
          %v3343 = vpop.f32.mrf.mxu0
          %v3344 = vadd.f32 %v3036, %v3343
          %v3345 = vpop.f32.mrf.mxu0
          %3346 = vmatprep.mubr.bf16.mxu0 0
          %3347 = vmatmul.mubr.bf16.gmra.mxu0 %v3114
          %v3348 = vpop.f32.mrf.mxu0
          %v3349 = vadd.f32 %v3036, %v3348
          %v3350 = vpop.f32.mrf.mxu0
          %v3351 = vpop.f32.mrf.mxu0
          %v3352 = vadd.f32 %v3036, %v3351
          %v3353 = vpop.f32.mrf.mxu0
          %3354 = vmatprep.mubr.bf16.mxu0 0
          %3355 = vmatmul.mubr.bf16.gmra.mxu0 %v3117
          %v3356 = vpop.f32.mrf.mxu0
          %v3357 = vadd.f32 %v3036, %v3356
          %v3358 = vpop.f32.mrf.mxu0
          %v3359 = vpop.f32.mrf.mxu0
          %v3360 = vadd.f32 %v3036, %v3359
          %v3361 = vpop.f32.mrf.mxu0
          %3362 = vmatprep.mubr.bf16.mxu0 0
          %3363 = vmatmul.mubr.bf16.gmra.mxu0 %v3120
          %v3364 = vpop.f32.mrf.mxu0
          %v3365 = vadd.f32 %v3036, %v3364
          %v3366 = vpop.f32.mrf.mxu0
          %v3367 = vpop.f32.mrf.mxu0
          %v3368 = vadd.f32 %v3036, %v3367
          %v3369 = vpop.f32.mrf.mxu0
          %3370 = vmatprep.mubr.bf16.mxu0 0
          %3371 = vmatmul.mubr.bf16.gmra.mxu0 %v3123
          %v3372 = vpop.f32.mrf.mxu0
          %v3373 = vadd.f32 %v3036, %v3372
          %v3374 = vpop.f32.mrf.mxu0
          %v3375 = vpop.f32.mrf.mxu0
          %v3376 = vadd.f32 %v3036, %v3375
          %v3377 = vpop.f32.mrf.mxu0
          %3378 = vmatprep.mubr.bf16.mxu0 0
          %3379 = vmatmul.mubr.bf16.gmra.mxu0 %v3126
          %v3380 = vpop.f32.mrf.mxu0
          %v3381 = vadd.f32 %v3036, %v3380
          %v3382 = vpop.f32.mrf.mxu0
          %v3383 = vpop.f32.mrf.mxu0
          %v3384 = vadd.f32 %v3036, %v3383
          %v3385 = vpop.f32.mrf.mxu0
          %3386 = vmatprep.mubr.bf16.mxu0 0
          %3387 = vmatmul.mubr.bf16.gmra.mxu0 %v3129
          %v3388 = vpop.f32.mrf.mxu0
          %v3389 = vadd.f32 %v3036, %v3388
          %v3390 = vpop.f32.mrf.mxu0
          %v3391 = vpop.f32.mrf.mxu0
          %v3392 = vadd.f32 %v3036, %v3391
          %v3393 = vpop.f32.mrf.mxu0
          %3394 = vmatprep.mubr.bf16.mxu0 0
          %3395 = vmatmul.mubr.bf16.gmra.mxu0 %v3132
          %v3396 = vpop.f32.mrf.mxu0
          %v3397 = vadd.f32 %v3036, %v3396
          %v3398 = vpop.f32.mrf.mxu0
          %v3399 = vpop.f32.mrf.mxu0
          %v3400 = vadd.f32 %v3036, %v3399
          %v3401 = vpop.f32.mrf.mxu0
          %3402 = vmatprep.mubr.bf16.mxu0 0
          %3403 = vmatmul.mubr.bf16.gmra.mxu0 %v3135
          %v3404 = vpop.f32.mrf.mxu0
          %v3405 = vadd.f32 %v3036, %v3404
          %v3406 = vpop.f32.mrf.mxu0
          %v3407 = vpop.f32.mrf.mxu0
          %v3408 = vadd.f32 %v3036, %v3407
          %v3409 = vpop.f32.mrf.mxu0
          %3410 = vmatprep.mubr.bf16.mxu0 0
          %3411 = vmatmul.mubr.bf16.gmra.mxu0 %v3138
          %v3412 = vpop.f32.mrf.mxu0
          %v3413 = vadd.f32 %v3036, %v3412
          %v3414 = vpop.f32.mrf.mxu0
          %v3415 = vpop.f32.mrf.mxu0
          %v3416 = vadd.f32 %v3036, %v3415
          %v3417 = vpop.f32.mrf.mxu0
          %3418 = vmatprep.mubr.bf16.mxu0 0
          %3419 = vmatmul.mubr.bf16.gmra.mxu0 %v3141
          %v3420 = vpop.f32.mrf.mxu0
          %v3421 = vadd.f32 %v3036, %v3420
          %v3422 = vpop.f32.mrf.mxu0
          %v3423 = vpop.f32.mrf.mxu0
          %v3424 = vadd.f32 %v3036, %v3423
          %v3425 = vpop.f32.mrf.mxu0
          %3426 = vmatprep.mubr.bf16.mxu0 0
          %3427 = vmatmul.mubr.bf16.gmra.mxu0 %v3144
          %v3428 = vpop.f32.mrf.mxu0
          %v3429 = vadd.f32 %v3036, %v3428
          %v3430 = vpop.f32.mrf.mxu0
          %v3431 = vpop.f32.mrf.mxu0
          %v3432 = vadd.f32 %v3036, %v3431
          %v3433 = vpop.f32.mrf.mxu0
          %3434 = vdwg.mxu0
          %v3435 = vmax.f32 %v3181, 0.0
          %v3436 = vmax.f32 %v3184, 0.0
          %v3437 = vmax.f32 %v3189, 0.0
          %v3438 = vmax.f32 %v3192, 0.0
          %v3439 = vmax.f32 %v3197, 0.0
          %v3440 = vmax.f32 %v3200, 0.0
          %v3441 = vmax.f32 %v3205, 0.0
          %v3442 = vmax.f32 %v3208, 0.0
          %v3443 = vmax.f32 %v3213, 0.0
          %v3444 = vmax.f32 %v3216, 0.0
          %v3445 = vmax.f32 %v3221, 0.0
          %v3446 = vmax.f32 %v3224, 0.0
          %v3447 = vmax.f32 %v3229, 0.0
          %v3448 = vmax.f32 %v3232, 0.0
          %v3449 = vmax.f32 %v3237, 0.0
          %v3450 = vmax.f32 %v3240, 0.0
          %v3451 = vmax.f32 %v3245, 0.0
          %v3452 = vmax.f32 %v3248, 0.0
          %v3453 = vmax.f32 %v3253, 0.0
          %v3454 = vmax.f32 %v3256, 0.0
          %v3455 = vmax.f32 %v3261, 0.0
          %v3456 = vmax.f32 %v3264, 0.0
          %v3457 = vmax.f32 %v3269, 0.0
          %v3458 = vmax.f32 %v3272, 0.0
          %v3459 = vmax.f32 %v3277, 0.0
          %v3460 = vmax.f32 %v3280, 0.0
          %v3461 = vmax.f32 %v3285, 0.0
          %v3462 = vmax.f32 %v3288, 0.0
          %v3463 = vmax.f32 %v3293, 0.0
          %v3464 = vmax.f32 %v3296, 0.0
          %v3465 = vmax.f32 %v3301, 0.0
          %v3466 = vmax.f32 %v3304, 0.0
          %v3467 = vmax.f32 %v3309, 0.0
          %v3468 = vmax.f32 %v3312, 0.0
          %v3469 = vmax.f32 %v3317, 0.0
          %v3470 = vmax.f32 %v3320, 0.0
          %v3471 = vmax.f32 %v3325, 0.0
          %v3472 = vmax.f32 %v3328, 0.0
          %v3473 = vmax.f32 %v3333, 0.0
          %v3474 = vmax.f32 %v3336, 0.0
          %v3475 = vmax.f32 %v3341, 0.0
          %v3476 = vmax.f32 %v3344, 0.0
          %v3477 = vmax.f32 %v3349, 0.0
          %v3478 = vmax.f32 %v3352, 0.0
          %v3479 = vmax.f32 %v3357, 0.0
          %v3480 = vmax.f32 %v3360, 0.0
          %v3481 = vmax.f32 %v3365, 0.0
          %v3482 = vmax.f32 %v3368, 0.0
          %v3483 = vmax.f32 %v3373, 0.0
          %v3484 = vmax.f32 %v3376, 0.0
          %v3485 = vmax.f32 %v3381, 0.0
          %v3486 = vmax.f32 %v3384, 0.0
          %v3487 = vmax.f32 %v3389, 0.0
          %v3488 = vmax.f32 %v3392, 0.0
          %v3489 = vmax.f32 %v3397, 0.0
          %v3490 = vmax.f32 %v3400, 0.0
          %v3491 = vmax.f32 %v3405, 0.0
          %v3492 = vmax.f32 %v3408, 0.0
          %v3493 = vmax.f32 %v3413, 0.0
          %v3494 = vmax.f32 %v3416, 0.0
          %v3495 = vmax.f32 %v3421, 0.0
          %v3496 = vmax.f32 %v3424, 0.0
          %v3497 = vmax.f32 %v3429, 0.0
          %v3498 = vmax.f32 %v3432, 0.0
          %v3499 = vpack.c.bf16 %v3436, %v3435
          %v3500 = vpack.c.bf16 %v3438, %v3437
          %v3501 = vpack.c.bf16 %v3440, %v3439
          %v3502 = vpack.c.bf16 %v3442, %v3441
          %v3503 = vpack.c.bf16 %v3444, %v3443
          %v3504 = vpack.c.bf16 %v3446, %v3445
          %v3505 = vpack.c.bf16 %v3448, %v3447
          %v3506 = vpack.c.bf16 %v3450, %v3449
          %v3507 = vpack.c.bf16 %v3452, %v3451
          %v3508 = vpack.c.bf16 %v3454, %v3453
          %v3509 = vpack.c.bf16 %v3456, %v3455
          %v3510 = vpack.c.bf16 %v3458, %v3457
          %v3511 = vpack.c.bf16 %v3460, %v3459
          %v3512 = vpack.c.bf16 %v3462, %v3461
          %v3513 = vpack.c.bf16 %v3464, %v3463
          %v3514 = vpack.c.bf16 %v3466, %v3465
          %v3515 = vpack.c.bf16 %v3468, %v3467
          %v3516 = vpack.c.bf16 %v3470, %v3469
          %v3517 = vpack.c.bf16 %v3472, %v3471
          %v3518 = vpack.c.bf16 %v3474, %v3473
          %v3519 = vpack.c.bf16 %v3476, %v3475
          %v3520 = vpack.c.bf16 %v3478, %v3477
          %v3521 = vpack.c.bf16 %v3480, %v3479
          %v3522 = vpack.c.bf16 %v3482, %v3481
          %v3523 = vpack.c.bf16 %v3484, %v3483
          %v3524 = vpack.c.bf16 %v3486, %v3485
          %v3525 = vpack.c.bf16 %v3488, %v3487
          %v3526 = vpack.c.bf16 %v3490, %v3489
          %v3527 = vpack.c.bf16 %v3492, %v3491
          %v3528 = vpack.c.bf16 %v3494, %v3493
          %v3529 = vpack.c.bf16 %v3496, %v3495
          %v3530 = vpack.c.bf16 %v3498, %v3497
          %v3532 = vsel %vm1344, %v3499, 0
          %v3535 = vsel %vm1344, %v3500, 0
          %v3538 = vsel %vm1344, %v3501, 0
          %v3541 = vsel %vm1344, %v3502, 0
          %v3544 = vsel %vm1344, %v3503, 0
          %v3547 = vsel %vm1344, %v3504, 0
          %v3550 = vsel %vm1344, %v3505, 0
          %v3553 = vsel %vm1344, %v3506, 0
          %v3556 = vsel %vm1344, %v3507, 0
          %v3559 = vsel %vm1344, %v3508, 0
          %v3562 = vsel %vm1344, %v3509, 0
          %v3565 = vsel %vm1344, %v3510, 0
          %v3568 = vsel %vm1344, %v3511, 0
          %v3571 = vsel %vm1344, %v3512, 0
          %v3574 = vsel %vm1344, %v3513, 0
          %v3577 = vsel %vm1344, %v3514, 0
          %v3580 = vsel %vm1344, %v3515, 0
          %v3583 = vsel %vm1344, %v3516, 0
          %v3586 = vsel %vm1344, %v3517, 0
          %v3589 = vsel %vm1344, %v3518, 0
          %v3592 = vsel %vm1344, %v3519, 0
          %v3595 = vsel %vm1344, %v3520, 0
          %v3598 = vsel %vm1344, %v3521, 0
          %v3601 = vsel %vm1344, %v3522, 0
          %v3604 = vsel %vm1344, %v3523, 0
          %v3607 = vsel %vm1344, %v3524, 0
          %v3610 = vsel %vm1344, %v3525, 0
          %v3613 = vsel %vm1344, %v3526, 0
          %v3616 = vsel %vm1344, %v3527, 0
          %v3619 = vsel %vm1344, %v3528, 0
          %v3622 = vsel %vm1344, %v3529, 0
          %v3625 = vsel %vm1344, %v3530, 0
          %3627 = vmatprep.subr.bf16.mxu0 0
          %3628 = vmatpush1.bf16.msra.mxu0 0
          %3629 = vmatprep.subr.bf16.mxu0 0
          %3630 = vmatpush1.bf16.msra.mxu0 0
          %3631 = vmatprep.subr.bf16.mxu0 0
          %3632 = vmatpush1.bf16.msra.mxu0 0
          %3633 = vmatprep.subr.bf16.mxu0 0
          %3634 = vmatpush1.bf16.msra.mxu0 0
          %3635 = vmatprep.subr.bf16.mxu0 0
          %3636 = vmatpush1.bf16.msra.mxu0 0
          %3637 = vmatprep.subr.bf16.mxu0 0
          %3638 = vmatpush1.bf16.msra.mxu0 0
          %3639 = vmatprep.subr.bf16.mxu0 0
          %3640 = vmatpush1.bf16.msra.mxu0 %v1841
          %3641 = vmatprep.subr.bf16.mxu0 0
          %3642 = vmatpush1.bf16.msra.mxu0 %v1840
          %3643 = vmatprep.subr.bf16.mxu0 0
          %3644 = vmatpush2.bf16.msra.mxu0 0
          %3645 = vmatprep.subr.bf16.mxu0 0
          %3646 = vmatpush2.bf16.msra.mxu0 0
          %3647 = vmatprep.subr.bf16.mxu0 0
          %3648 = vmatpush2.bf16.msra.mxu0 0
          %3649 = vmatprep.subr.bf16.mxu0 0
          %3650 = vmatpush2.bf16.msra.mxu0 0
          %3651 = vmatprep.subr.bf16.mxu0 0
          %3652 = vmatpush2.bf16.msra.mxu0 0
          %3653 = vmatprep.subr.bf16.mxu0 0
          %3654 = vmatpush2.bf16.msra.mxu0 0
          %3655 = vmatprep.subr.bf16.mxu0 0
          %3656 = vmatpush2.bf16.msra.mxu0 0
          %3657 = vmatprep.subr.bf16.mxu0 0
          %3658 = vmatpush2.bf16.msra.mxu0 0
          %3659 = vmatprep.mubr.bf16.mxu0 0
          %3660 = vmatmul.mubr.bf16.gmra.mxu0 %v3532
          %v3661 = vpop.f32.mrf.mxu0
          %v3662 = vadd.f32 %v1830, %v3661
          %v3663 = vpop.f32.mrf.mxu0
          %v3664 = vpop.f32.mrf.mxu0
          %v3665 = vadd.f32 %v1830, %v3664
          %v3666 = vpop.f32.mrf.mxu0
          %3667 = vmatprep.mubr.bf16.mxu0 0
          %3668 = vmatmul.mubr.bf16.gmra.mxu0 %v3535
          %v3669 = vpop.f32.mrf.mxu0
          %v3670 = vadd.f32 %v1830, %v3669
          %v3671 = vpop.f32.mrf.mxu0
          %v3672 = vpop.f32.mrf.mxu0
          %v3673 = vadd.f32 %v1830, %v3672
          %v3674 = vpop.f32.mrf.mxu0
          %3675 = vmatprep.mubr.bf16.mxu0 0
          %3676 = vmatmul.mubr.bf16.gmra.mxu0 %v3538
          %v3677 = vpop.f32.mrf.mxu0
          %v3678 = vadd.f32 %v1830, %v3677
          %v3679 = vpop.f32.mrf.mxu0
          %v3680 = vpop.f32.mrf.mxu0
          %v3681 = vadd.f32 %v1830, %v3680
          %v3682 = vpop.f32.mrf.mxu0
          %3683 = vmatprep.mubr.bf16.mxu0 0
          %3684 = vmatmul.mubr.bf16.gmra.mxu0 %v3541
          %v3685 = vpop.f32.mrf.mxu0
          %v3686 = vadd.f32 %v1830, %v3685
          %v3687 = vpop.f32.mrf.mxu0
          %v3688 = vpop.f32.mrf.mxu0
          %v3689 = vadd.f32 %v1830, %v3688
          %v3690 = vpop.f32.mrf.mxu0
          %3691 = vmatprep.mubr.bf16.mxu0 0
          %3692 = vmatmul.mubr.bf16.gmra.mxu0 %v3544
          %v3693 = vpop.f32.mrf.mxu0
          %v3694 = vadd.f32 %v1830, %v3693
          %v3695 = vpop.f32.mrf.mxu0
          %v3696 = vpop.f32.mrf.mxu0
          %v3697 = vadd.f32 %v1830, %v3696
          %v3698 = vpop.f32.mrf.mxu0
          %3699 = vmatprep.mubr.bf16.mxu0 0
          %3700 = vmatmul.mubr.bf16.gmra.mxu0 %v3547
          %v3701 = vpop.f32.mrf.mxu0
          %v3702 = vadd.f32 %v1830, %v3701
          %v3703 = vpop.f32.mrf.mxu0
          %v3704 = vpop.f32.mrf.mxu0
          %v3705 = vadd.f32 %v1830, %v3704
          %v3706 = vpop.f32.mrf.mxu0
          %3707 = vmatprep.mubr.bf16.mxu0 0
          %3708 = vmatmul.mubr.bf16.gmra.mxu0 %v3550
          %v3709 = vpop.f32.mrf.mxu0
          %v3710 = vadd.f32 %v1830, %v3709
          %v3711 = vpop.f32.mrf.mxu0
          %v3712 = vpop.f32.mrf.mxu0
          %v3713 = vadd.f32 %v1830, %v3712
          %v3714 = vpop.f32.mrf.mxu0
          %3715 = vmatprep.mubr.bf16.mxu0 0
          %3716 = vmatmul.mubr.bf16.gmra.mxu0 %v3553
          %v3717 = vpop.f32.mrf.mxu0
          %v3718 = vadd.f32 %v1830, %v3717
          %v3719 = vpop.f32.mrf.mxu0
          %v3720 = vpop.f32.mrf.mxu0
          %v3721 = vadd.f32 %v1830, %v3720
          %v3722 = vpop.f32.mrf.mxu0
          %3723 = vmatprep.mubr.bf16.mxu0 0
          %3724 = vmatmul.mubr.bf16.gmra.mxu0 %v3556
          %v3725 = vpop.f32.mrf.mxu0
          %v3726 = vadd.f32 %v1830, %v3725
          %v3727 = vpop.f32.mrf.mxu0
          %v3728 = vpop.f32.mrf.mxu0
          %v3729 = vadd.f32 %v1830, %v3728
          %v3730 = vpop.f32.mrf.mxu0
          %3731 = vmatprep.mubr.bf16.mxu0 0
          %3732 = vmatmul.mubr.bf16.gmra.mxu0 %v3559
          %v3733 = vpop.f32.mrf.mxu0
          %v3734 = vadd.f32 %v1830, %v3733
          %v3735 = vpop.f32.mrf.mxu0
          %v3736 = vpop.f32.mrf.mxu0
          %v3737 = vadd.f32 %v1830, %v3736
          %v3738 = vpop.f32.mrf.mxu0
          %3739 = vmatprep.mubr.bf16.mxu0 0
          %3740 = vmatmul.mubr.bf16.gmra.mxu0 %v3562
          %v3741 = vpop.f32.mrf.mxu0
          %v3742 = vadd.f32 %v1830, %v3741
          %v3743 = vpop.f32.mrf.mxu0
          %v3744 = vpop.f32.mrf.mxu0
          %v3745 = vadd.f32 %v1830, %v3744
          %v3746 = vpop.f32.mrf.mxu0
          %3747 = vmatprep.mubr.bf16.mxu0 0
          %3748 = vmatmul.mubr.bf16.gmra.mxu0 %v3565
          %v3749 = vpop.f32.mrf.mxu0
          %v3750 = vadd.f32 %v1830, %v3749
          %v3751 = vpop.f32.mrf.mxu0
          %v3752 = vpop.f32.mrf.mxu0
          %v3753 = vadd.f32 %v1830, %v3752
          %v3754 = vpop.f32.mrf.mxu0
          %3755 = vmatprep.mubr.bf16.mxu0 0
          %3756 = vmatmul.mubr.bf16.gmra.mxu0 %v3568
          %v3757 = vpop.f32.mrf.mxu0
          %v3758 = vadd.f32 %v1830, %v3757
          %v3759 = vpop.f32.mrf.mxu0
          %v3760 = vpop.f32.mrf.mxu0
          %v3761 = vadd.f32 %v1830, %v3760
          %v3762 = vpop.f32.mrf.mxu0
          %3763 = vmatprep.mubr.bf16.mxu0 0
          %3764 = vmatmul.mubr.bf16.gmra.mxu0 %v3571
          %v3765 = vpop.f32.mrf.mxu0
          %v3766 = vadd.f32 %v1830, %v3765
          %v3767 = vpop.f32.mrf.mxu0
          %v3768 = vpop.f32.mrf.mxu0
          %v3769 = vadd.f32 %v1830, %v3768
          %v3770 = vpop.f32.mrf.mxu0
          %3771 = vmatprep.mubr.bf16.mxu0 0
          %3772 = vmatmul.mubr.bf16.gmra.mxu0 %v3574
          %v3773 = vpop.f32.mrf.mxu0
          %v3774 = vadd.f32 %v1830, %v3773
          %v3775 = vpop.f32.mrf.mxu0
          %v3776 = vpop.f32.mrf.mxu0
          %v3777 = vadd.f32 %v1830, %v3776
          %v3778 = vpop.f32.mrf.mxu0
          %3779 = vmatprep.mubr.bf16.mxu0 0
          %3780 = vmatmul.mubr.bf16.gmra.mxu0 %v3577
          %v3781 = vpop.f32.mrf.mxu0
          %v3782 = vadd.f32 %v1830, %v3781
          %v3783 = vpop.f32.mrf.mxu0
          %v3784 = vpop.f32.mrf.mxu0
          %v3785 = vadd.f32 %v1830, %v3784
          %v3786 = vpop.f32.mrf.mxu0
          %3787 = vmatprep.mubr.bf16.mxu0 0
          %3788 = vmatmul.mubr.bf16.gmra.mxu0 %v3580
          %v3789 = vpop.f32.mrf.mxu0
          %v3790 = vadd.f32 %v1830, %v3789
          %v3791 = vpop.f32.mrf.mxu0
          %v3792 = vpop.f32.mrf.mxu0
          %v3793 = vadd.f32 %v1830, %v3792
          %v3794 = vpop.f32.mrf.mxu0
          %3795 = vmatprep.mubr.bf16.mxu0 0
          %3796 = vmatmul.mubr.bf16.gmra.mxu0 %v3583
          %v3797 = vpop.f32.mrf.mxu0
          %v3798 = vadd.f32 %v1830, %v3797
          %v3799 = vpop.f32.mrf.mxu0
          %v3800 = vpop.f32.mrf.mxu0
          %v3801 = vadd.f32 %v1830, %v3800
          %v3802 = vpop.f32.mrf.mxu0
          %3803 = vmatprep.mubr.bf16.mxu0 0
          %3804 = vmatmul.mubr.bf16.gmra.mxu0 %v3586
          %v3805 = vpop.f32.mrf.mxu0
          %v3806 = vadd.f32 %v1830, %v3805
          %v3807 = vpop.f32.mrf.mxu0
          %v3808 = vpop.f32.mrf.mxu0
          %v3809 = vadd.f32 %v1830, %v3808
          %v3810 = vpop.f32.mrf.mxu0
          %3811 = vmatprep.mubr.bf16.mxu0 0
          %3812 = vmatmul.mubr.bf16.gmra.mxu0 %v3589
          %v3813 = vpop.f32.mrf.mxu0
          %v3814 = vadd.f32 %v1830, %v3813
          %v3815 = vpop.f32.mrf.mxu0
          %v3816 = vpop.f32.mrf.mxu0
          %v3817 = vadd.f32 %v1830, %v3816
          %v3818 = vpop.f32.mrf.mxu0
          %3819 = vmatprep.mubr.bf16.mxu0 0
          %3820 = vmatmul.mubr.bf16.gmra.mxu0 %v3592
          %v3821 = vpop.f32.mrf.mxu0
          %v3822 = vadd.f32 %v1830, %v3821
          %v3823 = vpop.f32.mrf.mxu0
          %v3824 = vpop.f32.mrf.mxu0
          %v3825 = vadd.f32 %v1830, %v3824
          %v3826 = vpop.f32.mrf.mxu0
          %3827 = vmatprep.mubr.bf16.mxu0 0
          %3828 = vmatmul.mubr.bf16.gmra.mxu0 %v3595
          %v3829 = vpop.f32.mrf.mxu0
          %v3830 = vadd.f32 %v1830, %v3829
          %v3831 = vpop.f32.mrf.mxu0
          %v3832 = vpop.f32.mrf.mxu0
          %v3833 = vadd.f32 %v1830, %v3832
          %v3834 = vpop.f32.mrf.mxu0
          %3835 = vmatprep.mubr.bf16.mxu0 0
          %3836 = vmatmul.mubr.bf16.gmra.mxu0 %v3598
          %v3837 = vpop.f32.mrf.mxu0
          %v3838 = vadd.f32 %v1830, %v3837
          %v3839 = vpop.f32.mrf.mxu0
          %v3840 = vpop.f32.mrf.mxu0
          %v3841 = vadd.f32 %v1830, %v3840
          %v3842 = vpop.f32.mrf.mxu0
          %3843 = vmatprep.mubr.bf16.mxu0 0
          %3844 = vmatmul.mubr.bf16.gmra.mxu0 %v3601
          %v3845 = vpop.f32.mrf.mxu0
          %v3846 = vadd.f32 %v1830, %v3845
          %v3847 = vpop.f32.mrf.mxu0
          %v3848 = vpop.f32.mrf.mxu0
          %v3849 = vadd.f32 %v1830, %v3848
          %v3850 = vpop.f32.mrf.mxu0
          %3851 = vmatprep.mubr.bf16.mxu0 0
          %3852 = vmatmul.mubr.bf16.gmra.mxu0 %v3604
          %v3853 = vpop.f32.mrf.mxu0
          %v3854 = vadd.f32 %v1830, %v3853
          %v3855 = vpop.f32.mrf.mxu0
          %v3856 = vpop.f32.mrf.mxu0
          %v3857 = vadd.f32 %v1830, %v3856
          %v3858 = vpop.f32.mrf.mxu0
          %3859 = vmatprep.mubr.bf16.mxu0 0
          %3860 = vmatmul.mubr.bf16.gmra.mxu0 %v3607
          %v3861 = vpop.f32.mrf.mxu0
          %v3862 = vadd.f32 %v1830, %v3861
          %v3863 = vpop.f32.mrf.mxu0
          %v3864 = vpop.f32.mrf.mxu0
          %v3865 = vadd.f32 %v1830, %v3864
          %v3866 = vpop.f32.mrf.mxu0
          %3867 = vmatprep.mubr.bf16.mxu0 0
          %3868 = vmatmul.mubr.bf16.gmra.mxu0 %v3610
          %v3869 = vpop.f32.mrf.mxu0
          %v3870 = vadd.f32 %v1830, %v3869
          %v3871 = vpop.f32.mrf.mxu0
          %v3872 = vpop.f32.mrf.mxu0
          %v3873 = vadd.f32 %v1830, %v3872
          %v3874 = vpop.f32.mrf.mxu0
          %3875 = vmatprep.mubr.bf16.mxu0 0
          %3876 = vmatmul.mubr.bf16.gmra.mxu0 %v3613
          %v3877 = vpop.f32.mrf.mxu0
          %v3878 = vadd.f32 %v1830, %v3877
          %v3879 = vpop.f32.mrf.mxu0
          %v3880 = vpop.f32.mrf.mxu0
          %v3881 = vadd.f32 %v1830, %v3880
          %v3882 = vpop.f32.mrf.mxu0
          %3883 = vmatprep.mubr.bf16.mxu0 0
          %3884 = vmatmul.mubr.bf16.gmra.mxu0 %v3616
          %v3885 = vpop.f32.mrf.mxu0
          %v3886 = vadd.f32 %v1830, %v3885
          %v3887 = vpop.f32.mrf.mxu0
          %v3888 = vpop.f32.mrf.mxu0
          %v3889 = vadd.f32 %v1830, %v3888
          %v3890 = vpop.f32.mrf.mxu0
          %3891 = vmatprep.mubr.bf16.mxu0 0
          %3892 = vmatmul.mubr.bf16.gmra.mxu0 %v3619
          %v3893 = vpop.f32.mrf.mxu0
          %v3894 = vadd.f32 %v1830, %v3893
          %v3895 = vpop.f32.mrf.mxu0
          %v3896 = vpop.f32.mrf.mxu0
          %v3897 = vadd.f32 %v1830, %v3896
          %v3898 = vpop.f32.mrf.mxu0
          %3899 = vmatprep.mubr.bf16.mxu0 0
          %3900 = vmatmul.mubr.bf16.gmra.mxu0 %v3622
          %v3901 = vpop.f32.mrf.mxu0
          %v3902 = vadd.f32 %v1830, %v3901
          %v3903 = vpop.f32.mrf.mxu0
          %v3904 = vpop.f32.mrf.mxu0
          %v3905 = vadd.f32 %v1830, %v3904
          %v3906 = vpop.f32.mrf.mxu0
          %3907 = vmatprep.mubr.bf16.mxu0 0
          %3908 = vmatmul.mubr.bf16.gmra.mxu0 %v3625
          %v3909 = vpop.f32.mrf.mxu0
          %v3910 = vadd.f32 %v1830, %v3909
          %v3911 = vpop.f32.mrf.mxu0
          %v3912 = vpop.f32.mrf.mxu0
          %v3913 = vadd.f32 %v1830, %v3912
          %v3914 = vpop.f32.mrf.mxu0
          %3915 = vdwg.mxu0
          %v3916 = vsel %vm2485, %v3662, %v683
          %v3917 = vsel %vm2486, %v3665, %v684
          %v3918 = vsel %vm2487, %v3670, %v685
          %v3919 = vsel %vm2488, %v3673, %v686
          %v3920 = vsel %vm2489, %v3678, %v687
          %v3921 = vsel %vm2490, %v3681, %v688
          %v3922 = vsel %vm2491, %v3686, %v689
          %v3923 = vsel %vm2492, %v3689, %v690
          %v3924 = vsel %vm2493, %v3694, %v691
          %v3925 = vsel %vm2494, %v3697, %v692
          %v3926 = vsel %vm2495, %v3702, %v693
          %v3927 = vsel %vm2496, %v3705, %v694
          %v3928 = vsel %vm2497, %v3710, %v695
          %v3929 = vsel %vm2498, %v3713, %v696
          %v3930 = vsel %vm2499, %v3718, %v697
          %v3931 = vsel %vm2500, %v3721, %v698
          %v3932 = vsel %vm2501, %v3726, %v699
          %v3933 = vsel %vm2502, %v3729, %v700
          %v3934 = vsel %vm2503, %v3734, %v701
          %v3935 = vsel %vm2504, %v3737, %v702
          %v3936 = vsel %vm2505, %v3742, %v703
          %v3937 = vsel %vm2506, %v3745, %v704
          %v3938 = vsel %vm2507, %v3750, %v705
          %v3939 = vsel %vm2508, %v3753, %v706
          %v3940 = vsel %vm2509, %v3758, %v707
          %v3941 = vsel %vm2510, %v3761, %v708
          %v3942 = vsel %vm2511, %v3766, %v709
          %v3943 = vsel %vm2512, %v3769, %v710
          %v3944 = vsel %vm2513, %v3774, %v711
          %v3945 = vsel %vm2514, %v3777, %v712
          %v3946 = vsel %vm2515, %v3782, %v713
          %v3947 = vsel %vm2516, %v3785, %v714
          %v3948 = vsel %vm2517, %v3790, %v715
          %v3949 = vsel %vm2518, %v3793, %v716
          %v3950 = vsel %vm2519, %v3798, %v717
          %v3951 = vsel %vm2520, %v3801, %v718
          %v3952 = vsel %vm2521, %v3806, %v719
          %v3953 = vsel %vm2522, %v3809, %v720
          %v3954 = vsel %vm2523, %v3814, %v721
          %v3955 = vsel %vm2524, %v3817, %v722
          %v3956 = vsel %vm2525, %v3822, %v723
          %v3957 = vsel %vm2526, %v3825, %v724
          %v3958 = vsel %vm2527, %v3830, %v725
          %v3959 = vsel %vm2528, %v3833, %v726
          %v3960 = vsel %vm2529, %v3838, %v727
          %v3961 = vsel %vm2530, %v3841, %v728
          %v3962 = vsel %vm2531, %v3846, %v729
          %v3963 = vsel %vm2532, %v3849, %v730
          %v3964 = vsel %vm2533, %v3854, %v731
          %v3965 = vsel %vm2534, %v3857, %v732
          %v3966 = vsel %vm2535, %v3862, %v733
          %v3967 = vsel %vm2536, %v3865, %v734
          %v3968 = vsel %vm2537, %v3870, %v735
          %v3969 = vsel %vm2538, %v3873, %v736
          %v3970 = vsel %vm2539, %v3878, %v737
          %v3971 = vsel %vm2540, %v3881, %v738
          %v3972 = vsel %vm2541, %v3886, %v739
          %v3973 = vsel %vm2542, %v3889, %v740
          %v3974 = vsel %vm2543, %v3894, %v741
          %v3975 = vsel %vm2544, %v3897, %v742
          %v3976 = vsel %vm2545, %v3902, %v743
          %v3977 = vsel %vm2546, %v3905, %v744
          %v3978 = vsel %vm2547, %v3910, %v745
          %v3979 = vsel %vm2548, %v3913, %v746
        $region73: #{tpu_custom_call.1} parent=67 // loop_footer
          %s616 = sadd.s32 %s614, 1
        $region74: #{tpu_custom_call.1} parent=67 // loop_footer_branch
          %613 = sbr.rel target = $region70
        $region75: #{tpu_custom_call.1} parent=67 // loop_exit
          _
        %4044 = vrot.lane.b32.xlu0 %v683, 64
        %v4045 = vpop.permute.xlu0 %4044
        %4046 = vrot.lane.b32.xlu0 %v684, 64
        %v4047 = vpop.permute.xlu0 %4046
        %4048 = vrot.lane.b32.xlu0 %v685, 64
        %v4049 = vpop.permute.xlu0 %4048
        %4050 = vrot.lane.b32.xlu0 %v686, 64
        %v4051 = vpop.permute.xlu0 %4050
        %4052 = vrot.lane.b32.xlu0 %v687, 64
        %v4053 = vpop.permute.xlu0 %4052
        %4054 = vrot.lane.b32.xlu0 %v688, 64
        %v4055 = vpop.permute.xlu0 %4054
        %4056 = vrot.lane.b32.xlu0 %v689, 64
        %v4057 = vpop.permute.xlu0 %4056
        %4058 = vrot.lane.b32.xlu0 %v690, 64
        %v4059 = vpop.permute.xlu0 %4058
        %4060 = vrot.lane.b32.xlu0 %v691, 64
        %v4061 = vpop.permute.xlu0 %4060
        %4062 = vrot.lane.b32.xlu0 %v692, 64
        %v4063 = vpop.permute.xlu0 %4062
        %4064 = vrot.lane.b32.xlu0 %v693, 64
        %v4065 = vpop.permute.xlu0 %4064
        %4066 = vrot.lane.b32.xlu0 %v694, 64
        %v4067 = vpop.permute.xlu0 %4066
        %4068 = vrot.lane.b32.xlu0 %v695, 64
        %v4069 = vpop.permute.xlu0 %4068
        %4070 = vrot.lane.b32.xlu0 %v696, 64
        %v4071 = vpop.permute.xlu0 %4070
        %4072 = vrot.lane.b32.xlu0 %v697, 64
        %v4073 = vpop.permute.xlu0 %4072
        %4074 = vrot.lane.b32.xlu0 %v698, 64
        %v4075 = vpop.permute.xlu0 %4074
        %4076 = vrot.lane.b32.xlu0 %v699, 64
        %v4077 = vpop.permute.xlu0 %4076
        %4078 = vrot.lane.b32.xlu0 %v700, 64
        %v4079 = vpop.permute.xlu0 %4078
        %4080 = vrot.lane.b32.xlu0 %v701, 64
        %v4081 = vpop.permute.xlu0 %4080
        %4082 = vrot.lane.b32.xlu0 %v702, 64
        %v4083 = vpop.permute.xlu0 %4082
        %4084 = vrot.lane.b32.xlu0 %v703, 64
        %v4085 = vpop.permute.xlu0 %4084
        %4086 = vrot.lane.b32.xlu0 %v704, 64
        %v4087 = vpop.permute.xlu0 %4086
        %4088 = vrot.lane.b32.xlu0 %v705, 64
        %v4089 = vpop.permute.xlu0 %4088
        %4090 = vrot.lane.b32.xlu0 %v706, 64
        %v4091 = vpop.permute.xlu0 %4090
        %4092 = vrot.lane.b32.xlu0 %v707, 64
        %v4093 = vpop.permute.xlu0 %4092
        %4094 = vrot.lane.b32.xlu0 %v708, 64
        %v4095 = vpop.permute.xlu0 %4094
        %4096 = vrot.lane.b32.xlu0 %v709, 64
        %v4097 = vpop.permute.xlu0 %4096
        %4098 = vrot.lane.b32.xlu0 %v710, 64
        %v4099 = vpop.permute.xlu0 %4098
        %4100 = vrot.lane.b32.xlu0 %v711, 64
        %v4101 = vpop.permute.xlu0 %4100
        %4102 = vrot.lane.b32.xlu0 %v712, 64
        %v4103 = vpop.permute.xlu0 %4102
        %4104 = vrot.lane.b32.xlu0 %v713, 64
        %v4105 = vpop.permute.xlu0 %4104
        %4106 = vrot.lane.b32.xlu0 %v714, 64
        %v4107 = vpop.permute.xlu0 %4106
        %4108 = vrot.lane.b32.xlu0 %v715, 64
        %v4109 = vpop.permute.xlu0 %4108
        %4110 = vrot.lane.b32.xlu0 %v716, 64
        %v4111 = vpop.permute.xlu0 %4110
        %4112 = vrot.lane.b32.xlu0 %v717, 64
        %v4113 = vpop.permute.xlu0 %4112
        %4114 = vrot.lane.b32.xlu0 %v718, 64
        %v4115 = vpop.permute.xlu0 %4114
        %4116 = vrot.lane.b32.xlu0 %v719, 64
        %v4117 = vpop.permute.xlu0 %4116
        %4118 = vrot.lane.b32.xlu0 %v720, 64
        %v4119 = vpop.permute.xlu0 %4118
        %4120 = vrot.lane.b32.xlu0 %v721, 64
        %v4121 = vpop.permute.xlu0 %4120
        %4122 = vrot.lane.b32.xlu0 %v722, 64
        %v4123 = vpop.permute.xlu0 %4122
        %4124 = vrot.lane.b32.xlu0 %v723, 64
        %v4125 = vpop.permute.xlu0 %4124
        %4126 = vrot.lane.b32.xlu0 %v724, 64
        %v4127 = vpop.permute.xlu0 %4126
        %4128 = vrot.lane.b32.xlu0 %v725, 64
        %v4129 = vpop.permute.xlu0 %4128
        %4130 = vrot.lane.b32.xlu0 %v726, 64
        %v4131 = vpop.permute.xlu0 %4130
        %4132 = vrot.lane.b32.xlu0 %v727, 64
        %v4133 = vpop.permute.xlu0 %4132
        %4134 = vrot.lane.b32.xlu0 %v728, 64
        %v4135 = vpop.permute.xlu0 %4134
        %4136 = vrot.lane.b32.xlu0 %v729, 64
        %v4137 = vpop.permute.xlu0 %4136
        %4138 = vrot.lane.b32.xlu0 %v730, 64
        %v4139 = vpop.permute.xlu0 %4138
        %4140 = vrot.lane.b32.xlu0 %v731, 64
        %v4141 = vpop.permute.xlu0 %4140
        %4142 = vrot.lane.b32.xlu0 %v732, 64
        %v4143 = vpop.permute.xlu0 %4142
        %4144 = vrot.lane.b32.xlu0 %v733, 64
        %v4145 = vpop.permute.xlu0 %4144
        %4146 = vrot.lane.b32.xlu0 %v734, 64
        %v4147 = vpop.permute.xlu0 %4146
        %4148 = vrot.lane.b32.xlu0 %v735, 64
        %v4149 = vpop.permute.xlu0 %4148
        %4150 = vrot.lane.b32.xlu0 %v736, 64
        %v4151 = vpop.permute.xlu0 %4150
        %4152 = vrot.lane.b32.xlu0 %v737, 64
        %v4153 = vpop.permute.xlu0 %4152
        %4154 = vrot.lane.b32.xlu0 %v738, 64
        %v4155 = vpop.permute.xlu0 %4154
        %4156 = vrot.lane.b32.xlu0 %v739, 64
        %v4157 = vpop.permute.xlu0 %4156
        %4158 = vrot.lane.b32.xlu0 %v740, 64
        %v4159 = vpop.permute.xlu0 %4158
        %4160 = vrot.lane.b32.xlu0 %v741, 64
        %v4161 = vpop.permute.xlu0 %4160
        %4162 = vrot.lane.b32.xlu0 %v742, 64
        %v4163 = vpop.permute.xlu0 %4162
        %4164 = vrot.lane.b32.xlu0 %v743, 64
        %v4165 = vpop.permute.xlu0 %4164
        %4166 = vrot.lane.b32.xlu0 %v744, 64
        %v4167 = vpop.permute.xlu0 %4166
        %4168 = vrot.lane.b32.xlu0 %v745, 64
        %v4169 = vpop.permute.xlu0 %4168
        %4170 = vrot.lane.b32.xlu0 %v746, 64
        %v4171 = vpop.permute.xlu0 %4170
        %vm4236 = vcmask 523264
        %v4237 = vsel %vm4236, %v619, %v4045
        %v4238 = vsel %vm4236, %v620, %v4047
        %v4239 = vsel %vm4236, %v621, %v4049
        %v4240 = vsel %vm4236, %v622, %v4051
        %v4241 = vsel %vm4236, %v623, %v4053
        %v4242 = vsel %vm4236, %v624, %v4055
        %v4243 = vsel %vm4236, %v625, %v4057
        %v4244 = vsel %vm4236, %v626, %v4059
        %v4245 = vsel %vm4236, %v627, %v4061
        %v4246 = vsel %vm4236, %v628, %v4063
        %v4247 = vsel %vm4236, %v629, %v4065
        %v4248 = vsel %vm4236, %v630, %v4067
        %v4249 = vsel %vm4236, %v631, %v4069
        %v4250 = vsel %vm4236, %v632, %v4071
        %v4251 = vsel %vm4236, %v633, %v4073
        %v4252 = vsel %vm4236, %v634, %v4075
        %v4253 = vsel %vm4236, %v635, %v4077
        %v4254 = vsel %vm4236, %v636, %v4079
        %v4255 = vsel %vm4236, %v637, %v4081
        %v4256 = vsel %vm4236, %v638, %v4083
        %v4257 = vsel %vm4236, %v639, %v4085
        %v4258 = vsel %vm4236, %v640, %v4087
        %v4259 = vsel %vm4236, %v641, %v4089
        %v4260 = vsel %vm4236, %v642, %v4091
        %v4261 = vsel %vm4236, %v643, %v4093
        %v4262 = vsel %vm4236, %v644, %v4095
        %v4263 = vsel %vm4236, %v645, %v4097
        %v4264 = vsel %vm4236, %v646, %v4099
        %v4265 = vsel %vm4236, %v647, %v4101
        %v4266 = vsel %vm4236, %v648, %v4103
        %v4267 = vsel %vm4236, %v649, %v4105
        %v4268 = vsel %vm4236, %v650, %v4107
        %v4269 = vsel %vm4236, %v651, %v4109
        %v4270 = vsel %vm4236, %v652, %v4111
        %v4271 = vsel %vm4236, %v653, %v4113
        %v4272 = vsel %vm4236, %v654, %v4115
        %v4273 = vsel %vm4236, %v655, %v4117
        %v4274 = vsel %vm4236, %v656, %v4119
        %v4275 = vsel %vm4236, %v657, %v4121
        %v4276 = vsel %vm4236, %v658, %v4123
        %v4277 = vsel %vm4236, %v659, %v4125
        %v4278 = vsel %vm4236, %v660, %v4127
        %v4279 = vsel %vm4236, %v661, %v4129
        %v4280 = vsel %vm4236, %v662, %v4131
        %v4281 = vsel %vm4236, %v663, %v4133
        %v4282 = vsel %vm4236, %v664, %v4135
        %v4283 = vsel %vm4236, %v665, %v4137
        %v4284 = vsel %vm4236, %v666, %v4139
        %v4285 = vsel %vm4236, %v667, %v4141
        %v4286 = vsel %vm4236, %v668, %v4143
        %v4287 = vsel %vm4236, %v669, %v4145
        %v4288 = vsel %vm4236, %v670, %v4147
        %v4289 = vsel %vm4236, %v671, %v4149
        %v4290 = vsel %vm4236, %v672, %v4151
        %v4291 = vsel %vm4236, %v673, %v4153
        %v4292 = vsel %vm4236, %v674, %v4155
        %v4293 = vsel %vm4236, %v675, %v4157
        %v4294 = vsel %vm4236, %v676, %v4159
        %v4295 = vsel %vm4236, %v677, %v4161
        %v4296 = vsel %vm4236, %v678, %v4163
        %v4297 = vsel %vm4236, %v679, %v4165
        %v4298 = vsel %vm4236, %v680, %v4167
        %v4299 = vsel %vm4236, %v681, %v4169
        %v4300 = vsel %vm4236, %v682, %v4171
        %v4301 = vpack.c.bf16 %v4238, %v4237
        %v4302 = vpack.c.bf16 %v4240, %v4239
        %v4303 = vpack.c.bf16 %v4242, %v4241
        %v4304 = vpack.c.bf16 %v4244, %v4243
        %v4305 = vpack.c.bf16 %v4246, %v4245
        %v4306 = vpack.c.bf16 %v4248, %v4247
        %v4307 = vpack.c.bf16 %v4250, %v4249
        %v4308 = vpack.c.bf16 %v4252, %v4251
        %v4309 = vpack.c.bf16 %v4254, %v4253
        %v4310 = vpack.c.bf16 %v4256, %v4255
        %v4311 = vpack.c.bf16 %v4258, %v4257
        %v4312 = vpack.c.bf16 %v4260, %v4259
        %v4313 = vpack.c.bf16 %v4262, %v4261
        %v4314 = vpack.c.bf16 %v4264, %v4263
        %v4315 = vpack.c.bf16 %v4266, %v4265
        %v4316 = vpack.c.bf16 %v4268, %v4267
        %v4317 = vpack.c.bf16 %v4270, %v4269
        %v4318 = vpack.c.bf16 %v4272, %v4271
        %v4319 = vpack.c.bf16 %v4274, %v4273
        %v4320 = vpack.c.bf16 %v4276, %v4275
        %v4321 = vpack.c.bf16 %v4278, %v4277
        %v4322 = vpack.c.bf16 %v4280, %v4279
        %v4323 = vpack.c.bf16 %v4282, %v4281
        %v4324 = vpack.c.bf16 %v4284, %v4283
        %v4325 = vpack.c.bf16 %v4286, %v4285
        %v4326 = vpack.c.bf16 %v4288, %v4287
        %v4327 = vpack.c.bf16 %v4290, %v4289
        %v4328 = vpack.c.bf16 %v4292, %v4291
        %v4329 = vpack.c.bf16 %v4294, %v4293
        %v4330 = vpack.c.bf16 %v4296, %v4295
        %v4331 = vpack.c.bf16 %v4298, %v4297
        %v4332 = vpack.c.bf16 %v4300, %v4299
        %v4365 = vunpack.c.l.b16 %v4301
        %v4366 = vunpack.c.h.b16 %v4301
        %v4367 = vunpack.c.l.b16 %v4302
        %v4368 = vunpack.c.h.b16 %v4302
        %v4369 = vunpack.c.l.b16 %v4303
        %v4370 = vunpack.c.h.b16 %v4303
        %v4371 = vunpack.c.l.b16 %v4304
        %v4372 = vunpack.c.h.b16 %v4304
        %v4373 = vunpack.c.l.b16 %v4305
        %v4374 = vunpack.c.h.b16 %v4305
        %v4375 = vunpack.c.l.b16 %v4306
        %v4376 = vunpack.c.h.b16 %v4306
        %v4377 = vunpack.c.l.b16 %v4307
        %v4378 = vunpack.c.h.b16 %v4307
        %v4379 = vunpack.c.l.b16 %v4308
        %v4380 = vunpack.c.h.b16 %v4308
        %v4381 = vunpack.c.l.b16 %v4309
        %v4382 = vunpack.c.h.b16 %v4309
        %v4383 = vunpack.c.l.b16 %v4310
        %v4384 = vunpack.c.h.b16 %v4310
        %v4385 = vunpack.c.l.b16 %v4311
        %v4386 = vunpack.c.h.b16 %v4311
        %v4387 = vunpack.c.l.b16 %v4312
        %v4388 = vunpack.c.h.b16 %v4312
        %v4389 = vunpack.c.l.b16 %v4313
        %v4390 = vunpack.c.h.b16 %v4313
        %v4391 = vunpack.c.l.b16 %v4314
        %v4392 = vunpack.c.h.b16 %v4314
        %v4393 = vunpack.c.l.b16 %v4315
        %v4394 = vunpack.c.h.b16 %v4315
        %v4395 = vunpack.c.l.b16 %v4316
        %v4396 = vunpack.c.h.b16 %v4316
        %v4397 = vunpack.c.l.b16 %v4317
        %v4398 = vunpack.c.h.b16 %v4317
        %v4399 = vunpack.c.l.b16 %v4318
        %v4400 = vunpack.c.h.b16 %v4318
        %v4401 = vunpack.c.l.b16 %v4319
        %v4402 = vunpack.c.h.b16 %v4319
        %v4403 = vunpack.c.l.b16 %v4320
        %v4404 = vunpack.c.h.b16 %v4320
        %v4405 = vunpack.c.l.b16 %v4321
        %v4406 = vunpack.c.h.b16 %v4321
        %v4407 = vunpack.c.l.b16 %v4322
        %v4408 = vunpack.c.h.b16 %v4322
        %v4409 = vunpack.c.l.b16 %v4323
        %v4410 = vunpack.c.h.b16 %v4323
        %v4411 = vunpack.c.l.b16 %v4324
        %v4412 = vunpack.c.h.b16 %v4324
        %v4413 = vunpack.c.l.b16 %v4325
        %v4414 = vunpack.c.h.b16 %v4325
        %v4415 = vunpack.c.l.b16 %v4326
        %v4416 = vunpack.c.h.b16 %v4326
        %v4417 = vunpack.c.l.b16 %v4327
        %v4418 = vunpack.c.h.b16 %v4327
        %v4419 = vunpack.c.l.b16 %v4328
        %v4420 = vunpack.c.h.b16 %v4328
        %v4421 = vunpack.c.l.b16 %v4329
        %v4422 = vunpack.c.h.b16 %v4329
        %v4423 = vunpack.c.l.b16 %v4330
        %v4424 = vunpack.c.h.b16 %v4330
        %v4425 = vunpack.c.l.b16 %v4331
        %v4426 = vunpack.c.h.b16 %v4331
        %v4427 = vunpack.c.l.b16 %v4332
        %v4428 = vunpack.c.h.b16 %v4332
        %v4429 = vpack.c.b16 %v4365, %v4365
        %v4430 = vpack.c.b16 %v4366, %v4366
        %v4431 = vpack.c.b16 %v4367, %v4367
        %v4432 = vpack.c.b16 %v4368, %v4368
        %v4433 = vpack.c.b16 %v4369, %v4369
        %v4434 = vpack.c.b16 %v4370, %v4370
        %v4435 = vpack.c.b16 %v4371, %v4371
        %v4436 = vpack.c.b16 %v4372, %v4372
        %v4437 = vpack.c.b16 %v4373, %v4373
        %v4438 = vpack.c.b16 %v4374, %v4374
        %v4439 = vpack.c.b16 %v4375, %v4375
        %v4440 = vpack.c.b16 %v4376, %v4376
        %v4441 = vpack.c.b16 %v4377, %v4377
        %v4442 = vpack.c.b16 %v4378, %v4378
        %v4443 = vpack.c.b16 %v4379, %v4379
        %v4444 = vpack.c.b16 %v4380, %v4380
        %v4445 = vpack.c.b16 %v4381, %v4381
        %v4446 = vpack.c.b16 %v4382, %v4382
        %v4447 = vpack.c.b16 %v4383, %v4383
        %v4448 = vpack.c.b16 %v4384, %v4384
        %v4449 = vpack.c.b16 %v4385, %v4385
        %v4450 = vpack.c.b16 %v4386, %v4386
        %v4451 = vpack.c.b16 %v4387, %v4387
        %v4452 = vpack.c.b16 %v4388, %v4388
        %v4453 = vpack.c.b16 %v4389, %v4389
        %v4454 = vpack.c.b16 %v4390, %v4390
        %v4455 = vpack.c.b16 %v4391, %v4391
        %v4456 = vpack.c.b16 %v4392, %v4392
        %v4457 = vpack.c.b16 %v4393, %v4393
        %v4458 = vpack.c.b16 %v4394, %v4394
        %v4459 = vpack.c.b16 %v4395, %v4395
        %v4460 = vpack.c.b16 %v4396, %v4396
        %v4461 = vpack.c.b16 %v4397, %v4397
        %v4462 = vpack.c.b16 %v4398, %v4398
        %v4463 = vpack.c.b16 %v4399, %v4399
        %v4464 = vpack.c.b16 %v4400, %v4400
        %v4465 = vpack.c.b16 %v4401, %v4401
        %v4466 = vpack.c.b16 %v4402, %v4402
        %v4467 = vpack.c.b16 %v4403, %v4403
        %v4468 = vpack.c.b16 %v4404, %v4404
        %v4469 = vpack.c.b16 %v4405, %v4405
        %v4470 = vpack.c.b16 %v4406, %v4406
        %v4471 = vpack.c.b16 %v4407, %v4407
        %v4472 = vpack.c.b16 %v4408, %v4408
        %v4473 = vpack.c.b16 %v4409, %v4409
        %v4474 = vpack.c.b16 %v4410, %v4410
        %v4475 = vpack.c.b16 %v4411, %v4411
        %v4476 = vpack.c.b16 %v4412, %v4412
        %v4477 = vpack.c.b16 %v4413, %v4413
        %v4478 = vpack.c.b16 %v4414, %v4414
        %v4479 = vpack.c.b16 %v4415, %v4415
        %v4480 = vpack.c.b16 %v4416, %v4416
        %v4481 = vpack.c.b16 %v4417, %v4417
        %v4482 = vpack.c.b16 %v4418, %v4418
        %v4483 = vpack.c.b16 %v4419, %v4419
        %v4484 = vpack.c.b16 %v4420, %v4420
        %v4485 = vpack.c.b16 %v4421, %v4421
        %v4486 = vpack.c.b16 %v4422, %v4422
        %v4487 = vpack.c.b16 %v4423, %v4423
        %v4488 = vpack.c.b16 %v4424, %v4424
        %v4489 = vpack.c.b16 %v4425, %v4425
        %v4490 = vpack.c.b16 %v4426, %v4426
        %v4491 = vpack.c.b16 %v4427, %v4427
        %v4492 = vpack.c.b16 %v4428, %v4428
        %4557 = vst [vmem:[%s435] sm:$0xf] %v4429
        %4558 = vst [vmem:[%s435 + $0x4] sm:$0xf] %v4430
        %4559 = vst [vmem:[%s435 + $0x8] sm:$0xf] %v4431
        %4560 = vst [vmem:[%s435 + $0xc] sm:$0xf] %v4432
        %4561 = vst [vmem:[%s435 + $0x10] sm:$0xf] %v4433
        %4562 = vst [vmem:[%s435 + $0x14] sm:$0xf] %v4434
        %4563 = vst [vmem:[%s435 + $0x18] sm:$0xf] %v4435
        %4564 = vst [vmem:[%s435 + $0x1c] sm:$0xf] %v4436
        %4565 = vst [vmem:[%s435 + $0x20] sm:$0xf] %v4437
        %4566 = vst [vmem:[%s435 + $0x24] sm:$0xf] %v4438
        %4567 = vst [vmem:[%s435 + $0x28] sm:$0xf] %v4439
        %4568 = vst [vmem:[%s435 + $0x2c] sm:$0xf] %v4440
        %4569 = vst [vmem:[%s435 + $0x30] sm:$0xf] %v4441
        %4570 = vst [vmem:[%s435 + $0x34] sm:$0xf] %v4442
        %4571 = vst [vmem:[%s435 + $0x38] sm:$0xf] %v4443
        %4572 = vst [vmem:[%s435 + $0x3c] sm:$0xf] %v4444
        %4573 = vst [vmem:[%s435 + $0x40] sm:$0xf] %v4445
        %4574 = vst [vmem:[%s435 + $0x44] sm:$0xf] %v4446
        %4575 = vst [vmem:[%s435 + $0x48] sm:$0xf] %v4447
        %4576 = vst [vmem:[%s435 + $0x4c] sm:$0xf] %v4448
        %4577 = vst [vmem:[%s435 + $0x50] sm:$0xf] %v4449
        %4578 = vst [vmem:[%s435 + $0x54] sm:$0xf] %v4450
        %4579 = vst [vmem:[%s435 + $0x58] sm:$0xf] %v4451
        %4580 = vst [vmem:[%s435 + $0x5c] sm:$0xf] %v4452
        %4581 = vst [vmem:[%s435 + $0x60] sm:$0xf] %v4453
        %4582 = vst [vmem:[%s435 + $0x64] sm:$0xf] %v4454
        %4583 = vst [vmem:[%s435 + $0x68] sm:$0xf] %v4455
        %4584 = vst [vmem:[%s435 + $0x6c] sm:$0xf] %v4456
        %4585 = vst [vmem:[%s435 + $0x70] sm:$0xf] %v4457
        %4586 = vst [vmem:[%s435 + $0x74] sm:$0xf] %v4458
        %4587 = vst [vmem:[%s435 + $0x78] sm:$0xf] %v4459
        %4588 = vst [vmem:[%s435 + $0x7c] sm:$0xf] %v4460
        %4589 = vst [vmem:[%s435 + $0x80] sm:$0xf] %v4461
        %4590 = vst [vmem:[%s435 + $0x84] sm:$0xf] %v4462
        %4591 = vst [vmem:[%s435 + $0x88] sm:$0xf] %v4463
        %4592 = vst [vmem:[%s435 + $0x8c] sm:$0xf] %v4464
        %4593 = vst [vmem:[%s435 + $0x90] sm:$0xf] %v4465
        %4594 = vst [vmem:[%s435 + $0x94] sm:$0xf] %v4466
        %4595 = vst [vmem:[%s435 + $0x98] sm:$0xf] %v4467
        %4596 = vst [vmem:[%s435 + $0x9c] sm:$0xf] %v4468
        %4597 = vst [vmem:[%s435 + $0xa0] sm:$0xf] %v4469
        %4598 = vst [vmem:[%s435 + $0xa4] sm:$0xf] %v4470
        %4599 = vst [vmem:[%s435 + $0xa8] sm:$0xf] %v4471
        %4600 = vst [vmem:[%s435 + $0xac] sm:$0xf] %v4472
        %4601 = vst [vmem:[%s435 + $0xb0] sm:$0xf] %v4473
        %4602 = vst [vmem:[%s435 + $0xb4] sm:$0xf] %v4474
        %4603 = vst [vmem:[%s435 + $0xb8] sm:$0xf] %v4475
        %4604 = vst [vmem:[%s435 + $0xbc] sm:$0xf] %v4476
        %4605 = vst [vmem:[%s435 + $0xc0] sm:$0xf] %v4477
        %4606 = vst [vmem:[%s435 + $0xc4] sm:$0xf] %v4478
        %4607 = vst [vmem:[%s435 + $0xc8] sm:$0xf] %v4479
        %4608 = vst [vmem:[%s435 + $0xcc] sm:$0xf] %v4480
        %4609 = vst [vmem:[%s435 + $0xd0] sm:$0xf] %v4481
        %4610 = vst [vmem:[%s435 + $0xd4] sm:$0xf] %v4482
        %4611 = vst [vmem:[%s435 + $0xd8] sm:$0xf] %v4483
        %4612 = vst [vmem:[%s435 + $0xdc] sm:$0xf] %v4484
        %4613 = vst [vmem:[%s435 + $0xe0] sm:$0xf] %v4485
        %4614 = vst [vmem:[%s435 + $0xe4] sm:$0xf] %v4486
        %4615 = vst [vmem:[%s435 + $0xe8] sm:$0xf] %v4487
        %4616 = vst [vmem:[%s435 + $0xec] sm:$0xf] %v4488
        %4617 = vst [vmem:[%s435 + $0xf0] sm:$0xf] %v4489
        %4618 = vst [vmem:[%s435 + $0xf4] sm:$0xf] %v4490
        %4619 = vst [vmem:[%s435 + $0xf8] sm:$0xf] %v4491
        %4620 = vst [vmem:[%s435 + $0xfc] sm:$0xf] %v4492
        %s4621 = sand.u32 %s308, 1
        %s4622 = scalar_lea.sflag [#allocation6], %s4621
        %s4623 = sand.u32 %s308, 1
        %s4624 = smul.addr %s4623, 256
        %s4625 = scalar_lea.vmem [#allocation5], %s4624
        // Predicated region
        $region76: #{tpu_custom_call.1} parent=67 // pred_check
          %p4626 = pneg %p318
        $region77: #{tpu_custom_call.1} parent=67 // pred_check_branch
          %4628 = sbr.rel (%p4626) target = $region79
        $region78: #{tpu_custom_call.1} parent=67 // pred_region
          %s4629 = smul.u32 64, %s38
          %s4631 = ssub.s32 4096, 4096
          %4632 = vsyncadd %s4622, %s4631
          %s4633 = smul.addr %s4629, 64
          %s4634 = scalar_lea.hbm %s14, %s4633
          %s4635 = sshll.u32 %s4625, 4
          %s4636 = int_to_ptr.vmem [resolvable:$true] %s4635
          %4641 = dma.vmem_to_hbm [thread:$0]  %s4636, 4096, %s4634, %s4622, 64, 64, 4
        $region79: #{tpu_custom_call.1} parent=67 // pred_fallthru
          _
      $region68: #{tpu_custom_call.1} parent=5 // pred_fallthru
        _
      %p4642 = scmp.le.s32.totalorder 2, %s33
      // Predicated region
      $region80: #{tpu_custom_call.1} parent=5 // pred_check
        %p4643 = pneg %p4642
      $region81: #{tpu_custom_call.1} parent=5 // pred_check_branch
        %4645 = sbr.rel (%p4643) target = $region83
      $region82: #{tpu_custom_call.1} parent=5 // pred_region
        %s4646 = ssub.s32 %s33, 2
        // Predicated region
        $region84: #{tpu_custom_call.1} parent=82 // pred_check
          %p4647 = pneg %p324
        $region85: #{tpu_custom_call.1} parent=82 // pred_check_branch
          %4649 = sbr.rel (%p4647) target = $region87
        $region86: #{tpu_custom_call.1} parent=82 // pred_region
          %s4650 = sand.u32 %s309, 1
          %s4651 = scalar_lea.sflag [#allocation6], %s4650
          %s4652 = sand.u32 %s309, 1
          %s4653 = smul.addr %s4652, 256
          %s4654 = scalar_lea.vmem [#allocation5], %s4653
          %4655 = dma.done %s4651, 4096
        $region87: #{tpu_custom_call.1} parent=82 // pred_fallthru
          _
      $region83: #{tpu_custom_call.1} parent=5 // pred_fallthru
        _
    $region6: #{tpu_custom_call.1} parent=1 // loop_footer
      %s37 = sadd.s32 1, %s33
    $region7: #{tpu_custom_call.1} parent=1 // loop_footer_branch
      %32 = sbr.rel target = $region3
    $region8: #{tpu_custom_call.1} parent=1 // loop_exit
      _
    %4656 = vsyncpa [#allocation6], 1
    %s4657 = scalar_lea.sflag [#allocation6], 1
    %4658 = vsyncpa %s4657, 1

</llo_original>
